<compile_context>
chip_gen: v6e
topology: v6e:2x2x1
jax: 0.10.0
libtpu: 0.0.40
codegen_flags: <defaults>
</compile_context>

<pallas_src>
import functools

import jax
import jax.numpy as jnp
import numpy as np
from jax.experimental import pallas as pl
from jax.experimental.pallas import tpu as pltpu


def _round_up(x, m):
    return ((x + m - 1) // m) * m


# ---------------------------------------------------------------------------
# Kernel 1: feature transform  XW1 = X @ W1   (row-tiled, bf16 in / bf16 out)
# NOTE: for tiny Cin this is launch-overhead dominated either way; kept as a
# Pallas kernel so the whole forward stays in kernels.
# ---------------------------------------------------------------------------

def _feature_matmul_kernel(x_ref, w_ref, o_ref):
    o_ref[...] = jnp.dot(
        x_ref[...], w_ref[...], preferred_element_type=jnp.float32
    ).astype(o_ref.dtype)


def feature_matmul(x, w, tile_m):
    """[Npad, Cpad_in] @ [Cpad_in, Hpad] -> bf16 [Npad, Hpad], row-tiled."""
    npad, cin = x.shape
    hpad = w.shape[1]
    return pl.pallas_call(
        _feature_matmul_kernel,
        out_shape=jax.ShapeDtypeStruct((npad, hpad), jnp.bfloat16),
        grid=(npad // tile_m,),
        in_specs=[
            pl.BlockSpec((tile_m, cin), lambda i: (i, 0)),
            pl.BlockSpec((cin, hpad), lambda i: (0, 0)),
        ],
        out_specs=pl.BlockSpec((tile_m, hpad), lambda i: (i, 0)),
        compiler_params=pltpu.CompilerParams(
            dimension_semantics=("parallel",)),
    )(x, w)


# ---------------------------------------------------------------------------
# Kernel 2: block-sparse aggregation
#   layer 1:  out = (relu(A @ XW1 + b1) @ W2).astype(bf16)     (fuse_w2=True)
#   layer 2:  out = masked_log_softmax(A @ HW2 + b2)           (fuse_w2=False)
# grid = (row tiles, max nnz k-tiles per row tile); the list of nonzero
# k-tiles per row tile is scalar-prefetched and drives the A index_map.
# XW is VMEM-resident (constant index map); f32 accumulator in VMEM scratch.
# ---------------------------------------------------------------------------

def _aggregate_kernel(kidx_ref, nnz_ref, a_ref, xw_ref, b_ref, *rest,
                      tile_k, activation, valid_cols, fuse_w2):
    if fuse_w2:
        w2_ref, o_ref, acc_ref = rest
    else:
        o_ref, acc_ref = rest

    i = pl.program_id(0)
    j = pl.program_id(1)

    @pl.when(j == 0)
    def _():
        acc_ref[...] = jnp.zeros_like(acc_ref)

    # Only accumulate real (nonzero) A tiles; padded schedule entries repeat
    # the last valid k-tile index so no fresh DMA is issued for them.
    @pl.when(j < nnz_ref[i])
    def _():
        k = kidx_ref[i * pl.num_programs(1) + j]
        start = pl.multiple_of(k * tile_k, tile_k)
        xw = xw_ref[pl.ds(start, tile_k), :]         # slice resident XW
        acc_ref[...] += jnp.dot(a_ref[...], xw,
                                preferred_element_type=jnp.float32)

    @pl.when(j == pl.num_programs(1) - 1)
    def _():
        h = acc_ref[...] + b_ref[...]
        if activation == "relu":
            h = jnp.maximum(h, 0.0)
        if fuse_w2:
            # Fused layer-2 feature transform; hides under the A stream.
            o_ref[...] = jnp.dot(
                h.astype(jnp.bfloat16), w2_ref[...],
                preferred_element_type=jnp.float32).astype(o_ref.dtype)
        elif activation == "log_softmax":
            # masked log_softmax over the first `valid_cols` lanes
            col = jax.lax.broadcasted_iota(jnp.int32, h.shape, 1)
            valid = col < valid_cols
            hm = jnp.where(valid, h, -jnp.inf)
            m = jnp.max(hm, axis=1, keepdims=True)
            e = jnp.where(valid, jnp.exp(hm - m), 0.0)
            lse = jnp.log(jnp.sum(e, axis=1, keepdims=True))
            o_ref[...] = jnp.where(valid, hm - m - lse, 0.0).astype(o_ref.dtype)
        else:
            o_ref[...] = h.astype(o_ref.dtype)


def gcn_aggregate(kidx, nnz, a_bf16, xw_bf16, b_row, w2=None, *,
                  max_nnz, activation, valid_cols, tile_m, tile_k, out_dtype):
    npad = a_bf16.shape[0]
    hpad = xw_bf16.shape[1]
    fuse_w2 = w2 is not None
    out_cols = w2.shape[1] if fuse_w2 else hpad
    n_row_tiles = npad // tile_m

    in_specs = [
        # A tile: data-dependent k-tile index from the scalar-prefetched
        # block-sparse schedule.
        pl.BlockSpec((tile_m, tile_k),
                     lambda i, j, kidx_r, nnz_r: (i, kidx_r[i * max_nnz + j])),
        # XW: fully VMEM-resident, fetched once (constant block index).
        pl.BlockSpec((npad, hpad), lambda i, j, kidx_r, nnz_r: (0, 0)),
        # bias row
        pl.BlockSpec((1, hpad), lambda i, j, kidx_r, nnz_r: (0, 0)),
    ]
    inputs = [kidx, nnz, a_bf16, xw_bf16, b_row]
    if fuse_w2:
        in_specs.append(
            pl.BlockSpec((hpad, out_cols), lambda i, j, kidx_r, nnz_r: (0, 0)))
        inputs.append(w2)

    out_bytes = np.dtype(out_dtype).itemsize
    vmem_est = (npad * hpad * 2                      # resident XW (bf16)
                + 2 * tile_m * tile_k * 2            # A double buffer (bf16)
                + tile_m * hpad * 4                  # f32 accumulator
                + 2 * tile_m * out_cols * out_bytes  # output double buffer
                + (hpad * out_cols * 2 if fuse_w2 else 0)
                + hpad * 4)
    # If this ever trips (huge graphs), fall back to streaming XW tiles with
    # a larger tile_m instead of keeping it resident.
    assert vmem_est < 48 * 1024 * 1024, "resident XW exceeds VMEM budget"
    vmem_limit = int(min(max(2 * vmem_est, 32 * 1024 * 1024),
                         48 * 1024 * 1024))

    kernel = functools.partial(
        _aggregate_kernel, tile_k=tile_k, activation=activation,
        valid_cols=valid_cols, fuse_w2=fuse_w2)

    return pl.pallas_call(
        kernel,
        out_shape=jax.ShapeDtypeStruct((npad, out_cols), out_dtype),
        grid_spec=pltpu.PrefetchScalarGridSpec(
            num_scalar_prefetch=2,
            grid=(n_row_tiles, max_nnz),
            in_specs=in_specs,
            out_specs=pl.BlockSpec((tile_m, out_cols),
                                   lambda i, j, kidx_r, nnz_r: (i, 0)),
            scratch_shapes=[pltpu.VMEM((tile_m, hpad), jnp.float32)]),
        compiler_params=pltpu.CompilerParams(
            dimension_semantics=("parallel", "arbitrary"),
            vmem_limit_bytes=vmem_limit),
    )(*inputs)


# ---------------------------------------------------------------------------
# Glue: normalized adjacency, block-sparse schedule, padding, params, forward
# ---------------------------------------------------------------------------

def build_norm_adj(edge_index, num_nodes):
    """A_norm = D^-1/2 (A + I) D^-1/2, messages flow src -> dst (PyG style)."""
    src = edge_index[0]
    dst = edge_index[1]
    a = jnp.zeros((num_nodes, num_nodes), jnp.float32).at[dst, src].set(1.0)
    a = a + jnp.eye(num_nodes, dtype=jnp.float32)          # add self-loops
    deg = jnp.sum(a, axis=1)
    d_inv_sqrt = 1.0 / jnp.sqrt(deg)
    return d_inv_sqrt[:, None] * a * d_inv_sqrt[None, :]


def build_tile_schedule(a_padded, tile_m, tile_k):
    """Per-row-tile list of nonzero A k-tiles (block-sparse schedule).

    Returns (kidx_flat [nrt*max_nnz] int32, nnz [nrt] int32, max_nnz int).
    Padded schedule slots repeat the last valid index so the pipelined DMA is
    reused (same block index => no new copy) and the kernel skips the dot.
    """
    a = np.asarray(a_padded)
    nrt = a.shape[0] // tile_m
    nkt = a.shape[1] // tile_k
    occ = np.abs(a.reshape(nrt, tile_m, nkt, tile_k)).max(axis=(1, 3)) > 0
    nnz = occ.sum(axis=1).astype(np.int32)
    max_nnz = max(int(nnz.max()), 1)
    kidx = np.zeros((nrt, max_nnz), np.int32)
    for r in range(nrt):
        cols = np.flatnonzero(occ[r]).astype(np.int32)
        if cols.size == 0:            # fully-padded row tile
            cols = np.zeros((1,), np.int32)
        kidx[r, :cols.size] = cols
        kidx[r, cols.size:] = cols[-1]
    return jnp.asarray(kidx.reshape(-1)), jnp.asarray(nnz), max_nnz


def _pad2d(x, rows, cols):
    return jnp.pad(x, ((0, rows - x.shape[0]), (0, cols - x.shape[1])))


def init_params(key, in_channels, hidden_channels, class_n):
    k1, k2, k3, k4 = jax.random.split(key, 4)

    def glorot(k, fan_in, fan_out):
        lim = jnp.sqrt(6.0 / (fan_in + fan_out))
        return jax.random.uniform(k, (fan_in, fan_out), jnp.float32, -lim, lim)

    return {
        "w1": glorot(k1, in_channels, hidden_channels),
        "b1": 0.1 * jax.random.normal(k3, (hidden_channels,), jnp.float32),
        "w2": glorot(k2, hidden_channels, class_n),
        "b2": 0.1 * jax.random.normal(k4, (class_n,), jnp.float32),
    }


def pad_params(params, in_channels, hidden_channels, class_n):
    """Zero-pad feature dims to 128 lanes; weights stream as bf16."""
    cin_pad = _round_up(in_channels, 128)
    hpad = _round_up(hidden_channels, 128)
    cpad = _round_up(class_n, 128)
    return {
        "w1": _pad2d(params["w1"], cin_pad, hpad).astype(jnp.bfloat16),
        "b1": _pad2d(params["b1"].reshape(1, -1), 1, hpad),   # f32
        "w2": _pad2d(params["w2"], hpad, cpad).astype(jnp.bfloat16),
        "b2": _pad2d(params["b2"].reshape(1, -1), 1, cpad),   # f32
    }


@functools.partial(jax.jit, static_argnames=("num_nodes", "class_n",
                                              "tile_m", "tile_k", "max_nnz"))
def gcn_forward(padded_params, x_padded, a_bf16, kidx, nnz, *,
                num_nodes, class_n, tile_m, tile_k, max_nnz):
    # Layer 1 feature transform: XW1 = X @ W1 (bf16).
    xw1 = feature_matmul(x_padded, padded_params["w1"], tile_m)
    # Fused layer-1 aggregation + relu + layer-2 feature transform:
    #   HW2 = relu(A @ XW1 + b1) @ W2, emitted bf16 (no H round-trip).
    hw2 = gcn_aggregate(kidx, nnz, a_bf16, xw1, padded_params["b1"],
                        padded_params["w2"],
                        max_nnz=max_nnz, activation="relu", valid_cols=None,
                        tile_m=tile_m, tile_k=tile_k, out_dtype=jnp.bfloat16)
    # dropout(p=0.5, train=False) -> identity in eval mode.
    # Layer 2 aggregation + bias + masked log_softmax over real classes.
    z = gcn_aggregate(kidx, nnz, a_bf16, hw2, padded_params["b2"], None,
                      max_nnz=max_nnz, activation="log_softmax",
                      valid_cols=class_n,
                      tile_m=tile_m, tile_k=tile_k, out_dtype=jnp.float32)
    return z[:num_nodes, :class_n]


# ---------------------------------------------------------------------------
# Pure-JAX reference for correctness
# ---------------------------------------------------------------------------

def gcn_reference(params, x, a_norm):
    h = jnp.maximum(a_norm @ (x @ params["w1"]) + params["b1"], 0.0)
    z = a_norm @ (h @ params["w2"]) + params["b2"]
    return jax.nn.log_softmax(z, axis=1)


if __name__ == "__main__":
    num_nodes = 400          # deliberately NOT a multiple of the tile size
    in_channels = 16
    hidden_channels = 32
    class_n = 7
    tile_m = 256             # use 256-512 for large graphs
    tile_k = 256             # use 512-1024 for large graphs

    key = jax.random.PRNGKey(0)
    k_x, k_p = jax.random.split(key)

    # Node features [N, in_channels]
    x = jax.random.normal(k_x, (num_nodes, in_channels), jnp.float32)

    # Deterministic ring graph (both directions), no self-loops in edge_index.
    idx = jnp.arange(num_nodes)
    src = jnp.concatenate([idx, (idx + 1) % num_nodes])
    dst = jnp.concatenate([(idx + 1) % num_nodes, idx])
    edge_index = jnp.stack([src, dst], axis=0)          # [2, E]

    a_norm = build_norm_adj(edge_index, num_nodes)
    params = init_params(k_p, in_channels, hidden_channels, class_n)

    # Pad to TPU-friendly shapes: rows -> multiple of the tiles, feature dims
    # -> multiples of 128 lanes; all HBM streams are bf16.
    npad = _round_up(num_nodes, max(tile_m, tile_k))
    assert npad % tile_m == 0 and npad % tile_k == 0
    cin_pad = _round_up(in_channels, 128)

    padded_params = pad_params(params, in_channels, hidden_channels, class_n)
    x_padded = _pad2d(x, npad, cin_pad).astype(jnp.bfloat16)
    a_padded = _pad2d(a_norm, npad, npad)
    a_bf16 = a_padded.astype(jnp.bfloat16)
    kidx, nnz, max_nnz = build_tile_schedule(a_padded, tile_m, tile_k)

    out = gcn_forward(padded_params, x_padded, a_bf16, kidx, nnz,
                      num_nodes=num_nodes, class_n=class_n,
                      tile_m=tile_m, tile_k=tile_k, max_nnz=max_nnz)
    out = jax.block_until_ready(out)

    ref = gcn_reference(params, x, a_norm)
    assert out.shape == (num_nodes, class_n)
    # bf16 A / feature streams -> allow a few-% tolerance vs f32 reference.
    assert jnp.allclose(out, ref, atol=5e-2, rtol=5e-2), "mismatch vs reference"

    print("KERNEL_OK")
</pallas_src>

<mosaic_0001>
module attributes {stable_mosaic.version = 11 : i64} {
  func.func @_feature_matmul_kernel(%arg0: i32, %arg1: memref<256x128xbf16, #tpu.memory_space<vmem>>, %arg2: memref<128x128xbf16, #tpu.memory_space<vmem>>, %arg3: memref<256x128xbf16, #tpu.memory_space<vmem>>) attributes {dimension_semantics = [#tpu.dimension_semantics<parallel>], iteration_bounds = array<i64: 2>, scalar_prefetch = 0 : i64, scratch_operands = 0 : i64, tpu.core_type = #tpu.core_type<tc>, window_params = [{transform_indices = @transform_0, window_bounds = array<i64: 256, 128>}, {pipeline_mode = #tpu.pipeline_mode<synchronous>, transform_indices = @transform_1, window_bounds = array<i64: 128, 128>}, {transform_indices = @transform_2, window_bounds = array<i64: 256, 128>}]} {
    %c0 = arith.constant 0 : index
    %c0_0 = arith.constant 0 : index
    %0 = vector.load %arg1[%c0, %c0_0] : memref<256x128xbf16, #tpu.memory_space<vmem>>, vector<256x128xbf16>
    %c0_1 = arith.constant 0 : index
    %c0_2 = arith.constant 0 : index
    %1 = vector.load %arg2[%c0_1, %c0_2] : memref<128x128xbf16, #tpu.memory_space<vmem>>, vector<128x128xbf16>
    %cst = arith.constant dense<0.000000e+00> : vector<256x128xf32>
    %2 = tpu.matmul %0, %1, %cst {dimension_numbers = #tpu.dot_dimension_numbers<[1], [0], [0], [1], [0, 0, 1, 1], [], []>} : vector<256x128xbf16>, vector<128x128xbf16>, vector<256x128xf32> -> vector<256x128xf32>
    %3 = arith.truncf %2 : vector<256x128xf32> to vector<256x128xbf16>
    %c0_3 = arith.constant 0 : index
    %c0_4 = arith.constant 0 : index
    %4 = vector.load %arg3[%c0_3, %c0_4] : memref<256x128xbf16, #tpu.memory_space<vmem>>, vector<256x128xbf16>
    tpu.vector_store %arg3[%c0_3, %c0_4], %3 {strides = array<i32>} : memref<256x128xbf16, #tpu.memory_space<vmem>>, vector<256x128xbf16>,
    return
  }
  func.func @transform_0(%arg0: i32) -> (i32, i32) {
    %c0_i32 = arith.constant 0 : i32
    %c0_i32_0 = arith.constant 0 : i32
    return %arg0, %c0_i32 : i32, i32
  }
  func.func @transform_1(%arg0: i32) -> (i32, i32) {
    %c0_i32 = arith.constant 0 : i32
    %c0_i32_0 = arith.constant 0 : i32
    %c0_i32_1 = arith.constant 0 : i32
    return %c0_i32, %c0_i32_0 : i32, i32
  }
  func.func @transform_2(%arg0: i32) -> (i32, i32) {
    %c0_i32 = arith.constant 0 : i32
    %c0_i32_0 = arith.constant 0 : i32
    return %arg0, %c0_i32 : i32, i32
  }
}

module attributes {stable_mosaic.version = 11 : i64} {
  func.func @_aggregate_kernel(%arg0: i32, %arg1: i32, %arg2: memref<4xi32, #tpu.memory_space<smem>>, %arg3: memref<2xi32, #tpu.memory_space<smem>>, %arg4: memref<256x256xbf16, #tpu.memory_space<vmem>>, %arg5: memref<512x128xbf16, #tpu.memory_space<vmem>>, %arg6: memref<1x128xf32, #tpu.memory_space<vmem>>, %arg7: memref<128x128xbf16, #tpu.memory_space<vmem>>, %arg8: memref<256x128xbf16, #tpu.memory_space<vmem>>, %arg9: memref<256x128xf32, #tpu.memory_space<vmem>>) attributes {dimension_semantics = [#tpu.dimension_semantics<parallel>, #tpu.dimension_semantics<arbitrary>], iteration_bounds = array<i64: 2, 2>, scalar_prefetch = 2 : i64, scratch_operands = 1 : i64, tpu.core_type = #tpu.core_type<tc>, window_params = [{transform_indices = @transform_0, window_bounds = array<i64: 256, 256>}, {pipeline_mode = #tpu.pipeline_mode<synchronous>, transform_indices = @transform_1, window_bounds = array<i64: 512, 128>}, {pipeline_mode = #tpu.pipeline_mode<synchronous>, transform_indices = @transform_2, window_bounds = array<i64: 1, 128>}, {pipeline_mode = #tpu.pipeline_mode<synchronous>, transform_indices = @transform_3, window_bounds = array<i64: 128, 128>}, {transform_indices = @transform_4, window_bounds = array<i64: 256, 128>}]} {
    %c0_i32 = arith.constant 0 : i32
    %0 = arith.cmpi eq, %arg1, %c0_i32 : i32
    %1 = arith.extui %0 : i1 to i32
    %c0_i32_0 = arith.constant 0 : i32
    %2 = arith.cmpi ne, %1, %c0_i32_0 : i32
    scf.if %2 {
      %cst = arith.constant 0.000000e+00 : f32
      %11 = vector.broadcast %cst : f32 to vector<256x128xf32>
      %c0 = arith.constant 0 : index
      %c0_3 = arith.constant 0 : index
      %12 = vector.load %arg9[%c0, %c0_3] : memref<256x128xf32, #tpu.memory_space<vmem>>, vector<256x128xf32>
      tpu.vector_store %arg9[%c0, %c0_3], %11 {strides = array<i32>} : memref<256x128xf32, #tpu.memory_space<vmem>>, vector<256x128xf32>,
    } else {
    }
    %3 = arith.index_cast %arg0 : i32 to index
    %4 = memref.load %arg3[%3] : memref<2xi32, #tpu.memory_space<smem>>
    %5 = arith.cmpi slt, %arg1, %4 : i32
    %6 = arith.extui %5 : i1 to i32
    %c0_i32_1 = arith.constant 0 : i32
    %7 = arith.cmpi ne, %6, %c0_i32_1 : i32
    scf.if %7 {
      %c2_i32 = arith.constant 2 : i32
      %11 = arith.muli %arg0, %c2_i32 : i32
      %12 = arith.addi %11, %arg1 : i32
      %13 = arith.index_cast %12 : i32 to index
      %14 = memref.load %arg2[%13] : memref<4xi32, #tpu.memory_space<smem>>
      %c256_i32 = arith.constant 256 : i32
      %15 = arith.muli %14, %c256_i32 : i32
      %16 = tpu.assume_multiple %15, 256 : i32
      %17 = arith.index_cast %16 : i32 to index
      %c0 = arith.constant 0 : index
      %18 = vector.load %arg5[%17, %c0] : memref<512x128xbf16, #tpu.memory_space<vmem>>, vector<256x128xbf16>
      %c0_3 = arith.constant 0 : index
      %c0_4 = arith.constant 0 : index
      %19 = vector.load %arg9[%c0_3, %c0_4] : memref<256x128xf32, #tpu.memory_space<vmem>>, vector<256x128xf32>
      %c0_5 = arith.constant 0 : index
      %c0_6 = arith.constant 0 : index
      %20 = vector.load %arg4[%c0_5, %c0_6] : memref<256x256xbf16, #tpu.memory_space<vmem>>, vector<256x256xbf16>
      %cst = arith.constant dense<0.000000e+00> : vector<256x128xf32>
      %21 = tpu.matmul %20, %18, %cst {dimension_numbers = #tpu.dot_dimension_numbers<[1], [0], [0], [1], [0, 0, 1, 1], [], []>} : vector<256x256xbf16>, vector<256x128xbf16>, vector<256x128xf32> -> vector<256x128xf32>
      %22 = arith.addf %19, %21 : vector<256x128xf32>
      %c0_7 = arith.constant 0 : index
      %c0_8 = arith.constant 0 : index
      %23 = vector.load %arg9[%c0_7, %c0_8] : memref<256x128xf32, #tpu.memory_space<vmem>>, vector<256x128xf32>
      tpu.vector_store %arg9[%c0_7, %c0_8], %22 {strides = array<i32>} : memref<256x128xf32, #tpu.memory_space<vmem>>, vector<256x128xf32>,
    } else {
    }
    %c1_i32 = arith.constant 1 : i32
    %8 = arith.cmpi eq, %arg1, %c1_i32 : i32
    %9 = arith.extui %8 : i1 to i32
    %c0_i32_2 = arith.constant 0 : i32
    %10 = arith.cmpi ne, %9, %c0_i32_2 : i32
    scf.if %10 {
      %c0 = arith.constant 0 : index
      %c0_3 = arith.constant 0 : index
      %11 = vector.load %arg9[%c0, %c0_3] : memref<256x128xf32, #tpu.memory_space<vmem>>, vector<256x128xf32>
      %c0_4 = arith.constant 0 : index
      %c0_5 = arith.constant 0 : index
      %12 = vector.load %arg6[%c0_4, %c0_5] : memref<1x128xf32, #tpu.memory_space<vmem>>, vector<1x128xf32>
      %13 = vector.broadcast %12 : vector<1x128xf32> to vector<256x128xf32>
      %14 = arith.addf %11, %13 : vector<256x128xf32>
      %cst = arith.constant 0.000000e+00 : f32
      %15 = vector.broadcast %cst : f32 to vector<256x128xf32>
      %16 = arith.maximumf %14, %15 : vector<256x128xf32>
      %17 = arith.truncf %16 : vector<256x128xf32> to vector<256x128xbf16>
      %c0_6 = arith.constant 0 : index
      %c0_7 = arith.constant 0 : index
      %18 = vector.load %arg7[%c0_6, %c0_7] : memref<128x128xbf16, #tpu.memory_space<vmem>>, vector<128x128xbf16>
      %cst_8 = arith.constant dense<0.000000e+00> : vector<256x128xf32>
      %19 = tpu.matmul %17, %18, %cst_8 {dimension_numbers = #tpu.dot_dimension_numbers<[1], [0], [0], [1], [0, 0, 1, 1], [], []>} : vector<256x128xbf16>, vector<128x128xbf16>, vector<256x128xf32> -> vector<256x128xf32>
      %20 = arith.truncf %19 : vector<256x128xf32> to vector<256x128xbf16>
      %c0_9 = arith.constant 0 : index
      %c0_10 = arith.constant 0 : index
      %21 = vector.load %arg8[%c0_9, %c0_10] : memref<256x128xbf16, #tpu.memory_space<vmem>>, vector<256x128xbf16>
      tpu.vector_store %arg8[%c0_9, %c0_10], %20 {strides = array<i32>} : memref<256x128xbf16, #tpu.memory_space<vmem>>, vector<256x128xbf16>,
    } else {
    }
    return
  }
  func.func @transform_0(%arg0: i32, %arg1: i32, %arg2: memref<4xi32, #tpu.memory_space<smem>>, %arg3: memref<2xi32, #tpu.memory_space<smem>>) -> (i32, i32) {
    %c2_i32 = arith.constant 2 : i32
    %0 = arith.muli %arg0, %c2_i32 : i32
    %1 = arith.addi %0, %arg1 : i32
    %2 = arith.index_cast %1 : i32 to index
    %3 = memref.load %arg2[%2] : memref<4xi32, #tpu.memory_space<smem>>
    %c0_i32 = arith.constant 0 : i32
    return %arg0, %3 : i32, i32
  }
  func.func @transform_1(%arg0: i32, %arg1: i32, %arg2: memref<4xi32, #tpu.memory_space<smem>>, %arg3: memref<2xi32, #tpu.memory_space<smem>>) -> (i32, i32) {
    %c0_i32 = arith.constant 0 : i32
    %c0_i32_0 = arith.constant 0 : i32
    %c0_i32_1 = arith.constant 0 : i32
    return %c0_i32, %c0_i32_0 : i32, i32
  }
  func.func @transform_2(%arg0: i32, %arg1: i32, %arg2: memref<4xi32, #tpu.memory_space<smem>>, %arg3: memref<2xi32, #tpu.memory_space<smem>>) -> (i32, i32) {
    %c0_i32 = arith.constant 0 : i32
    %c0_i32_0 = arith.constant 0 : i32
    %c0_i32_1 = arith.constant 0 : i32
    return %c0_i32, %c0_i32_0 : i32, i32
  }
  func.func @transform_3(%arg0: i32, %arg1: i32, %arg2: memref<4xi32, #tpu.memory_space<smem>>, %arg3: memref<2xi32, #tpu.memory_space<smem>>) -> (i32, i32) {
    %c0_i32 = arith.constant 0 : i32
    %c0_i32_0 = arith.constant 0 : i32
    %c0_i32_1 = arith.constant 0 : i32
    return %c0_i32, %c0_i32_0 : i32, i32
  }
  func.func @transform_4(%arg0: i32, %arg1: i32, %arg2: memref<4xi32, #tpu.memory_space<smem>>, %arg3: memref<2xi32, #tpu.memory_space<smem>>) -> (i32, i32) {
    %c0_i32 = arith.constant 0 : i32
    %c0_i32_0 = arith.constant 0 : i32
    return %arg0, %c0_i32 : i32, i32
  }
}

module attributes {stable_mosaic.version = 11 : i64} {
  func.func @_aggregate_kernel(%arg0: i32, %arg1: i32, %arg2: memref<4xi32, #tpu.memory_space<smem>>, %arg3: memref<2xi32, #tpu.memory_space<smem>>, %arg4: memref<256x256xbf16, #tpu.memory_space<vmem>>, %arg5: memref<512x128xbf16, #tpu.memory_space<vmem>>, %arg6: memref<1x128xf32, #tpu.memory_space<vmem>>, %arg7: memref<256x128xf32, #tpu.memory_space<vmem>>, %arg8: memref<256x128xf32, #tpu.memory_space<vmem>>) attributes {dimension_semantics = [#tpu.dimension_semantics<parallel>, #tpu.dimension_semantics<arbitrary>], iteration_bounds = array<i64: 2, 2>, scalar_prefetch = 2 : i64, scratch_operands = 1 : i64, tpu.core_type = #tpu.core_type<tc>, window_params = [{transform_indices = @transform_0, window_bounds = array<i64: 256, 256>}, {pipeline_mode = #tpu.pipeline_mode<synchronous>, transform_indices = @transform_1, window_bounds = array<i64: 512, 128>}, {pipeline_mode = #tpu.pipeline_mode<synchronous>, transform_indices = @transform_2, window_bounds = array<i64: 1, 128>}, {transform_indices = @transform_3, window_bounds = array<i64: 256, 128>}]} {
    %c0_i32 = arith.constant 0 : i32
    %0 = arith.cmpi eq, %arg1, %c0_i32 : i32
    %1 = arith.extui %0 : i1 to i32
    %c0_i32_0 = arith.constant 0 : i32
    %2 = arith.cmpi ne, %1, %c0_i32_0 : i32
    scf.if %2 {
      %cst = arith.constant 0.000000e+00 : f32
      %11 = vector.broadcast %cst : f32 to vector<256x128xf32>
      %c0 = arith.constant 0 : index
      %c0_3 = arith.constant 0 : index
      %12 = vector.load %arg8[%c0, %c0_3] : memref<256x128xf32, #tpu.memory_space<vmem>>, vector<256x128xf32>
      tpu.vector_store %arg8[%c0, %c0_3], %11 {strides = array<i32>} : memref<256x128xf32, #tpu.memory_space<vmem>>, vector<256x128xf32>,
    } else {
    }
    %3 = arith.index_cast %arg0 : i32 to index
    %4 = memref.load %arg3[%3] : memref<2xi32, #tpu.memory_space<smem>>
    %5 = arith.cmpi slt, %arg1, %4 : i32
    %6 = arith.extui %5 : i1 to i32
    %c0_i32_1 = arith.constant 0 : i32
    %7 = arith.cmpi ne, %6, %c0_i32_1 : i32
    scf.if %7 {
      %c2_i32 = arith.constant 2 : i32
      %11 = arith.muli %arg0, %c2_i32 : i32
      %12 = arith.addi %11, %arg1 : i32
      %13 = arith.index_cast %12 : i32 to index
      %14 = memref.load %arg2[%13] : memref<4xi32, #tpu.memory_space<smem>>
      %c256_i32 = arith.constant 256 : i32
      %15 = arith.muli %14, %c256_i32 : i32
      %16 = tpu.assume_multiple %15, 256 : i32
      %17 = arith.index_cast %16 : i32 to index
      %c0 = arith.constant 0 : index
      %18 = vector.load %arg5[%17, %c0] : memref<512x128xbf16, #tpu.memory_space<vmem>>, vector<256x128xbf16>
      %c0_3 = arith.constant 0 : index
      %c0_4 = arith.constant 0 : index
      %19 = vector.load %arg8[%c0_3, %c0_4] : memref<256x128xf32, #tpu.memory_space<vmem>>, vector<256x128xf32>
      %c0_5 = arith.constant 0 : index
      %c0_6 = arith.constant 0 : index
      %20 = vector.load %arg4[%c0_5, %c0_6] : memref<256x256xbf16, #tpu.memory_space<vmem>>, vector<256x256xbf16>
      %cst = arith.constant dense<0.000000e+00> : vector<256x128xf32>
      %21 = tpu.matmul %20, %18, %cst {dimension_numbers = #tpu.dot_dimension_numbers<[1], [0], [0], [1], [0, 0, 1, 1], [], []>} : vector<256x256xbf16>, vector<256x128xbf16>, vector<256x128xf32> -> vector<256x128xf32>
      %22 = arith.addf %19, %21 : vector<256x128xf32>
      %c0_7 = arith.constant 0 : index
      %c0_8 = arith.constant 0 : index
      %23 = vector.load %arg8[%c0_7, %c0_8] : memref<256x128xf32, #tpu.memory_space<vmem>>, vector<256x128xf32>
      tpu.vector_store %arg8[%c0_7, %c0_8], %22 {strides = array<i32>} : memref<256x128xf32, #tpu.memory_space<vmem>>, vector<256x128xf32>,
    } else {
    }
    %c1_i32 = arith.constant 1 : i32
    %8 = arith.cmpi eq, %arg1, %c1_i32 : i32
    %9 = arith.extui %8 : i1 to i32
    %c0_i32_2 = arith.constant 0 : i32
    %10 = arith.cmpi ne, %9, %c0_i32_2 : i32
    scf.if %10 {
      %c0 = arith.constant 0 : index
      %c0_3 = arith.constant 0 : index
      %11 = vector.load %arg8[%c0, %c0_3] : memref<256x128xf32, #tpu.memory_space<vmem>>, vector<256x128xf32>
      %c0_4 = arith.constant 0 : index
      %c0_5 = arith.constant 0 : index
      %12 = vector.load %arg6[%c0_4, %c0_5] : memref<1x128xf32, #tpu.memory_space<vmem>>, vector<1x128xf32>
      %13 = vector.broadcast %12 : vector<1x128xf32> to vector<256x128xf32>
      %14 = arith.addf %11, %13 : vector<256x128xf32>
      %15 = tpu.iota {dimensions = array<i32: 1>} : vector<256x128xi32>
      %c7_i32 = arith.constant 7 : i32
      %16 = vector.broadcast %c7_i32 : i32 to vector<256x128xi32>
      %17 = arith.cmpi slt, %15, %16 : vector<256x128xi32>
      %cst = arith.constant 0xFF800000 : f32
      %18 = vector.broadcast %cst : f32 to vector<256x128xf32>
      %19 = arith.select %17, %14, %18 : vector<256x128xi1>, vector<256x128xf32>
      %cst_6 = arith.constant dense<0xFF800000> : vector<256xf32>
      %20 = vector.multi_reduction <maximumf>, %19, %cst_6 [1] : vector<256x128xf32> to vector<256xf32>
      %21 = vector.shape_cast %20 : vector<256xf32> to vector<256x1xf32>
      %22 = vector.broadcast %21 : vector<256x1xf32> to vector<256x128xf32>
      %23 = arith.subf %19, %22 : vector<256x128xf32>
      %24 = math.exp %23 : vector<256x128xf32>
      %cst_7 = arith.constant 0.000000e+00 : f32
      %25 = vector.broadcast %cst_7 : f32 to vector<256x128xf32>
      %26 = arith.select %17, %24, %25 : vector<256x128xi1>, vector<256x128xf32>
      %cst_8 = arith.constant dense<0.000000e+00> : vector<256xf32>
      %27 = vector.multi_reduction <add>, %26, %cst_8 [1] : vector<256x128xf32> to vector<256xf32>
      %28 = vector.shape_cast %27 : vector<256xf32> to vector<256x1xf32>
      %29 = math.log %28 : vector<256x1xf32>
      %30 = vector.broadcast %21 : vector<256x1xf32> to vector<256x128xf32>
      %31 = arith.subf %19, %30 : vector<256x128xf32>
      %32 = vector.broadcast %29 : vector<256x1xf32> to vector<256x128xf32>
      %33 = arith.subf %31, %32 : vector<256x128xf32>
      %cst_9 = arith.constant 0.000000e+00 : f32
      %34 = vector.broadcast %cst_9 : f32 to vector<256x128xf32>
      %35 = arith.select %17, %33, %34 : vector<256x128xi1>, vector<256x128xf32>
      %c0_10 = arith.constant 0 : index
      %c0_11 = arith.constant 0 : index
      %36 = vector.load %arg7[%c0_10, %c0_11] : memref<256x128xf32, #tpu.memory_space<vmem>>, vector<256x128xf32>
      tpu.vector_store %arg7[%c0_10, %c0_11], %35 {strides = array<i32>} : memref<256x128xf32, #tpu.memory_space<vmem>>, vector<256x128xf32>,
    } else {
    }
    return
  }
  func.func @transform_0(%arg0: i32, %arg1: i32, %arg2: memref<4xi32, #tpu.memory_space<smem>>, %arg3: memref<2xi32, #tpu.memory_space<smem>>) -> (i32, i32) {
    %c2_i32 = arith.constant 2 : i32
    %0 = arith.muli %arg0, %c2_i32 : i32
    %1 = arith.addi %0, %arg1 : i32
    %2 = arith.index_cast %1 : i32 to index
    %3 = memref.load %arg2[%2] : memref<4xi32, #tpu.memory_space<smem>>
    %c0_i32 = arith.constant 0 : i32
    return %arg0, %3 : i32, i32
  }
  func.func @transform_1(%arg0: i32, %arg1: i32, %arg2: memref<4xi32, #tpu.memory_space<smem>>, %arg3: memref<2xi32, #tpu.memory_space<smem>>) -> (i32, i32) {
    %c0_i32 = arith.constant 0 : i32
    %c0_i32_0 = arith.constant 0 : i32
    %c0_i32_1 = arith.constant 0 : i32
    return %c0_i32, %c0_i32_0 : i32, i32
  }
  func.func @transform_2(%arg0: i32, %arg1: i32, %arg2: memref<4xi32, #tpu.memory_space<smem>>, %arg3: memref<2xi32, #tpu.memory_space<smem>>) -> (i32, i32) {
    %c0_i32 = arith.constant 0 : i32
    %c0_i32_0 = arith.constant 0 : i32
    %c0_i32_1 = arith.constant 0 : i32
    return %c0_i32, %c0_i32_0 : i32, i32
  }
  func.func @transform_3(%arg0: i32, %arg1: i32, %arg2: memref<4xi32, #tpu.memory_space<smem>>, %arg3: memref<2xi32, #tpu.memory_space<smem>>) -> (i32, i32) {
    %c0_i32 = arith.constant 0 : i32
    %c0_i32_0 = arith.constant 0 : i32
    return %arg0, %c0_i32 : i32, i32
  }
}

</mosaic_0001>

<llo_original>
// kernel: gcn_forward.3
$region0: #{gcn_forward.3}
  #allocation0 [shape = 'u32[]', space=smem, size = 0x4, offset = 0x4, fixed_abs, tag = 'smem constant byte address 0x4 - core index']
  #allocation1 [shape = 'u32[144,128]{1,0:T(1,128)}', space=vmem, size = 0x12000, scoped, tag = 'internal scratch']
  %s0 = inlined_call_operand.hbm [shape: bf16[512,128], index: 0, kind: input, shape index: {}]
  %s1 = inlined_call_operand.hbm [shape: bf16[128,128], index: 1, kind: input, shape index: {}]
  %s2 = inlined_call_operand.vmem [shape: bf16[512,128], index: 2, kind: output, shape index: {}]
  %s3 = sld [smem:[#allocation0]]
  $region49: #{gcn_forward.3} parent=0
    _
  %s5 = ssub.s32 1, %s3
  %s6 = scalar_select 0, %s5, %s3
  $region1: #{gcn_forward.3} parent=0
    #allocation2 [shape = 'u8[131072]{0}', space=vmem, size = 0x20000, scoped, tag = 'input window, operand 0']
    #allocation3 [shape = 's32[2]{0}', space=sflag, size = 0x8, scoped, tag = 'scoped memory for gcn_forward.3']
    #allocation4 [shape = 'u8[32768]{0}', space=vmem, size = 0x8000, scoped, tag = 'input window, operand 1, single buffered']
    #allocation5 [shape = 's32[1]{0}', space=sflag, size = 0x4, scoped, tag = 'scoped memory for gcn_forward.3']
    %7 = vsyncpa [#allocation3], 0
    %s8 = scalar_lea.sflag [#allocation3], 1
    %9 = vsyncpa %s8, 0
    %10 = vsyncpa [#allocation5], 0
    loop: start=0, step=1, limit=4
    $region2: #{gcn_forward.3} parent=1 // loop_pre_header
      _
    $region3: #{gcn_forward.3} parent=1 // loop_header
      %s12 = sphi 0, %s16
      %p13 = scmp.ge.s32.totalorder %s12, 4
      %s22 = sphi 0, %s24
      %s25 = sphi 0, %s22
      %s26 = sphi 0, %s25
      %s42 = sphi 0, %s26
      %s46 = sphi 0, %s46
      %s48 = sphi 0, %s46
      %s49 = sphi 0, %s48
      %s63 = sphi 0, %s49
      %s69 = sphi 0, %s71
      %s72 = sphi 0, %s69
      %s73 = sphi 0, %s72
      %s89 = sphi 0, %s73
    $region4: #{gcn_forward.3} parent=1 // loop_header_branch
      %15 = sbr.rel (%p13) target = $region8
    $region5: #{gcn_forward.3} parent=1 // loop_body
      %s17 = ssub.s32 %s12, 1
      %s18 = ssub.s32 %s12, 2
      %s19 = sadd.s32 %s12, 1
      %s20 = ssub.s32 %s12, %s19
      %p21 = scmp.eq.s32.totalorder %s20, 0
      %s23 = sadd.s32 %s22, 1
      %s24 = scalar_select %p21, %s22, %s23
      %p27 = pneg %p21
      %p28 = scmp.eq.s32.totalorder %s12, 1
      %p29 = por %p27, %p28
      %p30 = scmp.ne.s32.totalorder %s22, %s25
      %p31 = scmp.eq.s32.totalorder %s12, 0
      %p32 = por %p30, %p31
      %p33 = scmp.ne.s32.totalorder %s22, %s25
      %p34 = scmp.eq.s32.totalorder %s17, 1
      %p35 = por %p33, %p34
      %p36 = scmp.ne.s32.totalorder %s25, %s26
      %p37 = scmp.eq.s32.totalorder %s17, 0
      %p38 = por %p36, %p37
      %p39 = scmp.ne.s32.totalorder %s25, %s26
      %p40 = scmp.eq.s32.totalorder %s18, 1
      %p41 = por %p39, %p40
      %p43 = scmp.ne.s32.totalorder %s26, %s42
      %p44 = scmp.eq.s32.totalorder %s18, 0
      %p45 = por %p43, %p44
      %s47 = sadd.s32 %s46, 1
      %p50 = scmp.eq.s32.totalorder %s12, 1
      %p51 = scmp.ne.s32.totalorder %s46, %s48
      %p52 = scmp.eq.s32.totalorder %s12, 0
      %p53 = por %p51, %p52
      %p54 = scmp.ne.s32.totalorder %s46, %s48
      %p55 = scmp.eq.s32.totalorder %s17, 1
      %p56 = por %p54, %p55
      %p57 = scmp.ne.s32.totalorder %s48, %s49
      %p58 = scmp.eq.s32.totalorder %s17, 0
      %p59 = por %p57, %p58
      %p60 = scmp.ne.s32.totalorder %s48, %s49
      %p61 = scmp.eq.s32.totalorder %s18, 1
      %p62 = por %p60, %p61
      %p64 = scmp.ne.s32.totalorder %s49, %s63
      %p65 = scmp.eq.s32.totalorder %s18, 0
      %p66 = por %p64, %p65
      %s67 = ssub.s32 %s12, %s19
      %p68 = scmp.eq.s32.totalorder %s67, 0
      %s70 = sadd.s32 %s69, 1
      %s71 = scalar_select %p68, %s69, %s70
      %p74 = pneg %p68
      %p75 = scmp.eq.s32.totalorder %s12, 1
      %p76 = por %p74, %p75
      %p77 = scmp.ne.s32.totalorder %s69, %s72
      %p78 = scmp.eq.s32.totalorder %s12, 0
      %p79 = por %p77, %p78
      %p80 = scmp.ne.s32.totalorder %s69, %s72
      %p81 = scmp.eq.s32.totalorder %s17, 1
      %p82 = por %p80, %p81
      %p83 = scmp.ne.s32.totalorder %s72, %s73
      %p84 = scmp.eq.s32.totalorder %s17, 0
      %p85 = por %p83, %p84
      %p86 = scmp.ne.s32.totalorder %s72, %s73
      %p87 = scmp.eq.s32.totalorder %s18, 1
      %p88 = por %p86, %p87
      %p90 = scmp.ne.s32.totalorder %s73, %s89
      %p91 = scmp.eq.s32.totalorder %s18, 0
      %p92 = por %p90, %p91
      %p93 = scmp.le.s32.totalorder 1, %s12
      %p94 = scmp.lt.s32.totalorder %s12, 3
      %p95 = pnand %p93, %p94
      %p96 = pneg %p95
      // Predicated region
      $region9: #{gcn_forward.3} parent=5 // pred_check
        _
      $region10: #{gcn_forward.3} parent=5 // pred_check_branch
        %98 = sbr.rel (%p95) target = $region12
      $region11: #{gcn_forward.3} parent=5 // pred_region
        %s99 = ssub.s32 %s12, 1
        // Predicated region
        $region13: #{gcn_forward.3} parent=11 // pred_check
          %p100 = pneg %p59
        $region14: #{gcn_forward.3} parent=11 // pred_check_branch
          %102 = sbr.rel (%p100) target = $region16
        $region15: #{gcn_forward.3} parent=11 // pred_region
          %s104 = ssub.s32 1024, 1024
          %105 = vsyncadd [#allocation5], %s104
          %s106 = sshll.u32 [#allocation4], 4
          %s107 = int_to_ptr.vmem [resolvable:$true] %s106
          %112 = dma.hbm_to_vmem [thread:$0]  %s1, 1024, %s107, [#allocation5], 64, 64, 4
        $region16: #{gcn_forward.3} parent=11 // pred_fallthru
          _
      $region12: #{gcn_forward.3} parent=5 // pred_fallthru
        _
      %p113 = scmp.lt.s32.totalorder %s12, 2
      // Predicated region
      $region17: #{gcn_forward.3} parent=5 // pred_check
        %p114 = pneg %p113
      $region18: #{gcn_forward.3} parent=5 // pred_check_branch
        %116 = sbr.rel (%p114) target = $region20
      $region19: #{gcn_forward.3} parent=5 // pred_region
        // Predicated region
        $region21: #{gcn_forward.3} parent=19 // pred_check
          %p117 = pneg %p32
        $region22: #{gcn_forward.3} parent=19 // pred_check_branch
          %119 = sbr.rel (%p117) target = $region24
        $region23: #{gcn_forward.3} parent=19 // pred_region
          %s120 = sand.u32 %s22, 1
          %s121 = scalar_lea.sflag [#allocation3], %s120
          %s122 = sand.u32 %s22, 1
          %s123 = smul.addr %s122, 128
          %s124 = scalar_lea.vmem [#allocation2], %s123
          %s125 = smul.u32 32, %s12
          %s127 = ssub.s32 2048, 2048
          %128 = vsyncadd %s121, %s127
          %s129 = smul.addr %s125, 64
          %s130 = scalar_lea.hbm %s0, %s129
          %s131 = sshll.u32 %s124, 4
          %s132 = int_to_ptr.vmem [resolvable:$true] %s131
          %137 = dma.hbm_to_vmem [thread:$0]  %s130, 2048, %s132, %s121, 64, 64, 4
        $region24: #{gcn_forward.3} parent=19 // pred_fallthru
          _
      $region20: #{gcn_forward.3} parent=5 // pred_fallthru
        _
      %p138 = scmp.le.s32.totalorder 1, %s12
      %p139 = scmp.lt.s32.totalorder %s12, 3
      %p140 = pnand %p138, %p139
      %p141 = pneg %p140
      // Predicated region
      $region25: #{gcn_forward.3} parent=5 // pred_check
        _
      $region26: #{gcn_forward.3} parent=5 // pred_check_branch
        %143 = sbr.rel (%p140) target = $region28
      $region27: #{gcn_forward.3} parent=5 // pred_region
        %s144 = ssub.s32 %s12, 1
        %s145 = sand.u32 %s25, 1
        %s146 = scalar_lea.sflag [#allocation3], %s145
        %s147 = sand.u32 %s25, 1
        %s148 = smul.addr %s147, 128
        %s149 = scalar_lea.vmem [#allocation2], %s148
        // Predicated region
        $region29: #{gcn_forward.3} parent=27 // pred_check
          %p150 = pneg %p38
        $region30: #{gcn_forward.3} parent=27 // pred_check_branch
          %152 = sbr.rel (%p150) target = $region32
        $region31: #{gcn_forward.3} parent=27 // pred_region
          %153 = dma.done %s146, 2048
        $region32: #{gcn_forward.3} parent=27 // pred_fallthru
          _
        // Predicated region
        $region33: #{gcn_forward.3} parent=27 // pred_check
          %p154 = pneg %p59
        $region34: #{gcn_forward.3} parent=27 // pred_check_branch
          %156 = sbr.rel (%p154) target = $region36
        $region35: #{gcn_forward.3} parent=27 // pred_region
          %157 = dma.done [#allocation5], 1024
        $region36: #{gcn_forward.3} parent=27 // pred_fallthru
          _
        %s158 = sand.u32 %s25, 1
        %s159 = scalar_lea.sflag [#allocation3], %s158
        %s160 = sand.u32 %s25, 1
        %s161 = smul.addr %s160, 128
        %s162 = scalar_lea.vmem [#allocation2], %s161
        %p163 = pneg %p38
        %p164 = pneg %p35
        %p165 = pneg %p59
        %p166 = pneg %p56
        %p167 = pneg %p85
        %p168 = pneg %p82
        %s169 = smul.u32 32, %s17
        %p170 = scmp.lt.s32.totalorder %s169, 63
        %s171 = scalar_select %p170, %s169, 63
        %s172 = smul.addr %s171, 4
        %s173 = scalar_lea.vmem %s2, %s172
        %s174 = smul.u32 32, %s17
        %s175 = smul.u32 32, %s17
        %p176 = scmp.lt.s32.totalorder %s175, 63
        %s177 = scalar_select %p176, %s175, 63
        %s178 = smul.addr %s177, 4
        %s179 = scalar_lea.vmem %s2, %s178
        %s180 = smul.u32 32, %s17
        %v182 = vld [vmem:[%s149] sm:$0xf]
        %v183 = vld [vmem:[%s149 + $0x4] sm:$0xf]
        %v184 = vld [vmem:[%s149 + $0x8] sm:$0xf]
        %v185 = vld [vmem:[%s149 + $0xc] sm:$0xf]
        %v186 = vld [vmem:[%s149 + $0x10] sm:$0xf]
        %v187 = vld [vmem:[%s149 + $0x14] sm:$0xf]
        %v188 = vld [vmem:[%s149 + $0x18] sm:$0xf]
        %v189 = vld [vmem:[%s149 + $0x1c] sm:$0xf]
        %v190 = vld [vmem:[%s149 + $0x20] sm:$0xf]
        %v191 = vld [vmem:[%s149 + $0x24] sm:$0xf]
        %v192 = vld [vmem:[%s149 + $0x28] sm:$0xf]
        %v193 = vld [vmem:[%s149 + $0x2c] sm:$0xf]
        %v194 = vld [vmem:[%s149 + $0x30] sm:$0xf]
        %v195 = vld [vmem:[%s149 + $0x34] sm:$0xf]
        %v196 = vld [vmem:[%s149 + $0x38] sm:$0xf]
        %v197 = vld [vmem:[%s149 + $0x3c] sm:$0xf]
        %v198 = vld [vmem:[%s149 + $0x40] sm:$0xf]
        %v199 = vld [vmem:[%s149 + $0x44] sm:$0xf]
        %v200 = vld [vmem:[%s149 + $0x48] sm:$0xf]
        %v201 = vld [vmem:[%s149 + $0x4c] sm:$0xf]
        %v202 = vld [vmem:[%s149 + $0x50] sm:$0xf]
        %v203 = vld [vmem:[%s149 + $0x54] sm:$0xf]
        %v204 = vld [vmem:[%s149 + $0x58] sm:$0xf]
        %v205 = vld [vmem:[%s149 + $0x5c] sm:$0xf]
        %v206 = vld [vmem:[%s149 + $0x60] sm:$0xf]
        %v207 = vld [vmem:[%s149 + $0x64] sm:$0xf]
        %v208 = vld [vmem:[%s149 + $0x68] sm:$0xf]
        %v209 = vld [vmem:[%s149 + $0x6c] sm:$0xf]
        %v210 = vld [vmem:[%s149 + $0x70] sm:$0xf]
        %v211 = vld [vmem:[%s149 + $0x74] sm:$0xf]
        %v212 = vld [vmem:[%s149 + $0x78] sm:$0xf]
        %v213 = vld [vmem:[%s149 + $0x7c] sm:$0xf]
        %v214 = vld [vmem:[#allocation4] sm:$0xf]
        %v215 = vld [vmem:[#allocation4 + $0x4] sm:$0xf]
        %v216 = vld [vmem:[#allocation4 + $0x8] sm:$0xf]
        %v217 = vld [vmem:[#allocation4 + $0xc] sm:$0xf]
        %v218 = vld [vmem:[#allocation4 + $0x10] sm:$0xf]
        %v219 = vld [vmem:[#allocation4 + $0x14] sm:$0xf]
        %v220 = vld [vmem:[#allocation4 + $0x18] sm:$0xf]
        %v221 = vld [vmem:[#allocation4 + $0x1c] sm:$0xf]
        %v222 = vld [vmem:[#allocation4 + $0x20] sm:$0xf]
        %v223 = vld [vmem:[#allocation4 + $0x24] sm:$0xf]
        %v224 = vld [vmem:[#allocation4 + $0x28] sm:$0xf]
        %v225 = vld [vmem:[#allocation4 + $0x2c] sm:$0xf]
        %v226 = vld [vmem:[#allocation4 + $0x30] sm:$0xf]
        %v227 = vld [vmem:[#allocation4 + $0x34] sm:$0xf]
        %v228 = vld [vmem:[#allocation4 + $0x38] sm:$0xf]
        %v229 = vld [vmem:[#allocation4 + $0x3c] sm:$0xf]
        %v262 = vunpack.c.l.b16 %v182
        %v263 = vunpack.c.l.b16 %v183
        %v264 = vunpack.c.l.b16 %v184
        %v265 = vunpack.c.l.b16 %v185
        %v266 = vunpack.c.l.b16 %v186
        %v267 = vunpack.c.l.b16 %v187
        %v268 = vunpack.c.l.b16 %v188
        %v269 = vunpack.c.l.b16 %v189
        %v270 = vunpack.c.l.b16 %v190
        %v271 = vunpack.c.l.b16 %v191
        %v272 = vunpack.c.l.b16 %v192
        %v273 = vunpack.c.l.b16 %v193
        %v274 = vunpack.c.l.b16 %v194
        %v275 = vunpack.c.l.b16 %v195
        %v276 = vunpack.c.l.b16 %v196
        %v277 = vunpack.c.l.b16 %v197
        %v278 = vunpack.c.l.b16 %v198
        %v279 = vunpack.c.l.b16 %v199
        %v280 = vunpack.c.l.b16 %v200
        %v281 = vunpack.c.l.b16 %v201
        %v282 = vunpack.c.l.b16 %v202
        %v283 = vunpack.c.l.b16 %v203
        %v284 = vunpack.c.l.b16 %v204
        %v285 = vunpack.c.l.b16 %v205
        %v286 = vunpack.c.l.b16 %v206
        %v287 = vunpack.c.l.b16 %v207
        %v288 = vunpack.c.l.b16 %v208
        %v289 = vunpack.c.l.b16 %v209
        %v290 = vunpack.c.l.b16 %v210
        %v291 = vunpack.c.l.b16 %v211
        %v292 = vunpack.c.l.b16 %v212
        %v293 = vunpack.c.l.b16 %v213
        %v294 = vpack.c.b16 %v263, %v262
        %v295 = vpack.c.b16 %v265, %v264
        %v296 = vpack.c.b16 %v267, %v266
        %v297 = vpack.c.b16 %v269, %v268
        %v298 = vpack.c.b16 %v271, %v270
        %v299 = vpack.c.b16 %v273, %v272
        %v300 = vpack.c.b16 %v275, %v274
        %v301 = vpack.c.b16 %v277, %v276
        %v302 = vpack.c.b16 %v279, %v278
        %v303 = vpack.c.b16 %v281, %v280
        %v304 = vpack.c.b16 %v283, %v282
        %v305 = vpack.c.b16 %v285, %v284
        %v306 = vpack.c.b16 %v287, %v286
        %v307 = vpack.c.b16 %v289, %v288
        %v308 = vpack.c.b16 %v291, %v290
        %v309 = vpack.c.b16 %v293, %v292
        %v342 = vunpack.c.l.b16 %v214
        %v343 = vunpack.c.l.b16 %v215
        %v344 = vunpack.c.l.b16 %v216
        %v345 = vunpack.c.l.b16 %v217
        %v346 = vunpack.c.l.b16 %v218
        %v347 = vunpack.c.l.b16 %v219
        %v348 = vunpack.c.l.b16 %v220
        %v349 = vunpack.c.l.b16 %v221
        %v350 = vunpack.c.l.b16 %v222
        %v351 = vunpack.c.l.b16 %v223
        %v352 = vunpack.c.l.b16 %v224
        %v353 = vunpack.c.l.b16 %v225
        %v354 = vunpack.c.l.b16 %v226
        %v355 = vunpack.c.l.b16 %v227
        %v356 = vunpack.c.l.b16 %v228
        %v357 = vunpack.c.l.b16 %v229
        %v358 = vpack.c.b16 %v343, %v342
        %v359 = vpack.c.b16 %v345, %v344
        %v360 = vpack.c.b16 %v347, %v346
        %v361 = vpack.c.b16 %v349, %v348
        %v362 = vpack.c.b16 %v351, %v350
        %v363 = vpack.c.b16 %v353, %v352
        %v364 = vpack.c.b16 %v355, %v354
        %v365 = vpack.c.b16 %v357, %v356
        %374 = vmatprep.subr.bf16.mxu0 0
        %375 = vmatpush1.bf16.msra.mxu0 %v365
        %376 = vmatprep.subr.bf16.mxu0 0
        %377 = vmatpush1.bf16.msra.mxu0 %v364
        %378 = vmatprep.subr.bf16.mxu0 0
        %379 = vmatpush1.bf16.msra.mxu0 %v363
        %380 = vmatprep.subr.bf16.mxu0 0
        %381 = vmatpush1.bf16.msra.mxu0 %v362
        %382 = vmatprep.subr.bf16.mxu0 0
        %383 = vmatpush1.bf16.msra.mxu0 %v361
        %384 = vmatprep.subr.bf16.mxu0 0
        %385 = vmatpush1.bf16.msra.mxu0 %v360
        %386 = vmatprep.subr.bf16.mxu0 0
        %387 = vmatpush1.bf16.msra.mxu0 %v359
        %388 = vmatprep.subr.bf16.mxu0 0
        %389 = vmatpush1.bf16.msra.mxu0 %v358
        %390 = vmatprep.subr.bf16.mxu0 0
        %391 = vmatpush2.bf16.msra.mxu0 0
        %392 = vmatprep.subr.bf16.mxu0 0
        %393 = vmatpush2.bf16.msra.mxu0 0
        %394 = vmatprep.subr.bf16.mxu0 0
        %395 = vmatpush2.bf16.msra.mxu0 0
        %396 = vmatprep.subr.bf16.mxu0 0
        %397 = vmatpush2.bf16.msra.mxu0 0
        %398 = vmatprep.subr.bf16.mxu0 0
        %399 = vmatpush2.bf16.msra.mxu0 0
        %400 = vmatprep.subr.bf16.mxu0 0
        %401 = vmatpush2.bf16.msra.mxu0 0
        %402 = vmatprep.subr.bf16.mxu0 0
        %403 = vmatpush2.bf16.msra.mxu0 0
        %404 = vmatprep.subr.bf16.mxu0 0
        %405 = vmatpush2.bf16.msra.mxu0 0
        %406 = vmatprep.mubr.bf16.mxu0 0
        %407 = vmatmul.mubr.bf16.gmra.mxu0 %v294
        %v408 = vpop.f32.mrf.mxu0
        %v409 = vadd.f32 0.0, %v408
        %v410 = vpop.f32.mrf.mxu0
        %v411 = vpop.f32.mrf.mxu0
        %v412 = vadd.f32 0.0, %v411
        %v413 = vpop.f32.mrf.mxu0
        %414 = vmatprep.mubr.bf16.mxu0 0
        %415 = vmatmul.mubr.bf16.gmra.mxu0 %v295
        %v416 = vpop.f32.mrf.mxu0
        %v417 = vadd.f32 0.0, %v416
        %v418 = vpop.f32.mrf.mxu0
        %v419 = vpop.f32.mrf.mxu0
        %v420 = vadd.f32 0.0, %v419
        %v421 = vpop.f32.mrf.mxu0
        %422 = vmatprep.mubr.bf16.mxu0 0
        %423 = vmatmul.mubr.bf16.gmra.mxu0 %v296
        %v424 = vpop.f32.mrf.mxu0
        %v425 = vadd.f32 0.0, %v424
        %v426 = vpop.f32.mrf.mxu0
        %v427 = vpop.f32.mrf.mxu0
        %v428 = vadd.f32 0.0, %v427
        %v429 = vpop.f32.mrf.mxu0
        %430 = vmatprep.mubr.bf16.mxu0 0
        %431 = vmatmul.mubr.bf16.gmra.mxu0 %v297
        %v432 = vpop.f32.mrf.mxu0
        %v433 = vadd.f32 0.0, %v432
        %v434 = vpop.f32.mrf.mxu0
        %v435 = vpop.f32.mrf.mxu0
        %v436 = vadd.f32 0.0, %v435
        %v437 = vpop.f32.mrf.mxu0
        %438 = vmatprep.mubr.bf16.mxu0 0
        %439 = vmatmul.mubr.bf16.gmra.mxu0 %v298
        %v440 = vpop.f32.mrf.mxu0
        %v441 = vadd.f32 0.0, %v440
        %v442 = vpop.f32.mrf.mxu0
        %v443 = vpop.f32.mrf.mxu0
        %v444 = vadd.f32 0.0, %v443
        %v445 = vpop.f32.mrf.mxu0
        %446 = vmatprep.mubr.bf16.mxu0 0
        %447 = vmatmul.mubr.bf16.gmra.mxu0 %v299
        %v448 = vpop.f32.mrf.mxu0
        %v449 = vadd.f32 0.0, %v448
        %v450 = vpop.f32.mrf.mxu0
        %v451 = vpop.f32.mrf.mxu0
        %v452 = vadd.f32 0.0, %v451
        %v453 = vpop.f32.mrf.mxu0
        %454 = vmatprep.mubr.bf16.mxu0 0
        %455 = vmatmul.mubr.bf16.gmra.mxu0 %v300
        %v456 = vpop.f32.mrf.mxu0
        %v457 = vadd.f32 0.0, %v456
        %v458 = vpop.f32.mrf.mxu0
        %v459 = vpop.f32.mrf.mxu0
        %v460 = vadd.f32 0.0, %v459
        %v461 = vpop.f32.mrf.mxu0
        %462 = vmatprep.mubr.bf16.mxu0 0
        %463 = vmatmul.mubr.bf16.gmra.mxu0 %v301
        %v464 = vpop.f32.mrf.mxu0
        %v465 = vadd.f32 0.0, %v464
        %v466 = vpop.f32.mrf.mxu0
        %v467 = vpop.f32.mrf.mxu0
        %v468 = vadd.f32 0.0, %v467
        %v469 = vpop.f32.mrf.mxu0
        %470 = vmatprep.mubr.bf16.mxu0 0
        %471 = vmatmul.mubr.bf16.gmra.mxu0 %v302
        %v472 = vpop.f32.mrf.mxu0
        %v473 = vadd.f32 0.0, %v472
        %v474 = vpop.f32.mrf.mxu0
        %v475 = vpop.f32.mrf.mxu0
        %v476 = vadd.f32 0.0, %v475
        %v477 = vpop.f32.mrf.mxu0
        %478 = vmatprep.mubr.bf16.mxu0 0
        %479 = vmatmul.mubr.bf16.gmra.mxu0 %v303
        %v480 = vpop.f32.mrf.mxu0
        %v481 = vadd.f32 0.0, %v480
        %v482 = vpop.f32.mrf.mxu0
        %v483 = vpop.f32.mrf.mxu0
        %v484 = vadd.f32 0.0, %v483
        %v485 = vpop.f32.mrf.mxu0
        %486 = vmatprep.mubr.bf16.mxu0 0
        %487 = vmatmul.mubr.bf16.gmra.mxu0 %v304
        %v488 = vpop.f32.mrf.mxu0
        %v489 = vadd.f32 0.0, %v488
        %v490 = vpop.f32.mrf.mxu0
        %v491 = vpop.f32.mrf.mxu0
        %v492 = vadd.f32 0.0, %v491
        %v493 = vpop.f32.mrf.mxu0
        %494 = vmatprep.mubr.bf16.mxu0 0
        %495 = vmatmul.mubr.bf16.gmra.mxu0 %v305
        %v496 = vpop.f32.mrf.mxu0
        %v497 = vadd.f32 0.0, %v496
        %v498 = vpop.f32.mrf.mxu0
        %v499 = vpop.f32.mrf.mxu0
        %v500 = vadd.f32 0.0, %v499
        %v501 = vpop.f32.mrf.mxu0
        %502 = vmatprep.mubr.bf16.mxu0 0
        %503 = vmatmul.mubr.bf16.gmra.mxu0 %v306
        %v504 = vpop.f32.mrf.mxu0
        %v505 = vadd.f32 0.0, %v504
        %v506 = vpop.f32.mrf.mxu0
        %v507 = vpop.f32.mrf.mxu0
        %v508 = vadd.f32 0.0, %v507
        %v509 = vpop.f32.mrf.mxu0
        %510 = vmatprep.mubr.bf16.mxu0 0
        %511 = vmatmul.mubr.bf16.gmra.mxu0 %v307
        %v512 = vpop.f32.mrf.mxu0
        %v513 = vadd.f32 0.0, %v512
        %v514 = vpop.f32.mrf.mxu0
        %v515 = vpop.f32.mrf.mxu0
        %v516 = vadd.f32 0.0, %v515
        %v517 = vpop.f32.mrf.mxu0
        %518 = vmatprep.mubr.bf16.mxu0 0
        %519 = vmatmul.mubr.bf16.gmra.mxu0 %v308
        %v520 = vpop.f32.mrf.mxu0
        %v521 = vadd.f32 0.0, %v520
        %v522 = vpop.f32.mrf.mxu0
        %v523 = vpop.f32.mrf.mxu0
        %v524 = vadd.f32 0.0, %v523
        %v525 = vpop.f32.mrf.mxu0
        %526 = vmatprep.mubr.bf16.mxu0 0
        %527 = vmatmul.mubr.bf16.gmra.mxu0 %v309
        %v528 = vpop.f32.mrf.mxu0
        %v529 = vadd.f32 0.0, %v528
        %v530 = vpop.f32.mrf.mxu0
        %v531 = vpop.f32.mrf.mxu0
        %v532 = vadd.f32 0.0, %v531
        %v533 = vpop.f32.mrf.mxu0
        %534 = vdwg.mxu0
        %v535 = vpack.c.bf16 %v412, %v409
        %v536 = vpack.c.bf16 %v420, %v417
        %v537 = vpack.c.bf16 %v428, %v425
        %v538 = vpack.c.bf16 %v436, %v433
        %v539 = vpack.c.bf16 %v444, %v441
        %v540 = vpack.c.bf16 %v452, %v449
        %v541 = vpack.c.bf16 %v460, %v457
        %v542 = vpack.c.bf16 %v468, %v465
        %v543 = vpack.c.bf16 %v476, %v473
        %v544 = vpack.c.bf16 %v484, %v481
        %v545 = vpack.c.bf16 %v492, %v489
        %v546 = vpack.c.bf16 %v500, %v497
        %v547 = vpack.c.bf16 %v508, %v505
        %v548 = vpack.c.bf16 %v516, %v513
        %v549 = vpack.c.bf16 %v524, %v521
        %v550 = vpack.c.bf16 %v532, %v529
        %v567 = vunpack.c.l.b16 %v535
        %v568 = vunpack.c.h.b16 %v535
        %v569 = vunpack.c.l.b16 %v536
        %v570 = vunpack.c.h.b16 %v536
        %v571 = vunpack.c.l.b16 %v537
        %v572 = vunpack.c.h.b16 %v537
        %v573 = vunpack.c.l.b16 %v538
        %v574 = vunpack.c.h.b16 %v538
        %v575 = vunpack.c.l.b16 %v539
        %v576 = vunpack.c.h.b16 %v539
        %v577 = vunpack.c.l.b16 %v540
        %v578 = vunpack.c.h.b16 %v540
        %v579 = vunpack.c.l.b16 %v541
        %v580 = vunpack.c.h.b16 %v541
        %v581 = vunpack.c.l.b16 %v542
        %v582 = vunpack.c.h.b16 %v542
        %v583 = vunpack.c.l.b16 %v543
        %v584 = vunpack.c.h.b16 %v543
        %v585 = vunpack.c.l.b16 %v544
        %v586 = vunpack.c.h.b16 %v544
        %v587 = vunpack.c.l.b16 %v545
        %v588 = vunpack.c.h.b16 %v545
        %v589 = vunpack.c.l.b16 %v546
        %v590 = vunpack.c.h.b16 %v546
        %v591 = vunpack.c.l.b16 %v547
        %v592 = vunpack.c.h.b16 %v547
        %v593 = vunpack.c.l.b16 %v548
        %v594 = vunpack.c.h.b16 %v548
        %v595 = vunpack.c.l.b16 %v549
        %v596 = vunpack.c.h.b16 %v549
        %v597 = vunpack.c.l.b16 %v550
        %v598 = vunpack.c.h.b16 %v550
        %v599 = vpack.c.b16 %v567, %v567
        %v600 = vpack.c.b16 %v568, %v568
        %v601 = vpack.c.b16 %v569, %v569
        %v602 = vpack.c.b16 %v570, %v570
        %v603 = vpack.c.b16 %v571, %v571
        %v604 = vpack.c.b16 %v572, %v572
        %v605 = vpack.c.b16 %v573, %v573
        %v606 = vpack.c.b16 %v574, %v574
        %v607 = vpack.c.b16 %v575, %v575
        %v608 = vpack.c.b16 %v576, %v576
        %v609 = vpack.c.b16 %v577, %v577
        %v610 = vpack.c.b16 %v578, %v578
        %v611 = vpack.c.b16 %v579, %v579
        %v612 = vpack.c.b16 %v580, %v580
        %v613 = vpack.c.b16 %v581, %v581
        %v614 = vpack.c.b16 %v582, %v582
        %v615 = vpack.c.b16 %v583, %v583
        %v616 = vpack.c.b16 %v584, %v584
        %v617 = vpack.c.b16 %v585, %v585
        %v618 = vpack.c.b16 %v586, %v586
        %v619 = vpack.c.b16 %v587, %v587
        %v620 = vpack.c.b16 %v588, %v588
        %v621 = vpack.c.b16 %v589, %v589
        %v622 = vpack.c.b16 %v590, %v590
        %v623 = vpack.c.b16 %v591, %v591
        %v624 = vpack.c.b16 %v592, %v592
        %v625 = vpack.c.b16 %v593, %v593
        %v626 = vpack.c.b16 %v594, %v594
        %v627 = vpack.c.b16 %v595, %v595
        %v628 = vpack.c.b16 %v596, %v596
        %v629 = vpack.c.b16 %v597, %v597
        %v630 = vpack.c.b16 %v598, %v598
        %663 = vst [vmem:[%s179] sm:$0xf] %v599
        %664 = vst [vmem:[%s179 + $0x4] sm:$0xf] %v600
        %665 = vst [vmem:[%s179 + $0x8] sm:$0xf] %v601
        %666 = vst [vmem:[%s179 + $0xc] sm:$0xf] %v602
        %667 = vst [vmem:[%s179 + $0x10] sm:$0xf] %v603
        %668 = vst [vmem:[%s179 + $0x14] sm:$0xf] %v604
        %669 = vst [vmem:[%s179 + $0x18] sm:$0xf] %v605
        %670 = vst [vmem:[%s179 + $0x1c] sm:$0xf] %v606
        %671 = vst [vmem:[%s179 + $0x20] sm:$0xf] %v607
        %672 = vst [vmem:[%s179 + $0x24] sm:$0xf] %v608
        %673 = vst [vmem:[%s179 + $0x28] sm:$0xf] %v609
        %674 = vst [vmem:[%s179 + $0x2c] sm:$0xf] %v610
        %675 = vst [vmem:[%s179 + $0x30] sm:$0xf] %v611
        %676 = vst [vmem:[%s179 + $0x34] sm:$0xf] %v612
        %677 = vst [vmem:[%s179 + $0x38] sm:$0xf] %v613
        %678 = vst [vmem:[%s179 + $0x3c] sm:$0xf] %v614
        %679 = vst [vmem:[%s179 + $0x40] sm:$0xf] %v615
        %680 = vst [vmem:[%s179 + $0x44] sm:$0xf] %v616
        %681 = vst [vmem:[%s179 + $0x48] sm:$0xf] %v617
        %682 = vst [vmem:[%s179 + $0x4c] sm:$0xf] %v618
        %683 = vst [vmem:[%s179 + $0x50] sm:$0xf] %v619
        %684 = vst [vmem:[%s179 + $0x54] sm:$0xf] %v620
        %685 = vst [vmem:[%s179 + $0x58] sm:$0xf] %v621
        %686 = vst [vmem:[%s179 + $0x5c] sm:$0xf] %v622
        %687 = vst [vmem:[%s179 + $0x60] sm:$0xf] %v623
        %688 = vst [vmem:[%s179 + $0x64] sm:$0xf] %v624
        %689 = vst [vmem:[%s179 + $0x68] sm:$0xf] %v625
        %690 = vst [vmem:[%s179 + $0x6c] sm:$0xf] %v626
        %691 = vst [vmem:[%s179 + $0x70] sm:$0xf] %v627
        %692 = vst [vmem:[%s179 + $0x74] sm:$0xf] %v628
        %693 = vst [vmem:[%s179 + $0x78] sm:$0xf] %v629
        %694 = vst [vmem:[%s179 + $0x7c] sm:$0xf] %v630
        %s695 = smul.u32 32, %s17
        %p696 = scmp.lt.s32.totalorder %s695, 63
        %s697 = scalar_select %p696, %s695, 63
        %s698 = smul.addr %s697, 4
        %s699 = scalar_lea.vmem %s2, %s698
        // Predicated region
        $region37: #{gcn_forward.3} parent=27 // pred_check
          %p700 = pneg %p82
        $region38: #{gcn_forward.3} parent=27 // pred_check_branch
          %702 = sbr.rel (%p700) target = $region40
        $region39: #{gcn_forward.3} parent=27 // pred_region
          %s703 = smul.u32 32, %s17
        $region40: #{gcn_forward.3} parent=27 // pred_fallthru
          _
      $region28: #{gcn_forward.3} parent=5 // pred_fallthru
        _
      %p704 = scmp.le.s32.totalorder 2, %s12
      // Predicated region
      $region41: #{gcn_forward.3} parent=5 // pred_check
        %p705 = pneg %p704
      $region42: #{gcn_forward.3} parent=5 // pred_check_branch
        %707 = sbr.rel (%p705) target = $region44
      $region43: #{gcn_forward.3} parent=5 // pred_region
        %s708 = ssub.s32 %s12, 2
        // Predicated region
        $region45: #{gcn_forward.3} parent=43 // pred_check
          %p709 = pneg %p88
        $region46: #{gcn_forward.3} parent=43 // pred_check_branch
          %711 = sbr.rel (%p709) target = $region48
        $region47: #{gcn_forward.3} parent=43 // pred_region
          %s712 = smul.u32 32, %s18
          %p713 = scmp.lt.s32.totalorder %s712, 63
          %s714 = scalar_select %p713, %s712, 63
          %s715 = smul.addr %s714, 4
          %s716 = scalar_lea.vmem %s2, %s715
        $region48: #{gcn_forward.3} parent=43 // pred_fallthru
          _
      $region44: #{gcn_forward.3} parent=5 // pred_fallthru
        _
    $region6: #{gcn_forward.3} parent=1 // loop_footer
      %s16 = sadd.s32 1, %s12
    $region7: #{gcn_forward.3} parent=1 // loop_footer_branch
      %11 = sbr.rel target = $region3
    $region8: #{gcn_forward.3} parent=1 // loop_exit
      _
    %717 = vsyncpa [#allocation3], 1
    %s718 = scalar_lea.sflag [#allocation3], 1
    %719 = vsyncpa %s718, 1
    %720 = vsyncpa [#allocation5], 1

// kernel: gcn_forward.5
$region0: #{gcn_forward.5}
  #allocation0 [shape = 'u32[]', space=smem, size = 0x4, offset = 0x4, fixed_abs, tag = 'smem constant byte address 0x4 - core index']
  #allocation1 [shape = 'u32[144,128]{1,0:T(1,128)}', space=vmem, size = 0x12000, scoped, tag = 'internal scratch']
  #allocation2 [shape = 'f32[256,128]{1,0:T(8,128)}', space=vmem, size = 0x20000, scoped, tag = 'scratch operand']
  #allocation3 [shape = 's32[1]{0}', space=sflag, size = 0x4, scoped, tag = 'scoped memory for gcn_forward.5']
  #allocation4 [shape = 'u8[512]{0}', space=smem, size = 0x200, scoped, tag = 'prefetched SMEM operand 0']
  #allocation5 [shape = 'u8[512]{0}', space=smem, size = 0x200, scoped, tag = 'prefetched SMEM operand 1']
  %s0 = inlined_call_operand.vmem [shape: s32[4], index: 0, kind: input, shape index: {}]
  %s1 = inlined_call_operand.vmem [shape: s32[2], index: 1, kind: input, shape index: {}]
  %s2 = inlined_call_operand.vmem [shape: bf16[512,512], index: 2, kind: input, shape index: {}]
  %s3 = inlined_call_operand.vmem [shape: bf16[512,128], index: 3, kind: input, shape index: {}]
  %s4 = inlined_call_operand.vmem [shape: f32[1,128], index: 4, kind: input, shape index: {}]
  %s5 = inlined_call_operand.vmem [shape: f32[512,128], index: 5, kind: output, shape index: {}]
  %s6 = sld [smem:[#allocation0]]
  $region95: #{gcn_forward.5} parent=0
    _
  %s8 = ssub.s32 1, %s6
  %s9 = scalar_select 0, %s8, %s6
  %s10 = sshll.u32 %s0, 4
  %s11 = int_to_ptr.vmem [resolvable:$true] %s10
  %13 = dma.vmem_to_smem %s11, 16, [#allocation4], [#allocation3]
  %s14 = sshll.u32 %s1, 4
  %s15 = int_to_ptr.vmem [resolvable:$true] %s14
  %17 = dma.vmem_to_smem %s15, 16, [#allocation5], [#allocation3]
  %18 = dma.done [#allocation3], 32
  %19 = sfence
  $region1: #{gcn_forward.5} parent=0
    #allocation6 [shape = 'u8[262144]{0}', space=vmem, size = 0x40000, scoped, tag = 'input window, operand 2']
    loop: start=0, step=1, limit=6
    $region2: #{gcn_forward.5} parent=1 // loop_pre_header
      _
    $region3: #{gcn_forward.5} parent=1 // loop_header
      %s21 = sphi 0, %s25
      %p22 = scmp.ge.s32.totalorder %s21, 6
      %s28 = sphi 0, %s40
      %s29 = sphi 0, %s36
      %s30 = sphi 0, %s28
      %s31 = sphi 0, %s29
      %s32 = sphi 0, %s30
      %s33 = sphi 0, %s31
      %s51 = sphi 0, %s53
      %s54 = sphi 0, %s51
      %s55 = sphi 0, %s54
      %s71 = sphi 0, %s55
      %s75 = sphi 0, %s75
      %s77 = sphi 0, %s75
      %s78 = sphi 0, %s77
      %s92 = sphi 0, %s78
      %s96 = sphi 0, %s96
      %s98 = sphi 0, %s96
      %s99 = sphi 0, %s98
      %s113 = sphi 0, %s99
      %s119 = sphi 0, %s121
      %s122 = sphi 0, %s119
      %s123 = sphi 0, %s122
      %s139 = sphi 0, %s123
    $region4: #{gcn_forward.5} parent=1 // loop_header_branch
      %24 = sbr.rel (%p22) target = $region8
    $region5: #{gcn_forward.5} parent=1 // loop_body
      %s26 = ssub.s32 %s21, 1
      %s27 = ssub.s32 %s21, 2
      %s34 = sadd.s32 1, %s29
      %p35 = scmp.ge.s32.totalorder %s34, 2
      %s36 = scalar_select %p35, 0, %s34
      %s37 = sadd.s32 1, %s28
      %s38 = scalar_select %p35, %s37, %s28
      %p39 = scmp.ge.s32.totalorder %s38, 2
      %s40 = scalar_select %p39, 0, %s38
      %s41 = smul.u32 %s28, 2
      %s42 = sadd.s32 %s41, %s29
      %s43 = sld [smem:[#allocation4 + %s42]]
      %s44 = smul.u32 %s40, 2
      %s45 = sadd.s32 %s44, %s36
      %s46 = sld [smem:[#allocation4 + %s45]]
      %s47 = ssub.s32 %s28, %s40
      %s48 = ssub.s32 %s43, %s46
      %s49 = sor.u32 %s47, %s48
      %p50 = scmp.eq.s32.totalorder %s49, 0
      %s52 = sadd.s32 %s51, 1
      %s53 = scalar_select %p50, %s51, %s52
      %p56 = pneg %p50
      %p57 = scmp.eq.s32.totalorder %s21, 3
      %p58 = por %p56, %p57
      %p59 = scmp.ne.s32.totalorder %s51, %s54
      %p60 = scmp.eq.s32.totalorder %s21, 0
      %p61 = por %p59, %p60
      %p62 = scmp.ne.s32.totalorder %s51, %s54
      %p63 = scmp.eq.s32.totalorder %s26, 3
      %p64 = por %p62, %p63
      %p65 = scmp.ne.s32.totalorder %s54, %s55
      %p66 = scmp.eq.s32.totalorder %s26, 0
      %p67 = por %p65, %p66
      %p68 = scmp.ne.s32.totalorder %s54, %s55
      %p69 = scmp.eq.s32.totalorder %s27, 3
      %p70 = por %p68, %p69
      %p72 = scmp.ne.s32.totalorder %s55, %s71
      %p73 = scmp.eq.s32.totalorder %s27, 0
      %p74 = por %p72, %p73
      %s76 = sadd.s32 %s75, 1
      %p79 = scmp.eq.s32.totalorder %s21, 3
      %p80 = scmp.ne.s32.totalorder %s75, %s77
      %p81 = scmp.eq.s32.totalorder %s21, 0
      %p82 = por %p80, %p81
      %p83 = scmp.ne.s32.totalorder %s75, %s77
      %p84 = scmp.eq.s32.totalorder %s26, 3
      %p85 = por %p83, %p84
      %p86 = scmp.ne.s32.totalorder %s77, %s78
      %p87 = scmp.eq.s32.totalorder %s26, 0
      %p88 = por %p86, %p87
      %p89 = scmp.ne.s32.totalorder %s77, %s78
      %p90 = scmp.eq.s32.totalorder %s27, 3
      %p91 = por %p89, %p90
      %p93 = scmp.ne.s32.totalorder %s78, %s92
      %p94 = scmp.eq.s32.totalorder %s27, 0
      %p95 = por %p93, %p94
      %s97 = sadd.s32 %s96, 1
      %p100 = scmp.eq.s32.totalorder %s21, 3
      %p101 = scmp.ne.s32.totalorder %s96, %s98
      %p102 = scmp.eq.s32.totalorder %s21, 0
      %p103 = por %p101, %p102
      %p104 = scmp.ne.s32.totalorder %s96, %s98
      %p105 = scmp.eq.s32.totalorder %s26, 3
      %p106 = por %p104, %p105
      %p107 = scmp.ne.s32.totalorder %s98, %s99
      %p108 = scmp.eq.s32.totalorder %s26, 0
      %p109 = por %p107, %p108
      %p110 = scmp.ne.s32.totalorder %s98, %s99
      %p111 = scmp.eq.s32.totalorder %s27, 3
      %p112 = por %p110, %p111
      %p114 = scmp.ne.s32.totalorder %s99, %s113
      %p115 = scmp.eq.s32.totalorder %s27, 0
      %p116 = por %p114, %p115
      %s117 = ssub.s32 %s28, %s40
      %p118 = scmp.eq.s32.totalorder %s117, 0
      %s120 = sadd.s32 %s119, 1
      %s121 = scalar_select %p118, %s119, %s120
      %p124 = pneg %p118
      %p125 = scmp.eq.s32.totalorder %s21, 3
      %p126 = por %p124, %p125
      %p127 = scmp.ne.s32.totalorder %s119, %s122
      %p128 = scmp.eq.s32.totalorder %s21, 0
      %p129 = por %p127, %p128
      %p130 = scmp.ne.s32.totalorder %s119, %s122
      %p131 = scmp.eq.s32.totalorder %s26, 3
      %p132 = por %p130, %p131
      %p133 = scmp.ne.s32.totalorder %s122, %s123
      %p134 = scmp.eq.s32.totalorder %s26, 0
      %p135 = por %p133, %p134
      %p136 = scmp.ne.s32.totalorder %s122, %s123
      %p137 = scmp.eq.s32.totalorder %s27, 3
      %p138 = por %p136, %p137
      %p140 = scmp.ne.s32.totalorder %s123, %s139
      %p141 = scmp.eq.s32.totalorder %s27, 0
      %p142 = por %p140, %p141
      %p143 = scmp.le.s32.totalorder 1, %s21
      %p144 = scmp.lt.s32.totalorder %s21, 5
      %p145 = pnand %p143, %p144
      %p146 = pneg %p145
      // Predicated region
      $region9: #{gcn_forward.5} parent=5 // pred_check
        _
      $region10: #{gcn_forward.5} parent=5 // pred_check_branch
        %148 = sbr.rel (%p145) target = $region12
      $region11: #{gcn_forward.5} parent=5 // pred_region
        %s149 = ssub.s32 %s21, 1
        // Predicated region
        $region13: #{gcn_forward.5} parent=11 // pred_check
          %p150 = pneg %p88
        $region14: #{gcn_forward.5} parent=11 // pred_check_branch
          %152 = sbr.rel (%p150) target = $region16
        $region15: #{gcn_forward.5} parent=11 // pred_region
          _
        $region16: #{gcn_forward.5} parent=11 // pred_fallthru
          _
        // Predicated region
        $region17: #{gcn_forward.5} parent=11 // pred_check
          %p153 = pneg %p109
        $region18: #{gcn_forward.5} parent=11 // pred_check_branch
          %155 = sbr.rel (%p153) target = $region20
        $region19: #{gcn_forward.5} parent=11 // pred_region
          _
        $region20: #{gcn_forward.5} parent=11 // pred_fallthru
          _
      $region12: #{gcn_forward.5} parent=5 // pred_fallthru
        _
      %p156 = scmp.lt.s32.totalorder %s21, 4
      // Predicated region
      $region21: #{gcn_forward.5} parent=5 // pred_check
        %p157 = pneg %p156
      $region22: #{gcn_forward.5} parent=5 // pred_check_branch
        %159 = sbr.rel (%p157) target = $region24
      $region23: #{gcn_forward.5} parent=5 // pred_region
        // Predicated region
        $region25: #{gcn_forward.5} parent=23 // pred_check
          %p160 = pneg %p61
        $region26: #{gcn_forward.5} parent=23 // pred_check_branch
          %162 = sbr.rel (%p160) target = $region28
        $region27: #{gcn_forward.5} parent=23 // pred_region
          %s163 = sand.u32 %s51, 1
          %s164 = sand.u32 %s51, 1
          %s165 = smul.addr %s164, 256
          %s166 = scalar_lea.vmem [#allocation6], %s165
          %s167 = smul.u32 %s28, 2
          %s168 = sadd.s32 %s167, %s29
          %s169 = sld [smem:[#allocation4 + %s168]]
          %s170 = smul.u32 32, %s28
          %s171 = smul.u32 2, %s169
          %s172 = smul.addr %s170, 4
          %s173 = sadd.s32 %s171, %s172
          %s174 = smul.addr %s173, 4
          %s175 = scalar_lea.vmem %s2, %s174
          // Predicated region
          $region29: #{gcn_forward.5} parent=27 // pred_check
            _
          $region30: #{gcn_forward.5} parent=27 // pred_check_branch
            %177 = sbr.rel (0) target = $region32
          $region31: #{gcn_forward.5} parent=27 // pred_region
            // Predicated region
            $region33: #{gcn_forward.5} parent=31 // pred_check
              _
            $region34: #{gcn_forward.5} parent=31 // pred_check_branch
              %179 = sbr.rel (0) target = $region36
            $region35: #{gcn_forward.5} parent=31 // pred_region
              // Predicated region
              $region48: #{gcn_forward.5} parent=35 // pred_check
                _
              $region49: #{gcn_forward.5} parent=35 // pred_check_branch
                %257 = sbr.rel (0) target = $region51
              $region50: #{gcn_forward.5} parent=35 // pred_region
                loop: start=0, step=1, limit=1
                $region52: #{gcn_forward.5} parent=50 // loop_pre_header
                  _
                $region53: #{gcn_forward.5} parent=50 // loop_header
                  %s259 = sphi 0, %s263
                  %p260 = scmp.ge.s32.totalorder %s259, 1
                  %s264 = sphi %s175, %s175
                  %s265 = sphi %s166, %s166
                $region54: #{gcn_forward.5} parent=50 // loop_header_branch
                  %262 = sbr.rel (%p260) target = $region58
                $region55: #{gcn_forward.5} parent=50 // loop_body
                  %v266 = vld [vmem:[%s264] sm:$0xff]
                  %267 = vst [vmem:[%s265] sm:$0xff] %v266
                  %v268 = vld [vmem:[%s264 + $0x10] sm:$0xff]
                  %269 = vst [vmem:[%s265 + $0x8] sm:$0xff] %v268
                  %v270 = vld [vmem:[%s264 + $0x20] sm:$0xff]
                  %271 = vst [vmem:[%s265 + $0x10] sm:$0xff] %v270
                  %v272 = vld [vmem:[%s264 + $0x30] sm:$0xff]
                  %273 = vst [vmem:[%s265 + $0x18] sm:$0xff] %v272
                  %v274 = vld [vmem:[%s264 + $0x40] sm:$0xff]
                  %275 = vst [vmem:[%s265 + $0x20] sm:$0xff] %v274
                  %v276 = vld [vmem:[%s264 + $0x50] sm:$0xff]
                  %277 = vst [vmem:[%s265 + $0x28] sm:$0xff] %v276
                  %v278 = vld [vmem:[%s264 + $0x60] sm:$0xff]
                  %279 = vst [vmem:[%s265 + $0x30] sm:$0xff] %v278
                  %v280 = vld [vmem:[%s264 + $0x70] sm:$0xff]
                  %281 = vst [vmem:[%s265 + $0x38] sm:$0xff] %v280
                  %v282 = vld [vmem:[%s264 + $0x80] sm:$0xff]
                  %283 = vst [vmem:[%s265 + $0x40] sm:$0xff] %v282
                  %v284 = vld [vmem:[%s264 + $0x90] sm:$0xff]
                  %285 = vst [vmem:[%s265 + $0x48] sm:$0xff] %v284
                  %v286 = vld [vmem:[%s264 + $0xa0] sm:$0xff]
                  %287 = vst [vmem:[%s265 + $0x50] sm:$0xff] %v286
                  %v288 = vld [vmem:[%s264 + $0xb0] sm:$0xff]
                  %289 = vst [vmem:[%s265 + $0x58] sm:$0xff] %v288
                  %v290 = vld [vmem:[%s264 + $0xc0] sm:$0xff]
                  %291 = vst [vmem:[%s265 + $0x60] sm:$0xff] %v290
                  %v292 = vld [vmem:[%s264 + $0xd0] sm:$0xff]
                  %293 = vst [vmem:[%s265 + $0x68] sm:$0xff] %v292
                  %v294 = vld [vmem:[%s264 + $0xe0] sm:$0xff]
                  %295 = vst [vmem:[%s265 + $0x70] sm:$0xff] %v294
                  %v296 = vld [vmem:[%s264 + $0xf0] sm:$0xff]
                  %297 = vst [vmem:[%s265 + $0x78] sm:$0xff] %v296
                  %v298 = vld [vmem:[%s264 + $0x100] sm:$0xff]
                  %299 = vst [vmem:[%s265 + $0x80] sm:$0xff] %v298
                  %v300 = vld [vmem:[%s264 + $0x110] sm:$0xff]
                  %301 = vst [vmem:[%s265 + $0x88] sm:$0xff] %v300
                  %v302 = vld [vmem:[%s264 + $0x120] sm:$0xff]
                  %303 = vst [vmem:[%s265 + $0x90] sm:$0xff] %v302
                  %v304 = vld [vmem:[%s264 + $0x130] sm:$0xff]
                  %305 = vst [vmem:[%s265 + $0x98] sm:$0xff] %v304
                  %v306 = vld [vmem:[%s264 + $0x140] sm:$0xff]
                  %307 = vst [vmem:[%s265 + $0xa0] sm:$0xff] %v306
                  %v308 = vld [vmem:[%s264 + $0x150] sm:$0xff]
                  %309 = vst [vmem:[%s265 + $0xa8] sm:$0xff] %v308
                  %v310 = vld [vmem:[%s264 + $0x160] sm:$0xff]
                  %311 = vst [vmem:[%s265 + $0xb0] sm:$0xff] %v310
                  %v312 = vld [vmem:[%s264 + $0x170] sm:$0xff]
                  %313 = vst [vmem:[%s265 + $0xb8] sm:$0xff] %v312
                  %v314 = vld [vmem:[%s264 + $0x180] sm:$0xff]
                  %315 = vst [vmem:[%s265 + $0xc0] sm:$0xff] %v314
                  %v316 = vld [vmem:[%s264 + $0x190] sm:$0xff]
                  %317 = vst [vmem:[%s265 + $0xc8] sm:$0xff] %v316
                  %v318 = vld [vmem:[%s264 + $0x1a0] sm:$0xff]
                  %319 = vst [vmem:[%s265 + $0xd0] sm:$0xff] %v318
                  %v320 = vld [vmem:[%s264 + $0x1b0] sm:$0xff]
                  %321 = vst [vmem:[%s265 + $0xd8] sm:$0xff] %v320
                  %v322 = vld [vmem:[%s264 + $0x1c0] sm:$0xff]
                  %323 = vst [vmem:[%s265 + $0xe0] sm:$0xff] %v322
                  %v324 = vld [vmem:[%s264 + $0x1d0] sm:$0xff]
                  %325 = vst [vmem:[%s265 + $0xe8] sm:$0xff] %v324
                  %v326 = vld [vmem:[%s264 + $0x1e0] sm:$0xff]
                  %327 = vst [vmem:[%s265 + $0xf0] sm:$0xff] %v326
                  %v328 = vld [vmem:[%s264 + $0x1f0] sm:$0xff]
                  %329 = vst [vmem:[%s265 + $0xf8] sm:$0xff] %v328
                $region56: #{gcn_forward.5} parent=50 // loop_footer
                  %s263 = sadd.s32 1, %s259
                $region57: #{gcn_forward.5} parent=50 // loop_footer_branch
                  %258 = sbr.rel target = $region53
                $region58: #{gcn_forward.5} parent=50 // loop_exit
                  _
              $region51: #{gcn_forward.5} parent=35 // pred_fallthru
                _
              // Predicated region
              $region59: #{gcn_forward.5} parent=35 // pred_check
                _
              $region60: #{gcn_forward.5} parent=35 // pred_check_branch
                %331 = sbr.rel target = $region62
              $region61: #{gcn_forward.5} parent=35 // pred_region
                _
              $region62: #{gcn_forward.5} parent=35 // pred_fallthru
                _
            $region36: #{gcn_forward.5} parent=31 // pred_fallthru
              _
            // Predicated region
            $region37: #{gcn_forward.5} parent=31 // pred_check
              _
            $region38: #{gcn_forward.5} parent=31 // pred_check_branch
              %181 = sbr.rel target = $region40
            $region39: #{gcn_forward.5} parent=31 // pred_region
              %s183 = ssub.s32 256, 1
              loop: start=0, step=1, limit=1
              $region41: #{gcn_forward.5} parent=39 // loop_pre_header
                _
              $region42: #{gcn_forward.5} parent=39 // loop_header
                %s185 = sphi 0, %s189
                %p186 = scmp.ge.s32.totalorder %s185, 1
                %s190 = sphi %s175, %s175
                %s191 = sphi %s166, %s166
              $region43: #{gcn_forward.5} parent=39 // loop_header_branch
                %188 = sbr.rel (%p186) target = $region47
              $region44: #{gcn_forward.5} parent=39 // loop_body
                %v192 = vld [vmem:[%s190] sm:%s183]
                %193 = vst [vmem:[%s191] sm:%s183] %v192
                %v194 = vld [vmem:[%s190 + $0x10] sm:%s183]
                %195 = vst [vmem:[%s191 + $0x8] sm:%s183] %v194
                %v196 = vld [vmem:[%s190 + $0x20] sm:%s183]
                %197 = vst [vmem:[%s191 + $0x10] sm:%s183] %v196
                %v198 = vld [vmem:[%s190 + $0x30] sm:%s183]
                %199 = vst [vmem:[%s191 + $0x18] sm:%s183] %v198
                %v200 = vld [vmem:[%s190 + $0x40] sm:%s183]
                %201 = vst [vmem:[%s191 + $0x20] sm:%s183] %v200
                %v202 = vld [vmem:[%s190 + $0x50] sm:%s183]
                %203 = vst [vmem:[%s191 + $0x28] sm:%s183] %v202
                %v204 = vld [vmem:[%s190 + $0x60] sm:%s183]
                %205 = vst [vmem:[%s191 + $0x30] sm:%s183] %v204
                %v206 = vld [vmem:[%s190 + $0x70] sm:%s183]
                %207 = vst [vmem:[%s191 + $0x38] sm:%s183] %v206
                %v208 = vld [vmem:[%s190 + $0x80] sm:%s183]
                %209 = vst [vmem:[%s191 + $0x40] sm:%s183] %v208
                %v210 = vld [vmem:[%s190 + $0x90] sm:%s183]
                %211 = vst [vmem:[%s191 + $0x48] sm:%s183] %v210
                %v212 = vld [vmem:[%s190 + $0xa0] sm:%s183]
                %213 = vst [vmem:[%s191 + $0x50] sm:%s183] %v212
                %v214 = vld [vmem:[%s190 + $0xb0] sm:%s183]
                %215 = vst [vmem:[%s191 + $0x58] sm:%s183] %v214
                %v216 = vld [vmem:[%s190 + $0xc0] sm:%s183]
                %217 = vst [vmem:[%s191 + $0x60] sm:%s183] %v216
                %v218 = vld [vmem:[%s190 + $0xd0] sm:%s183]
                %219 = vst [vmem:[%s191 + $0x68] sm:%s183] %v218
                %v220 = vld [vmem:[%s190 + $0xe0] sm:%s183]
                %221 = vst [vmem:[%s191 + $0x70] sm:%s183] %v220
                %v222 = vld [vmem:[%s190 + $0xf0] sm:%s183]
                %223 = vst [vmem:[%s191 + $0x78] sm:%s183] %v222
                %v224 = vld [vmem:[%s190 + $0x100] sm:%s183]
                %225 = vst [vmem:[%s191 + $0x80] sm:%s183] %v224
                %v226 = vld [vmem:[%s190 + $0x110] sm:%s183]
                %227 = vst [vmem:[%s191 + $0x88] sm:%s183] %v226
                %v228 = vld [vmem:[%s190 + $0x120] sm:%s183]
                %229 = vst [vmem:[%s191 + $0x90] sm:%s183] %v228
                %v230 = vld [vmem:[%s190 + $0x130] sm:%s183]
                %231 = vst [vmem:[%s191 + $0x98] sm:%s183] %v230
                %v232 = vld [vmem:[%s190 + $0x140] sm:%s183]
                %233 = vst [vmem:[%s191 + $0xa0] sm:%s183] %v232
                %v234 = vld [vmem:[%s190 + $0x150] sm:%s183]
                %235 = vst [vmem:[%s191 + $0xa8] sm:%s183] %v234
                %v236 = vld [vmem:[%s190 + $0x160] sm:%s183]
                %237 = vst [vmem:[%s191 + $0xb0] sm:%s183] %v236
                %v238 = vld [vmem:[%s190 + $0x170] sm:%s183]
                %239 = vst [vmem:[%s191 + $0xb8] sm:%s183] %v238
                %v240 = vld [vmem:[%s190 + $0x180] sm:%s183]
                %241 = vst [vmem:[%s191 + $0xc0] sm:%s183] %v240
                %v242 = vld [vmem:[%s190 + $0x190] sm:%s183]
                %243 = vst [vmem:[%s191 + $0xc8] sm:%s183] %v242
                %v244 = vld [vmem:[%s190 + $0x1a0] sm:%s183]
                %245 = vst [vmem:[%s191 + $0xd0] sm:%s183] %v244
                %v246 = vld [vmem:[%s190 + $0x1b0] sm:%s183]
                %247 = vst [vmem:[%s191 + $0xd8] sm:%s183] %v246
                %v248 = vld [vmem:[%s190 + $0x1c0] sm:%s183]
                %249 = vst [vmem:[%s191 + $0xe0] sm:%s183] %v248
                %v250 = vld [vmem:[%s190 + $0x1d0] sm:%s183]
                %251 = vst [vmem:[%s191 + $0xe8] sm:%s183] %v250
                %v252 = vld [vmem:[%s190 + $0x1e0] sm:%s183]
                %253 = vst [vmem:[%s191 + $0xf0] sm:%s183] %v252
                %v254 = vld [vmem:[%s190 + $0x1f0] sm:%s183]
                %255 = vst [vmem:[%s191 + $0xf8] sm:%s183] %v254
              $region45: #{gcn_forward.5} parent=39 // loop_footer
                %s189 = sadd.s32 1, %s185
              $region46: #{gcn_forward.5} parent=39 // loop_footer_branch
                %184 = sbr.rel target = $region42
              $region47: #{gcn_forward.5} parent=39 // loop_exit
                _
            $region40: #{gcn_forward.5} parent=31 // pred_fallthru
              _
          $region32: #{gcn_forward.5} parent=27 // pred_fallthru
            _
          %332 = vnop
        $region28: #{gcn_forward.5} parent=23 // pred_fallthru
          _
      $region24: #{gcn_forward.5} parent=5 // pred_fallthru
        _
      %p333 = scmp.le.s32.totalorder 1, %s21
      %p334 = scmp.lt.s32.totalorder %s21, 5
      %p335 = pnand %p333, %p334
      %p336 = pneg %p335
      // Predicated region
      $region63: #{gcn_forward.5} parent=5 // pred_check
        _
      $region64: #{gcn_forward.5} parent=5 // pred_check_branch
        %338 = sbr.rel (%p335) target = $region66
      $region65: #{gcn_forward.5} parent=5 // pred_region
        %s339 = ssub.s32 %s21, 1
        %s340 = sand.u32 %s54, 1
        %s341 = sand.u32 %s54, 1
        %s342 = smul.addr %s341, 256
        %s343 = scalar_lea.vmem [#allocation6], %s342
        // Predicated region
        $region67: #{gcn_forward.5} parent=65 // pred_check
          %p344 = pneg %p67
        $region68: #{gcn_forward.5} parent=65 // pred_check_branch
          %346 = sbr.rel (%p344) target = $region70
        $region69: #{gcn_forward.5} parent=65 // pred_region
          _
        $region70: #{gcn_forward.5} parent=65 // pred_fallthru
          _
        %s347 = sand.u32 %s54, 1
        %s348 = sand.u32 %s54, 1
        %s349 = smul.addr %s348, 256
        %s350 = scalar_lea.vmem [#allocation6], %s349
        %p351 = pneg %p67
        %p352 = pneg %p64
        %p353 = pneg %p88
        %p354 = pneg %p85
        %p355 = pneg %p109
        %p356 = pneg %p106
        %p357 = pneg %p135
        %p358 = pneg %p132
        %s359 = smul.u32 32, %s30
        %p360 = scmp.lt.s32.totalorder %s359, 63
        %s361 = scalar_select %p360, %s359, 63
        %s362 = smul.addr %s361, 8
        %s363 = scalar_lea.vmem %s5, %s362
        %s364 = smul.u32 %s30, 2
        %s365 = sadd.s32 %s364, %s31
        %s366 = sld [smem:[#allocation4 + %s365]]
        %s367 = smul.u32 32, %s30
        %s368 = smul.u32 2, %s366
        %s369 = smul.u32 32, %s30
        %p370 = scmp.lt.s32.totalorder %s369, 63
        %s371 = scalar_select %p370, %s369, 63
        %s372 = smul.addr %s371, 8
        %s373 = scalar_lea.vmem %s5, %s372
        %s374 = smul.u32 32, %s30
        %p376 = scmp.eq.s32.totalorder %s31, 0
        // Predicated region
        $region71: #{gcn_forward.5} parent=65 // pred_check
          %p377 = pneg %p376
        $region72: #{gcn_forward.5} parent=65 // pred_check_branch
          %379 = sbr.rel (%p377) target = $region74
        $region73: #{gcn_forward.5} parent=65 // pred_region
          %380 = vst [vmem:[#allocation2] sm:$0xff] 0.0
          %381 = vst [vmem:[#allocation2 + $0x8] sm:$0xff] 0.0
          %382 = vst [vmem:[#allocation2 + $0x10] sm:$0xff] 0.0
          %383 = vst [vmem:[#allocation2 + $0x18] sm:$0xff] 0.0
          %384 = vst [vmem:[#allocation2 + $0x20] sm:$0xff] 0.0
          %385 = vst [vmem:[#allocation2 + $0x28] sm:$0xff] 0.0
          %386 = vst [vmem:[#allocation2 + $0x30] sm:$0xff] 0.0
          %387 = vst [vmem:[#allocation2 + $0x38] sm:$0xff] 0.0
          %388 = vst [vmem:[#allocation2 + $0x40] sm:$0xff] 0.0
          %389 = vst [vmem:[#allocation2 + $0x48] sm:$0xff] 0.0
          %390 = vst [vmem:[#allocation2 + $0x50] sm:$0xff] 0.0
          %391 = vst [vmem:[#allocation2 + $0x58] sm:$0xff] 0.0
          %392 = vst [vmem:[#allocation2 + $0x60] sm:$0xff] 0.0
          %393 = vst [vmem:[#allocation2 + $0x68] sm:$0xff] 0.0
          %394 = vst [vmem:[#allocation2 + $0x70] sm:$0xff] 0.0
          %395 = vst [vmem:[#allocation2 + $0x78] sm:$0xff] 0.0
          %396 = vst [vmem:[#allocation2 + $0x80] sm:$0xff] 0.0
          %397 = vst [vmem:[#allocation2 + $0x88] sm:$0xff] 0.0
          %398 = vst [vmem:[#allocation2 + $0x90] sm:$0xff] 0.0
          %399 = vst [vmem:[#allocation2 + $0x98] sm:$0xff] 0.0
          %400 = vst [vmem:[#allocation2 + $0xa0] sm:$0xff] 0.0
          %401 = vst [vmem:[#allocation2 + $0xa8] sm:$0xff] 0.0
          %402 = vst [vmem:[#allocation2 + $0xb0] sm:$0xff] 0.0
          %403 = vst [vmem:[#allocation2 + $0xb8] sm:$0xff] 0.0
          %404 = vst [vmem:[#allocation2 + $0xc0] sm:$0xff] 0.0
          %405 = vst [vmem:[#allocation2 + $0xc8] sm:$0xff] 0.0
          %406 = vst [vmem:[#allocation2 + $0xd0] sm:$0xff] 0.0
          %407 = vst [vmem:[#allocation2 + $0xd8] sm:$0xff] 0.0
          %408 = vst [vmem:[#allocation2 + $0xe0] sm:$0xff] 0.0
          %409 = vst [vmem:[#allocation2 + $0xe8] sm:$0xff] 0.0
          %410 = vst [vmem:[#allocation2 + $0xf0] sm:$0xff] 0.0
          %411 = vst [vmem:[#allocation2 + $0xf8] sm:$0xff] 0.0
        $region74: #{gcn_forward.5} parent=65 // pred_fallthru
          _
        %s412 = sld [smem:[#allocation5 + %s30]]
        %p413 = scmp.lt.s32.totalorder %s31, %s412
        // Predicated region
        $region75: #{gcn_forward.5} parent=65 // pred_check
          %p414 = pneg %p413
        $region76: #{gcn_forward.5} parent=65 // pred_check_branch
          %416 = sbr.rel (%p414) target = $region78
        $region77: #{gcn_forward.5} parent=65 // pred_region
          %s417 = smul.u32 %s30, 2
          %s418 = sadd.s32 %s417, %s31
          %s419 = sld [smem:[#allocation4 + %s418]]
          %s420 = smul.u32 %s419, 256
          %s421 = sshra.s32 %s420, 3
          %s422 = sand.u32 %s420, 7
          %s423 = smul.addr %s421, 4
          %s424 = scalar_lea.vmem %s3, %s423
          %v425 = vld [vmem:[%s424] sm:$0xf]
          %v426 = vld [vmem:[%s424 + $0x4] sm:$0xf]
          %v427 = vld [vmem:[%s424 + $0x8] sm:$0xf]
          %v428 = vld [vmem:[%s424 + $0xc] sm:$0xf]
          %v429 = vld [vmem:[%s424 + $0x10] sm:$0xf]
          %v430 = vld [vmem:[%s424 + $0x14] sm:$0xf]
          %v431 = vld [vmem:[%s424 + $0x18] sm:$0xf]
          %v432 = vld [vmem:[%s424 + $0x1c] sm:$0xf]
          %v433 = vld [vmem:[%s424 + $0x20] sm:$0xf]
          %v434 = vld [vmem:[%s424 + $0x24] sm:$0xf]
          %v435 = vld [vmem:[%s424 + $0x28] sm:$0xf]
          %v436 = vld [vmem:[%s424 + $0x2c] sm:$0xf]
          %v437 = vld [vmem:[%s424 + $0x30] sm:$0xf]
          %v438 = vld [vmem:[%s424 + $0x34] sm:$0xf]
          %v439 = vld [vmem:[%s424 + $0x38] sm:$0xf]
          %v440 = vld [vmem:[%s424 + $0x3c] sm:$0xf]
          %v441 = vld [vmem:[%s424 + $0x40] sm:$0xf]
          %v442 = vld [vmem:[%s424 + $0x44] sm:$0xf]
          %v443 = vld [vmem:[%s424 + $0x48] sm:$0xf]
          %v444 = vld [vmem:[%s424 + $0x4c] sm:$0xf]
          %v445 = vld [vmem:[%s424 + $0x50] sm:$0xf]
          %v446 = vld [vmem:[%s424 + $0x54] sm:$0xf]
          %v447 = vld [vmem:[%s424 + $0x58] sm:$0xf]
          %v448 = vld [vmem:[%s424 + $0x5c] sm:$0xf]
          %v449 = vld [vmem:[%s424 + $0x60] sm:$0xf]
          %v450 = vld [vmem:[%s424 + $0x64] sm:$0xf]
          %v451 = vld [vmem:[%s424 + $0x68] sm:$0xf]
          %v452 = vld [vmem:[%s424 + $0x6c] sm:$0xf]
          %v453 = vld [vmem:[%s424 + $0x70] sm:$0xf]
          %v454 = vld [vmem:[%s424 + $0x74] sm:$0xf]
          %v455 = vld [vmem:[%s424 + $0x78] sm:$0xf]
          %v456 = vld [vmem:[%s424 + $0x7c] sm:$0xf]
          %v457 = vld [vmem:[#allocation2] sm:$0xff]
          %v458 = vld [vmem:[#allocation2 + $0x8] sm:$0xff]
          %v459 = vld [vmem:[#allocation2 + $0x10] sm:$0xff]
          %v460 = vld [vmem:[#allocation2 + $0x18] sm:$0xff]
          %v461 = vld [vmem:[#allocation2 + $0x20] sm:$0xff]
          %v462 = vld [vmem:[#allocation2 + $0x28] sm:$0xff]
          %v463 = vld [vmem:[#allocation2 + $0x30] sm:$0xff]
          %v464 = vld [vmem:[#allocation2 + $0x38] sm:$0xff]
          %v465 = vld [vmem:[#allocation2 + $0x40] sm:$0xff]
          %v466 = vld [vmem:[#allocation2 + $0x48] sm:$0xff]
          %v467 = vld [vmem:[#allocation2 + $0x50] sm:$0xff]
          %v468 = vld [vmem:[#allocation2 + $0x58] sm:$0xff]
          %v469 = vld [vmem:[#allocation2 + $0x60] sm:$0xff]
          %v470 = vld [vmem:[#allocation2 + $0x68] sm:$0xff]
          %v471 = vld [vmem:[#allocation2 + $0x70] sm:$0xff]
          %v472 = vld [vmem:[#allocation2 + $0x78] sm:$0xff]
          %v473 = vld [vmem:[#allocation2 + $0x80] sm:$0xff]
          %v474 = vld [vmem:[#allocation2 + $0x88] sm:$0xff]
          %v475 = vld [vmem:[#allocation2 + $0x90] sm:$0xff]
          %v476 = vld [vmem:[#allocation2 + $0x98] sm:$0xff]
          %v477 = vld [vmem:[#allocation2 + $0xa0] sm:$0xff]
          %v478 = vld [vmem:[#allocation2 + $0xa8] sm:$0xff]
          %v479 = vld [vmem:[#allocation2 + $0xb0] sm:$0xff]
          %v480 = vld [vmem:[#allocation2 + $0xb8] sm:$0xff]
          %v481 = vld [vmem:[#allocation2 + $0xc0] sm:$0xff]
          %v482 = vld [vmem:[#allocation2 + $0xc8] sm:$0xff]
          %v483 = vld [vmem:[#allocation2 + $0xd0] sm:$0xff]
          %v484 = vld [vmem:[#allocation2 + $0xd8] sm:$0xff]
          %v485 = vld [vmem:[#allocation2 + $0xe0] sm:$0xff]
          %v486 = vld [vmem:[#allocation2 + $0xe8] sm:$0xff]
          %v487 = vld [vmem:[#allocation2 + $0xf0] sm:$0xff]
          %v488 = vld [vmem:[#allocation2 + $0xf8] sm:$0xff]
          %v489 = vld [vmem:[%s343] sm:$0xff]
          %v490 = vld [vmem:[%s343 + $0x8] sm:$0xff]
          %v491 = vld [vmem:[%s343 + $0x10] sm:$0xff]
          %v492 = vld [vmem:[%s343 + $0x18] sm:$0xff]
          %v493 = vld [vmem:[%s343 + $0x20] sm:$0xff]
          %v494 = vld [vmem:[%s343 + $0x28] sm:$0xff]
          %v495 = vld [vmem:[%s343 + $0x30] sm:$0xff]
          %v496 = vld [vmem:[%s343 + $0x38] sm:$0xff]
          %v497 = vld [vmem:[%s343 + $0x40] sm:$0xff]
          %v498 = vld [vmem:[%s343 + $0x48] sm:$0xff]
          %v499 = vld [vmem:[%s343 + $0x50] sm:$0xff]
          %v500 = vld [vmem:[%s343 + $0x58] sm:$0xff]
          %v501 = vld [vmem:[%s343 + $0x60] sm:$0xff]
          %v502 = vld [vmem:[%s343 + $0x68] sm:$0xff]
          %v503 = vld [vmem:[%s343 + $0x70] sm:$0xff]
          %v504 = vld [vmem:[%s343 + $0x78] sm:$0xff]
          %v505 = vld [vmem:[%s343 + $0x80] sm:$0xff]
          %v506 = vld [vmem:[%s343 + $0x88] sm:$0xff]
          %v507 = vld [vmem:[%s343 + $0x90] sm:$0xff]
          %v508 = vld [vmem:[%s343 + $0x98] sm:$0xff]
          %v509 = vld [vmem:[%s343 + $0xa0] sm:$0xff]
          %v510 = vld [vmem:[%s343 + $0xa8] sm:$0xff]
          %v511 = vld [vmem:[%s343 + $0xb0] sm:$0xff]
          %v512 = vld [vmem:[%s343 + $0xb8] sm:$0xff]
          %v513 = vld [vmem:[%s343 + $0xc0] sm:$0xff]
          %v514 = vld [vmem:[%s343 + $0xc8] sm:$0xff]
          %v515 = vld [vmem:[%s343 + $0xd0] sm:$0xff]
          %v516 = vld [vmem:[%s343 + $0xd8] sm:$0xff]
          %v517 = vld [vmem:[%s343 + $0xe0] sm:$0xff]
          %v518 = vld [vmem:[%s343 + $0xe8] sm:$0xff]
          %v519 = vld [vmem:[%s343 + $0xf0] sm:$0xff]
          %v520 = vld [vmem:[%s343 + $0xf8] sm:$0xff]
          %v553 = vunpack.c.l.b16 %v489
          %v554 = vunpack.c.h.b16 %v489
          %v555 = vunpack.c.l.b16 %v490
          %v556 = vunpack.c.h.b16 %v490
          %v557 = vunpack.c.l.b16 %v491
          %v558 = vunpack.c.h.b16 %v491
          %v559 = vunpack.c.l.b16 %v492
          %v560 = vunpack.c.h.b16 %v492
          %v561 = vunpack.c.l.b16 %v493
          %v562 = vunpack.c.h.b16 %v493
          %v563 = vunpack.c.l.b16 %v494
          %v564 = vunpack.c.h.b16 %v494
          %v565 = vunpack.c.l.b16 %v495
          %v566 = vunpack.c.h.b16 %v495
          %v567 = vunpack.c.l.b16 %v496
          %v568 = vunpack.c.h.b16 %v496
          %v569 = vunpack.c.l.b16 %v497
          %v570 = vunpack.c.h.b16 %v497
          %v571 = vunpack.c.l.b16 %v498
          %v572 = vunpack.c.h.b16 %v498
          %v573 = vunpack.c.l.b16 %v499
          %v574 = vunpack.c.h.b16 %v499
          %v575 = vunpack.c.l.b16 %v500
          %v576 = vunpack.c.h.b16 %v500
          %v577 = vunpack.c.l.b16 %v501
          %v578 = vunpack.c.h.b16 %v501
          %v579 = vunpack.c.l.b16 %v502
          %v580 = vunpack.c.h.b16 %v502
          %v581 = vunpack.c.l.b16 %v503
          %v582 = vunpack.c.h.b16 %v503
          %v583 = vunpack.c.l.b16 %v504
          %v584 = vunpack.c.h.b16 %v504
          %v585 = vunpack.c.l.b16 %v505
          %v586 = vunpack.c.h.b16 %v505
          %v587 = vunpack.c.l.b16 %v506
          %v588 = vunpack.c.h.b16 %v506
          %v589 = vunpack.c.l.b16 %v507
          %v590 = vunpack.c.h.b16 %v507
          %v591 = vunpack.c.l.b16 %v508
          %v592 = vunpack.c.h.b16 %v508
          %v593 = vunpack.c.l.b16 %v509
          %v594 = vunpack.c.h.b16 %v509
          %v595 = vunpack.c.l.b16 %v510
          %v596 = vunpack.c.h.b16 %v510
          %v597 = vunpack.c.l.b16 %v511
          %v598 = vunpack.c.h.b16 %v511
          %v599 = vunpack.c.l.b16 %v512
          %v600 = vunpack.c.h.b16 %v512
          %v601 = vunpack.c.l.b16 %v513
          %v602 = vunpack.c.h.b16 %v513
          %v603 = vunpack.c.l.b16 %v514
          %v604 = vunpack.c.h.b16 %v514
          %v605 = vunpack.c.l.b16 %v515
          %v606 = vunpack.c.h.b16 %v515
          %v607 = vunpack.c.l.b16 %v516
          %v608 = vunpack.c.h.b16 %v516
          %v609 = vunpack.c.l.b16 %v517
          %v610 = vunpack.c.h.b16 %v517
          %v611 = vunpack.c.l.b16 %v518
          %v612 = vunpack.c.h.b16 %v518
          %v613 = vunpack.c.l.b16 %v519
          %v614 = vunpack.c.h.b16 %v519
          %v615 = vunpack.c.l.b16 %v520
          %v616 = vunpack.c.h.b16 %v520
          %v617 = vpack.c.b16 %v555, %v553
          %v618 = vpack.c.b16 %v556, %v554
          %v619 = vpack.c.b16 %v559, %v557
          %v620 = vpack.c.b16 %v560, %v558
          %v621 = vpack.c.b16 %v563, %v561
          %v622 = vpack.c.b16 %v564, %v562
          %v623 = vpack.c.b16 %v567, %v565
          %v624 = vpack.c.b16 %v568, %v566
          %v625 = vpack.c.b16 %v571, %v569
          %v626 = vpack.c.b16 %v572, %v570
          %v627 = vpack.c.b16 %v575, %v573
          %v628 = vpack.c.b16 %v576, %v574
          %v629 = vpack.c.b16 %v579, %v577
          %v630 = vpack.c.b16 %v580, %v578
          %v631 = vpack.c.b16 %v583, %v581
          %v632 = vpack.c.b16 %v584, %v582
          %v633 = vpack.c.b16 %v587, %v585
          %v634 = vpack.c.b16 %v588, %v586
          %v635 = vpack.c.b16 %v591, %v589
          %v636 = vpack.c.b16 %v592, %v590
          %v637 = vpack.c.b16 %v595, %v593
          %v638 = vpack.c.b16 %v596, %v594
          %v639 = vpack.c.b16 %v599, %v597
          %v640 = vpack.c.b16 %v600, %v598
          %v641 = vpack.c.b16 %v603, %v601
          %v642 = vpack.c.b16 %v604, %v602
          %v643 = vpack.c.b16 %v607, %v605
          %v644 = vpack.c.b16 %v608, %v606
          %v645 = vpack.c.b16 %v611, %v609
          %v646 = vpack.c.b16 %v612, %v610
          %v647 = vpack.c.b16 %v615, %v613
          %v648 = vpack.c.b16 %v616, %v614
          %v713 = vunpack.c.l.b16 %v425
          %v714 = vunpack.c.l.b16 %v426
          %v715 = vunpack.c.l.b16 %v427
          %v716 = vunpack.c.l.b16 %v428
          %v717 = vunpack.c.l.b16 %v429
          %v718 = vunpack.c.l.b16 %v430
          %v719 = vunpack.c.l.b16 %v431
          %v720 = vunpack.c.l.b16 %v432
          %v721 = vunpack.c.l.b16 %v433
          %v722 = vunpack.c.l.b16 %v434
          %v723 = vunpack.c.l.b16 %v435
          %v724 = vunpack.c.l.b16 %v436
          %v725 = vunpack.c.l.b16 %v437
          %v726 = vunpack.c.l.b16 %v438
          %v727 = vunpack.c.l.b16 %v439
          %v728 = vunpack.c.l.b16 %v440
          %v729 = vunpack.c.l.b16 %v441
          %v730 = vunpack.c.l.b16 %v442
          %v731 = vunpack.c.l.b16 %v443
          %v732 = vunpack.c.l.b16 %v444
          %v733 = vunpack.c.l.b16 %v445
          %v734 = vunpack.c.l.b16 %v446
          %v735 = vunpack.c.l.b16 %v447
          %v736 = vunpack.c.l.b16 %v448
          %v737 = vunpack.c.l.b16 %v449
          %v738 = vunpack.c.l.b16 %v450
          %v739 = vunpack.c.l.b16 %v451
          %v740 = vunpack.c.l.b16 %v452
          %v741 = vunpack.c.l.b16 %v453
          %v742 = vunpack.c.l.b16 %v454
          %v743 = vunpack.c.l.b16 %v455
          %v744 = vunpack.c.l.b16 %v456
          %v745 = vpack.c.b16 %v714, %v713
          %v746 = vpack.c.b16 %v716, %v715
          %v747 = vpack.c.b16 %v718, %v717
          %v748 = vpack.c.b16 %v720, %v719
          %v749 = vpack.c.b16 %v722, %v721
          %v750 = vpack.c.b16 %v724, %v723
          %v751 = vpack.c.b16 %v726, %v725
          %v752 = vpack.c.b16 %v728, %v727
          %v753 = vpack.c.b16 %v730, %v729
          %v754 = vpack.c.b16 %v732, %v731
          %v755 = vpack.c.b16 %v734, %v733
          %v756 = vpack.c.b16 %v736, %v735
          %v757 = vpack.c.b16 %v738, %v737
          %v758 = vpack.c.b16 %v740, %v739
          %v759 = vpack.c.b16 %v742, %v741
          %v760 = vpack.c.b16 %v744, %v743
          %777 = vmatprep.subr.bf16.mxu0 0
          %778 = vmatpush1.bf16.msra.mxu0 %v752
          %779 = vmatprep.subr.bf16.mxu0 0
          %780 = vmatpush1.bf16.msra.mxu0 %v751
          %781 = vmatprep.subr.bf16.mxu0 0
          %782 = vmatpush1.bf16.msra.mxu0 %v750
          %783 = vmatprep.subr.bf16.mxu0 0
          %784 = vmatpush1.bf16.msra.mxu0 %v749
          %785 = vmatprep.subr.bf16.mxu0 0
          %786 = vmatpush1.bf16.msra.mxu0 %v748
          %787 = vmatprep.subr.bf16.mxu0 0
          %788 = vmatpush1.bf16.msra.mxu0 %v747
          %789 = vmatprep.subr.bf16.mxu0 0
          %790 = vmatpush1.bf16.msra.mxu0 %v746
          %791 = vmatprep.subr.bf16.mxu0 0
          %792 = vmatpush1.bf16.msra.mxu0 %v745
          %793 = vmatprep.subr.bf16.mxu0 0
          %794 = vmatpush2.bf16.msra.mxu0 %v760
          %795 = vmatprep.subr.bf16.mxu0 0
          %796 = vmatpush2.bf16.msra.mxu0 %v759
          %797 = vmatprep.subr.bf16.mxu0 0
          %798 = vmatpush2.bf16.msra.mxu0 %v758
          %799 = vmatprep.subr.bf16.mxu0 0
          %800 = vmatpush2.bf16.msra.mxu0 %v757
          %801 = vmatprep.subr.bf16.mxu0 0
          %802 = vmatpush2.bf16.msra.mxu0 %v756
          %803 = vmatprep.subr.bf16.mxu0 0
          %804 = vmatpush2.bf16.msra.mxu0 %v755
          %805 = vmatprep.subr.bf16.mxu0 0
          %806 = vmatpush2.bf16.msra.mxu0 %v754
          %807 = vmatprep.subr.bf16.mxu0 0
          %808 = vmatpush2.bf16.msra.mxu0 %v753
          %809 = vmatprep.mubr.bf16.mxu0 %v618
          %810 = vmatmul.mubr.bf16.gmra.mxu0 %v617
          %v811 = vpop.f32.mrf.mxu0
          %v812 = vadd.f32 0.0, %v811
          %v813 = vpop.f32.mrf.mxu0
          %v814 = vpop.f32.mrf.mxu0
          %v815 = vadd.f32 0.0, %v814
          %v816 = vpop.f32.mrf.mxu0
          %817 = vmatprep.mubr.bf16.mxu0 %v620
          %818 = vmatmul.mubr.bf16.gmra.mxu0 %v619
          %v819 = vpop.f32.mrf.mxu0
          %v820 = vadd.f32 0.0, %v819
          %v821 = vpop.f32.mrf.mxu0
          %v822 = vpop.f32.mrf.mxu0
          %v823 = vadd.f32 0.0, %v822
          %v824 = vpop.f32.mrf.mxu0
          %825 = vmatprep.mubr.bf16.mxu0 %v622
          %826 = vmatmul.mubr.bf16.gmra.mxu0 %v621
          %v827 = vpop.f32.mrf.mxu0
          %v828 = vadd.f32 0.0, %v827
          %v829 = vpop.f32.mrf.mxu0
          %v830 = vpop.f32.mrf.mxu0
          %v831 = vadd.f32 0.0, %v830
          %v832 = vpop.f32.mrf.mxu0
          %833 = vmatprep.mubr.bf16.mxu0 %v624
          %834 = vmatmul.mubr.bf16.gmra.mxu0 %v623
          %v835 = vpop.f32.mrf.mxu0
          %v836 = vadd.f32 0.0, %v835
          %v837 = vpop.f32.mrf.mxu0
          %v838 = vpop.f32.mrf.mxu0
          %v839 = vadd.f32 0.0, %v838
          %v840 = vpop.f32.mrf.mxu0
          %841 = vmatprep.mubr.bf16.mxu0 %v626
          %842 = vmatmul.mubr.bf16.gmra.mxu0 %v625
          %v843 = vpop.f32.mrf.mxu0
          %v844 = vadd.f32 0.0, %v843
          %v845 = vpop.f32.mrf.mxu0
          %v846 = vpop.f32.mrf.mxu0
          %v847 = vadd.f32 0.0, %v846
          %v848 = vpop.f32.mrf.mxu0
          %849 = vmatprep.mubr.bf16.mxu0 %v628
          %850 = vmatmul.mubr.bf16.gmra.mxu0 %v627
          %v851 = vpop.f32.mrf.mxu0
          %v852 = vadd.f32 0.0, %v851
          %v853 = vpop.f32.mrf.mxu0
          %v854 = vpop.f32.mrf.mxu0
          %v855 = vadd.f32 0.0, %v854
          %v856 = vpop.f32.mrf.mxu0
          %857 = vmatprep.mubr.bf16.mxu0 %v630
          %858 = vmatmul.mubr.bf16.gmra.mxu0 %v629
          %v859 = vpop.f32.mrf.mxu0
          %v860 = vadd.f32 0.0, %v859
          %v861 = vpop.f32.mrf.mxu0
          %v862 = vpop.f32.mrf.mxu0
          %v863 = vadd.f32 0.0, %v862
          %v864 = vpop.f32.mrf.mxu0
          %865 = vmatprep.mubr.bf16.mxu0 %v632
          %866 = vmatmul.mubr.bf16.gmra.mxu0 %v631
          %v867 = vpop.f32.mrf.mxu0
          %v868 = vadd.f32 0.0, %v867
          %v869 = vpop.f32.mrf.mxu0
          %v870 = vpop.f32.mrf.mxu0
          %v871 = vadd.f32 0.0, %v870
          %v872 = vpop.f32.mrf.mxu0
          %873 = vmatprep.mubr.bf16.mxu0 %v634
          %874 = vmatmul.mubr.bf16.gmra.mxu0 %v633
          %v875 = vpop.f32.mrf.mxu0
          %v876 = vadd.f32 0.0, %v875
          %v877 = vpop.f32.mrf.mxu0
          %v878 = vpop.f32.mrf.mxu0
          %v879 = vadd.f32 0.0, %v878
          %v880 = vpop.f32.mrf.mxu0
          %881 = vmatprep.mubr.bf16.mxu0 %v636
          %882 = vmatmul.mubr.bf16.gmra.mxu0 %v635
          %v883 = vpop.f32.mrf.mxu0
          %v884 = vadd.f32 0.0, %v883
          %v885 = vpop.f32.mrf.mxu0
          %v886 = vpop.f32.mrf.mxu0
          %v887 = vadd.f32 0.0, %v886
          %v888 = vpop.f32.mrf.mxu0
          %889 = vmatprep.mubr.bf16.mxu0 %v638
          %890 = vmatmul.mubr.bf16.gmra.mxu0 %v637
          %v891 = vpop.f32.mrf.mxu0
          %v892 = vadd.f32 0.0, %v891
          %v893 = vpop.f32.mrf.mxu0
          %v894 = vpop.f32.mrf.mxu0
          %v895 = vadd.f32 0.0, %v894
          %v896 = vpop.f32.mrf.mxu0
          %897 = vmatprep.mubr.bf16.mxu0 %v640
          %898 = vmatmul.mubr.bf16.gmra.mxu0 %v639
          %v899 = vpop.f32.mrf.mxu0
          %v900 = vadd.f32 0.0, %v899
          %v901 = vpop.f32.mrf.mxu0
          %v902 = vpop.f32.mrf.mxu0
          %v903 = vadd.f32 0.0, %v902
          %v904 = vpop.f32.mrf.mxu0
          %905 = vmatprep.mubr.bf16.mxu0 %v642
          %906 = vmatmul.mubr.bf16.gmra.mxu0 %v641
          %v907 = vpop.f32.mrf.mxu0
          %v908 = vadd.f32 0.0, %v907
          %v909 = vpop.f32.mrf.mxu0
          %v910 = vpop.f32.mrf.mxu0
          %v911 = vadd.f32 0.0, %v910
          %v912 = vpop.f32.mrf.mxu0
          %913 = vmatprep.mubr.bf16.mxu0 %v644
          %914 = vmatmul.mubr.bf16.gmra.mxu0 %v643
          %v915 = vpop.f32.mrf.mxu0
          %v916 = vadd.f32 0.0, %v915
          %v917 = vpop.f32.mrf.mxu0
          %v918 = vpop.f32.mrf.mxu0
          %v919 = vadd.f32 0.0, %v918
          %v920 = vpop.f32.mrf.mxu0
          %921 = vmatprep.mubr.bf16.mxu0 %v646
          %922 = vmatmul.mubr.bf16.gmra.mxu0 %v645
          %v923 = vpop.f32.mrf.mxu0
          %v924 = vadd.f32 0.0, %v923
          %v925 = vpop.f32.mrf.mxu0
          %v926 = vpop.f32.mrf.mxu0
          %v927 = vadd.f32 0.0, %v926
          %v928 = vpop.f32.mrf.mxu0
          %929 = vmatprep.mubr.bf16.mxu0 %v648
          %930 = vmatmul.mubr.bf16.gmra.mxu0 %v647
          %v931 = vpop.f32.mrf.mxu0
          %v932 = vadd.f32 0.0, %v931
          %v933 = vpop.f32.mrf.mxu0
          %v934 = vpop.f32.mrf.mxu0
          %v935 = vadd.f32 0.0, %v934
          %v936 = vpop.f32.mrf.mxu0
          %937 = vdwg.mxu0
          %v938 = vadd.f32 %v457, %v812
          %v939 = vadd.f32 %v458, %v815
          %v940 = vadd.f32 %v459, %v820
          %v941 = vadd.f32 %v460, %v823
          %v942 = vadd.f32 %v461, %v828
          %v943 = vadd.f32 %v462, %v831
          %v944 = vadd.f32 %v463, %v836
          %v945 = vadd.f32 %v464, %v839
          %v946 = vadd.f32 %v465, %v844
          %v947 = vadd.f32 %v466, %v847
          %v948 = vadd.f32 %v467, %v852
          %v949 = vadd.f32 %v468, %v855
          %v950 = vadd.f32 %v469, %v860
          %v951 = vadd.f32 %v470, %v863
          %v952 = vadd.f32 %v471, %v868
          %v953 = vadd.f32 %v472, %v871
          %v954 = vadd.f32 %v473, %v876
          %v955 = vadd.f32 %v474, %v879
          %v956 = vadd.f32 %v475, %v884
          %v957 = vadd.f32 %v476, %v887
          %v958 = vadd.f32 %v477, %v892
          %v959 = vadd.f32 %v478, %v895
          %v960 = vadd.f32 %v479, %v900
          %v961 = vadd.f32 %v480, %v903
          %v962 = vadd.f32 %v481, %v908
          %v963 = vadd.f32 %v482, %v911
          %v964 = vadd.f32 %v483, %v916
          %v965 = vadd.f32 %v484, %v919
          %v966 = vadd.f32 %v485, %v924
          %v967 = vadd.f32 %v486, %v927
          %v968 = vadd.f32 %v487, %v932
          %v969 = vadd.f32 %v488, %v935
          %970 = vst [vmem:[#allocation2] sm:$0xff] %v938
          %971 = vst [vmem:[#allocation2 + $0x8] sm:$0xff] %v939
          %972 = vst [vmem:[#allocation2 + $0x10] sm:$0xff] %v940
          %973 = vst [vmem:[#allocation2 + $0x18] sm:$0xff] %v941
          %974 = vst [vmem:[#allocation2 + $0x20] sm:$0xff] %v942
          %975 = vst [vmem:[#allocation2 + $0x28] sm:$0xff] %v943
          %976 = vst [vmem:[#allocation2 + $0x30] sm:$0xff] %v944
          %977 = vst [vmem:[#allocation2 + $0x38] sm:$0xff] %v945
          %978 = vst [vmem:[#allocation2 + $0x40] sm:$0xff] %v946
          %979 = vst [vmem:[#allocation2 + $0x48] sm:$0xff] %v947
          %980 = vst [vmem:[#allocation2 + $0x50] sm:$0xff] %v948
          %981 = vst [vmem:[#allocation2 + $0x58] sm:$0xff] %v949
          %982 = vst [vmem:[#allocation2 + $0x60] sm:$0xff] %v950
          %983 = vst [vmem:[#allocation2 + $0x68] sm:$0xff] %v951
          %984 = vst [vmem:[#allocation2 + $0x70] sm:$0xff] %v952
          %985 = vst [vmem:[#allocation2 + $0x78] sm:$0xff] %v953
          %986 = vst [vmem:[#allocation2 + $0x80] sm:$0xff] %v954
          %987 = vst [vmem:[#allocation2 + $0x88] sm:$0xff] %v955
          %988 = vst [vmem:[#allocation2 + $0x90] sm:$0xff] %v956
          %989 = vst [vmem:[#allocation2 + $0x98] sm:$0xff] %v957
          %990 = vst [vmem:[#allocation2 + $0xa0] sm:$0xff] %v958
          %991 = vst [vmem:[#allocation2 + $0xa8] sm:$0xff] %v959
          %992 = vst [vmem:[#allocation2 + $0xb0] sm:$0xff] %v960
          %993 = vst [vmem:[#allocation2 + $0xb8] sm:$0xff] %v961
          %994 = vst [vmem:[#allocation2 + $0xc0] sm:$0xff] %v962
          %995 = vst [vmem:[#allocation2 + $0xc8] sm:$0xff] %v963
          %996 = vst [vmem:[#allocation2 + $0xd0] sm:$0xff] %v964
          %997 = vst [vmem:[#allocation2 + $0xd8] sm:$0xff] %v965
          %998 = vst [vmem:[#allocation2 + $0xe0] sm:$0xff] %v966
          %999 = vst [vmem:[#allocation2 + $0xe8] sm:$0xff] %v967
          %1000 = vst [vmem:[#allocation2 + $0xf0] sm:$0xff] %v968
          %1001 = vst [vmem:[#allocation2 + $0xf8] sm:$0xff] %v969
        $region78: #{gcn_forward.5} parent=65 // pred_fallthru
          _
        %p1002 = scmp.eq.s32.totalorder %s31, 1
        // Predicated region
        $region79: #{gcn_forward.5} parent=65 // pred_check
          %p1003 = pneg %p1002
        $region80: #{gcn_forward.5} parent=65 // pred_check_branch
          %1005 = sbr.rel (%p1003) target = $region82
        $region81: #{gcn_forward.5} parent=65 // pred_region
          %v1006 = vld [vmem:[#allocation2] sm:$0xff]
          %v1007 = vld [vmem:[#allocation2 + $0x8] sm:$0xff]
          %v1008 = vld [vmem:[#allocation2 + $0x10] sm:$0xff]
          %v1009 = vld [vmem:[#allocation2 + $0x18] sm:$0xff]
          %v1010 = vld [vmem:[#allocation2 + $0x20] sm:$0xff]
          %v1011 = vld [vmem:[#allocation2 + $0x28] sm:$0xff]
          %v1012 = vld [vmem:[#allocation2 + $0x30] sm:$0xff]
          %v1013 = vld [vmem:[#allocation2 + $0x38] sm:$0xff]
          %v1014 = vld [vmem:[#allocation2 + $0x40] sm:$0xff]
          %v1015 = vld [vmem:[#allocation2 + $0x48] sm:$0xff]
          %v1016 = vld [vmem:[#allocation2 + $0x50] sm:$0xff]
          %v1017 = vld [vmem:[#allocation2 + $0x58] sm:$0xff]
          %v1018 = vld [vmem:[#allocation2 + $0x60] sm:$0xff]
          %v1019 = vld [vmem:[#allocation2 + $0x68] sm:$0xff]
          %v1020 = vld [vmem:[#allocation2 + $0x70] sm:$0xff]
          %v1021 = vld [vmem:[#allocation2 + $0x78] sm:$0xff]
          %v1022 = vld [vmem:[#allocation2 + $0x80] sm:$0xff]
          %v1023 = vld [vmem:[#allocation2 + $0x88] sm:$0xff]
          %v1024 = vld [vmem:[#allocation2 + $0x90] sm:$0xff]
          %v1025 = vld [vmem:[#allocation2 + $0x98] sm:$0xff]
          %v1026 = vld [vmem:[#allocation2 + $0xa0] sm:$0xff]
          %v1027 = vld [vmem:[#allocation2 + $0xa8] sm:$0xff]
          %v1028 = vld [vmem:[#allocation2 + $0xb0] sm:$0xff]
          %v1029 = vld [vmem:[#allocation2 + $0xb8] sm:$0xff]
          %v1030 = vld [vmem:[#allocation2 + $0xc0] sm:$0xff]
          %v1031 = vld [vmem:[#allocation2 + $0xc8] sm:$0xff]
          %v1032 = vld [vmem:[#allocation2 + $0xd0] sm:$0xff]
          %v1033 = vld [vmem:[#allocation2 + $0xd8] sm:$0xff]
          %v1034 = vld [vmem:[#allocation2 + $0xe0] sm:$0xff]
          %v1035 = vld [vmem:[#allocation2 + $0xe8] sm:$0xff]
          %v1036 = vld [vmem:[#allocation2 + $0xf0] sm:$0xff]
          %v1037 = vld [vmem:[#allocation2 + $0xf8] sm:$0xff]
          %v1038 = vld [vmem:[%s4] sm:$0x1]
          %v1040 = vlaneseq
          %v1041 = vshrl.u32 %v1040, 7
          %v1042 = vsub.s32 0, %v1041
          %v1043 = vrot.slane %v1038, %v1042
          %v1045 = vadd.f32 %v1006, %v1043
          %v1046 = vadd.f32 %v1007, %v1043
          %v1047 = vadd.f32 %v1008, %v1043
          %v1048 = vadd.f32 %v1009, %v1043
          %v1049 = vadd.f32 %v1010, %v1043
          %v1050 = vadd.f32 %v1011, %v1043
          %v1051 = vadd.f32 %v1012, %v1043
          %v1052 = vadd.f32 %v1013, %v1043
          %v1053 = vadd.f32 %v1014, %v1043
          %v1054 = vadd.f32 %v1015, %v1043
          %v1055 = vadd.f32 %v1016, %v1043
          %v1056 = vadd.f32 %v1017, %v1043
          %v1057 = vadd.f32 %v1018, %v1043
          %v1058 = vadd.f32 %v1019, %v1043
          %v1059 = vadd.f32 %v1020, %v1043
          %v1060 = vadd.f32 %v1021, %v1043
          %v1061 = vadd.f32 %v1022, %v1043
          %v1062 = vadd.f32 %v1023, %v1043
          %v1063 = vadd.f32 %v1024, %v1043
          %v1064 = vadd.f32 %v1025, %v1043
          %v1065 = vadd.f32 %v1026, %v1043
          %v1066 = vadd.f32 %v1027, %v1043
          %v1067 = vadd.f32 %v1028, %v1043
          %v1068 = vadd.f32 %v1029, %v1043
          %v1069 = vadd.f32 %v1030, %v1043
          %v1070 = vadd.f32 %v1031, %v1043
          %v1071 = vadd.f32 %v1032, %v1043
          %v1072 = vadd.f32 %v1033, %v1043
          %v1073 = vadd.f32 %v1034, %v1043
          %v1074 = vadd.f32 %v1035, %v1043
          %v1075 = vadd.f32 %v1036, %v1043
          %v1076 = vadd.f32 %v1037, %v1043
          %v1077 = vlaneseq
          %v1078 = vand.u32 %v1077, 127
          %vm1079 = vcmp.lt.s32.totalorder %v1078, 7
          %v1080 = vsel %vm1079, %v1045, -inf
          %v1081 = vsel %vm1079, %v1046, -inf
          %v1082 = vsel %vm1079, %v1047, -inf
          %v1083 = vsel %vm1079, %v1048, -inf
          %v1084 = vsel %vm1079, %v1049, -inf
          %v1085 = vsel %vm1079, %v1050, -inf
          %v1086 = vsel %vm1079, %v1051, -inf
          %v1087 = vsel %vm1079, %v1052, -inf
          %v1088 = vsel %vm1079, %v1053, -inf
          %v1089 = vsel %vm1079, %v1054, -inf
          %v1090 = vsel %vm1079, %v1055, -inf
          %v1091 = vsel %vm1079, %v1056, -inf
          %v1092 = vsel %vm1079, %v1057, -inf
          %v1093 = vsel %vm1079, %v1058, -inf
          %v1094 = vsel %vm1079, %v1059, -inf
          %v1095 = vsel %vm1079, %v1060, -inf
          %v1096 = vsel %vm1079, %v1061, -inf
          %v1097 = vsel %vm1079, %v1062, -inf
          %v1098 = vsel %vm1079, %v1063, -inf
          %v1099 = vsel %vm1079, %v1064, -inf
          %v1100 = vsel %vm1079, %v1065, -inf
          %v1101 = vsel %vm1079, %v1066, -inf
          %v1102 = vsel %vm1079, %v1067, -inf
          %v1103 = vsel %vm1079, %v1068, -inf
          %v1104 = vsel %vm1079, %v1069, -inf
          %v1105 = vsel %vm1079, %v1070, -inf
          %v1106 = vsel %vm1079, %v1071, -inf
          %v1107 = vsel %vm1079, %v1072, -inf
          %v1108 = vsel %vm1079, %v1073, -inf
          %v1109 = vsel %vm1079, %v1074, -inf
          %v1110 = vsel %vm1079, %v1075, -inf
          %v1111 = vsel %vm1079, %v1076, -inf
          %1112 = vmax.xlane.f32.xlu0 %v1080
          %v1113 = vpop.xlane.xlu0 %1112
          %1114 = vmax.xlane.f32.xlu0 %v1081
          %v1115 = vpop.xlane.xlu0 %1114
          %1116 = vmax.xlane.f32.xlu0 %v1082
          %v1117 = vpop.xlane.xlu0 %1116
          %1118 = vmax.xlane.f32.xlu0 %v1083
          %v1119 = vpop.xlane.xlu0 %1118
          %1120 = vmax.xlane.f32.xlu0 %v1084
          %v1121 = vpop.xlane.xlu0 %1120
          %1122 = vmax.xlane.f32.xlu0 %v1085
          %v1123 = vpop.xlane.xlu0 %1122
          %1124 = vmax.xlane.f32.xlu0 %v1086
          %v1125 = vpop.xlane.xlu0 %1124
          %1126 = vmax.xlane.f32.xlu0 %v1087
          %v1127 = vpop.xlane.xlu0 %1126
          %1128 = vmax.xlane.f32.xlu0 %v1088
          %v1129 = vpop.xlane.xlu0 %1128
          %1130 = vmax.xlane.f32.xlu0 %v1089
          %v1131 = vpop.xlane.xlu0 %1130
          %1132 = vmax.xlane.f32.xlu0 %v1090
          %v1133 = vpop.xlane.xlu0 %1132
          %1134 = vmax.xlane.f32.xlu0 %v1091
          %v1135 = vpop.xlane.xlu0 %1134
          %1136 = vmax.xlane.f32.xlu0 %v1092
          %v1137 = vpop.xlane.xlu0 %1136
          %1138 = vmax.xlane.f32.xlu0 %v1093
          %v1139 = vpop.xlane.xlu0 %1138
          %1140 = vmax.xlane.f32.xlu0 %v1094
          %v1141 = vpop.xlane.xlu0 %1140
          %1142 = vmax.xlane.f32.xlu0 %v1095
          %v1143 = vpop.xlane.xlu0 %1142
          %1144 = vmax.xlane.f32.xlu0 %v1096
          %v1145 = vpop.xlane.xlu0 %1144
          %1146 = vmax.xlane.f32.xlu0 %v1097
          %v1147 = vpop.xlane.xlu0 %1146
          %1148 = vmax.xlane.f32.xlu0 %v1098
          %v1149 = vpop.xlane.xlu0 %1148
          %1150 = vmax.xlane.f32.xlu0 %v1099
          %v1151 = vpop.xlane.xlu0 %1150
          %1152 = vmax.xlane.f32.xlu0 %v1100
          %v1153 = vpop.xlane.xlu0 %1152
          %1154 = vmax.xlane.f32.xlu0 %v1101
          %v1155 = vpop.xlane.xlu0 %1154
          %1156 = vmax.xlane.f32.xlu0 %v1102
          %v1157 = vpop.xlane.xlu0 %1156
          %1158 = vmax.xlane.f32.xlu0 %v1103
          %v1159 = vpop.xlane.xlu0 %1158
          %1160 = vmax.xlane.f32.xlu0 %v1104
          %v1161 = vpop.xlane.xlu0 %1160
          %1162 = vmax.xlane.f32.xlu0 %v1105
          %v1163 = vpop.xlane.xlu0 %1162
          %1164 = vmax.xlane.f32.xlu0 %v1106
          %v1165 = vpop.xlane.xlu0 %1164
          %1166 = vmax.xlane.f32.xlu0 %v1107
          %v1167 = vpop.xlane.xlu0 %1166
          %1168 = vmax.xlane.f32.xlu0 %v1108
          %v1169 = vpop.xlane.xlu0 %1168
          %1170 = vmax.xlane.f32.xlu0 %v1109
          %v1171 = vpop.xlane.xlu0 %1170
          %1172 = vmax.xlane.f32.xlu0 %v1110
          %v1173 = vpop.xlane.xlu0 %1172
          %1174 = vmax.xlane.f32.xlu0 %v1111
          %v1175 = vpop.xlane.xlu0 %1174
          %v1176 = vsub.f32 %v1080, %v1113
          %v1177 = vsub.f32 %v1081, %v1115
          %v1178 = vsub.f32 %v1082, %v1117
          %v1179 = vsub.f32 %v1083, %v1119
          %v1180 = vsub.f32 %v1084, %v1121
          %v1181 = vsub.f32 %v1085, %v1123
          %v1182 = vsub.f32 %v1086, %v1125
          %v1183 = vsub.f32 %v1087, %v1127
          %v1184 = vsub.f32 %v1088, %v1129
          %v1185 = vsub.f32 %v1089, %v1131
          %v1186 = vsub.f32 %v1090, %v1133
          %v1187 = vsub.f32 %v1091, %v1135
          %v1188 = vsub.f32 %v1092, %v1137
          %v1189 = vsub.f32 %v1093, %v1139
          %v1190 = vsub.f32 %v1094, %v1141
          %v1191 = vsub.f32 %v1095, %v1143
          %v1192 = vsub.f32 %v1096, %v1145
          %v1193 = vsub.f32 %v1097, %v1147
          %v1194 = vsub.f32 %v1098, %v1149
          %v1195 = vsub.f32 %v1099, %v1151
          %v1196 = vsub.f32 %v1100, %v1153
          %v1197 = vsub.f32 %v1101, %v1155
          %v1198 = vsub.f32 %v1102, %v1157
          %v1199 = vsub.f32 %v1103, %v1159
          %v1200 = vsub.f32 %v1104, %v1161
          %v1201 = vsub.f32 %v1105, %v1163
          %v1202 = vsub.f32 %v1106, %v1165
          %v1203 = vsub.f32 %v1107, %v1167
          %v1204 = vsub.f32 %v1108, %v1169
          %v1205 = vsub.f32 %v1109, %v1171
          %v1206 = vsub.f32 %v1110, %v1173
          %v1207 = vsub.f32 %v1111, %v1175
          %v1208 = vmul.f32 %v1176, 1.442695
          %v1209 = vpow.pop %v1208
          %v1210 = vmul.f32 %v1177, 1.442695
          %v1211 = vpow.pop %v1210
          %v1212 = vmul.f32 %v1178, 1.442695
          %v1213 = vpow.pop %v1212
          %v1214 = vmul.f32 %v1179, 1.442695
          %v1215 = vpow.pop %v1214
          %v1216 = vmul.f32 %v1180, 1.442695
          %v1217 = vpow.pop %v1216
          %v1218 = vmul.f32 %v1181, 1.442695
          %v1219 = vpow.pop %v1218
          %v1220 = vmul.f32 %v1182, 1.442695
          %v1221 = vpow.pop %v1220
          %v1222 = vmul.f32 %v1183, 1.442695
          %v1223 = vpow.pop %v1222
          %v1224 = vmul.f32 %v1184, 1.442695
          %v1225 = vpow.pop %v1224
          %v1226 = vmul.f32 %v1185, 1.442695
          %v1227 = vpow.pop %v1226
          %v1228 = vmul.f32 %v1186, 1.442695
          %v1229 = vpow.pop %v1228
          %v1230 = vmul.f32 %v1187, 1.442695
          %v1231 = vpow.pop %v1230
          %v1232 = vmul.f32 %v1188, 1.442695
          %v1233 = vpow.pop %v1232
          %v1234 = vmul.f32 %v1189, 1.442695
          %v1235 = vpow.pop %v1234
          %v1236 = vmul.f32 %v1190, 1.442695
          %v1237 = vpow.pop %v1236
          %v1238 = vmul.f32 %v1191, 1.442695
          %v1239 = vpow.pop %v1238
          %v1240 = vmul.f32 %v1192, 1.442695
          %v1241 = vpow.pop %v1240
          %v1242 = vmul.f32 %v1193, 1.442695
          %v1243 = vpow.pop %v1242
          %v1244 = vmul.f32 %v1194, 1.442695
          %v1245 = vpow.pop %v1244
          %v1246 = vmul.f32 %v1195, 1.442695
          %v1247 = vpow.pop %v1246
          %v1248 = vmul.f32 %v1196, 1.442695
          %v1249 = vpow.pop %v1248
          %v1250 = vmul.f32 %v1197, 1.442695
          %v1251 = vpow.pop %v1250
          %v1252 = vmul.f32 %v1198, 1.442695
          %v1253 = vpow.pop %v1252
          %v1254 = vmul.f32 %v1199, 1.442695
          %v1255 = vpow.pop %v1254
          %v1256 = vmul.f32 %v1200, 1.442695
          %v1257 = vpow.pop %v1256
          %v1258 = vmul.f32 %v1201, 1.442695
          %v1259 = vpow.pop %v1258
          %v1260 = vmul.f32 %v1202, 1.442695
          %v1261 = vpow.pop %v1260
          %v1262 = vmul.f32 %v1203, 1.442695
          %v1263 = vpow.pop %v1262
          %v1264 = vmul.f32 %v1204, 1.442695
          %v1265 = vpow.pop %v1264
          %v1266 = vmul.f32 %v1205, 1.442695
          %v1267 = vpow.pop %v1266
          %v1268 = vmul.f32 %v1206, 1.442695
          %v1269 = vpow.pop %v1268
          %v1270 = vmul.f32 %v1207, 1.442695
          %v1271 = vpow.pop %v1270
          %v1272 = vsel %vm1079, %v1209, 0.0
          %v1273 = vsel %vm1079, %v1211, 0.0
          %v1274 = vsel %vm1079, %v1213, 0.0
          %v1275 = vsel %vm1079, %v1215, 0.0
          %v1276 = vsel %vm1079, %v1217, 0.0
          %v1277 = vsel %vm1079, %v1219, 0.0
          %v1278 = vsel %vm1079, %v1221, 0.0
          %v1279 = vsel %vm1079, %v1223, 0.0
          %v1280 = vsel %vm1079, %v1225, 0.0
          %v1281 = vsel %vm1079, %v1227, 0.0
          %v1282 = vsel %vm1079, %v1229, 0.0
          %v1283 = vsel %vm1079, %v1231, 0.0
          %v1284 = vsel %vm1079, %v1233, 0.0
          %v1285 = vsel %vm1079, %v1235, 0.0
          %v1286 = vsel %vm1079, %v1237, 0.0
          %v1287 = vsel %vm1079, %v1239, 0.0
          %v1288 = vsel %vm1079, %v1241, 0.0
          %v1289 = vsel %vm1079, %v1243, 0.0
          %v1290 = vsel %vm1079, %v1245, 0.0
          %v1291 = vsel %vm1079, %v1247, 0.0
          %v1292 = vsel %vm1079, %v1249, 0.0
          %v1293 = vsel %vm1079, %v1251, 0.0
          %v1294 = vsel %vm1079, %v1253, 0.0
          %v1295 = vsel %vm1079, %v1255, 0.0
          %v1296 = vsel %vm1079, %v1257, 0.0
          %v1297 = vsel %vm1079, %v1259, 0.0
          %v1298 = vsel %vm1079, %v1261, 0.0
          %v1299 = vsel %vm1079, %v1263, 0.0
          %v1300 = vsel %vm1079, %v1265, 0.0
          %v1301 = vsel %vm1079, %v1267, 0.0
          %v1302 = vsel %vm1079, %v1269, 0.0
          %v1303 = vsel %vm1079, %v1271, 0.0
          %1304 = vadd.xlane.f32.xlu0 %v1272
          %v1305 = vpop.xlane.xlu0 %1304
          %1306 = vadd.xlane.f32.xlu0 %v1273
          %v1307 = vpop.xlane.xlu0 %1306
          %1308 = vadd.xlane.f32.xlu0 %v1274
          %v1309 = vpop.xlane.xlu0 %1308
          %1310 = vadd.xlane.f32.xlu0 %v1275
          %v1311 = vpop.xlane.xlu0 %1310
          %1312 = vadd.xlane.f32.xlu0 %v1276
          %v1313 = vpop.xlane.xlu0 %1312
          %1314 = vadd.xlane.f32.xlu0 %v1277
          %v1315 = vpop.xlane.xlu0 %1314
          %1316 = vadd.xlane.f32.xlu0 %v1278
          %v1317 = vpop.xlane.xlu0 %1316
          %1318 = vadd.xlane.f32.xlu0 %v1279
          %v1319 = vpop.xlane.xlu0 %1318
          %1320 = vadd.xlane.f32.xlu0 %v1280
          %v1321 = vpop.xlane.xlu0 %1320
          %1322 = vadd.xlane.f32.xlu0 %v1281
          %v1323 = vpop.xlane.xlu0 %1322
          %1324 = vadd.xlane.f32.xlu0 %v1282
          %v1325 = vpop.xlane.xlu0 %1324
          %1326 = vadd.xlane.f32.xlu0 %v1283
          %v1327 = vpop.xlane.xlu0 %1326
          %1328 = vadd.xlane.f32.xlu0 %v1284
          %v1329 = vpop.xlane.xlu0 %1328
          %1330 = vadd.xlane.f32.xlu0 %v1285
          %v1331 = vpop.xlane.xlu0 %1330
          %1332 = vadd.xlane.f32.xlu0 %v1286
          %v1333 = vpop.xlane.xlu0 %1332
          %1334 = vadd.xlane.f32.xlu0 %v1287
          %v1335 = vpop.xlane.xlu0 %1334
          %1336 = vadd.xlane.f32.xlu0 %v1288
          %v1337 = vpop.xlane.xlu0 %1336
          %1338 = vadd.xlane.f32.xlu0 %v1289
          %v1339 = vpop.xlane.xlu0 %1338
          %1340 = vadd.xlane.f32.xlu0 %v1290
          %v1341 = vpop.xlane.xlu0 %1340
          %1342 = vadd.xlane.f32.xlu0 %v1291
          %v1343 = vpop.xlane.xlu0 %1342
          %1344 = vadd.xlane.f32.xlu0 %v1292
          %v1345 = vpop.xlane.xlu0 %1344
          %1346 = vadd.xlane.f32.xlu0 %v1293
          %v1347 = vpop.xlane.xlu0 %1346
          %1348 = vadd.xlane.f32.xlu0 %v1294
          %v1349 = vpop.xlane.xlu0 %1348
          %1350 = vadd.xlane.f32.xlu0 %v1295
          %v1351 = vpop.xlane.xlu0 %1350
          %1352 = vadd.xlane.f32.xlu0 %v1296
          %v1353 = vpop.xlane.xlu0 %1352
          %1354 = vadd.xlane.f32.xlu0 %v1297
          %v1355 = vpop.xlane.xlu0 %1354
          %1356 = vadd.xlane.f32.xlu0 %v1298
          %v1357 = vpop.xlane.xlu0 %1356
          %1358 = vadd.xlane.f32.xlu0 %v1299
          %v1359 = vpop.xlane.xlu0 %1358
          %1360 = vadd.xlane.f32.xlu0 %v1300
          %v1361 = vpop.xlane.xlu0 %1360
          %1362 = vadd.xlane.f32.xlu0 %v1301
          %v1363 = vpop.xlane.xlu0 %1362
          %1364 = vadd.xlane.f32.xlu0 %v1302
          %v1365 = vpop.xlane.xlu0 %1364
          %1366 = vadd.xlane.f32.xlu0 %v1303
          %v1367 = vpop.xlane.xlu0 %1366
          %v1368 = vlog2.pop %v1305
          %v1369 = vmul.f32 %v1368, 0.6931472
          %v1370 = vlog2.pop %v1307
          %v1371 = vmul.f32 %v1370, 0.6931472
          %v1372 = vlog2.pop %v1309
          %v1373 = vmul.f32 %v1372, 0.6931472
          %v1374 = vlog2.pop %v1311
          %v1375 = vmul.f32 %v1374, 0.6931472
          %v1376 = vlog2.pop %v1313
          %v1377 = vmul.f32 %v1376, 0.6931472
          %v1378 = vlog2.pop %v1315
          %v1379 = vmul.f32 %v1378, 0.6931472
          %v1380 = vlog2.pop %v1317
          %v1381 = vmul.f32 %v1380, 0.6931472
          %v1382 = vlog2.pop %v1319
          %v1383 = vmul.f32 %v1382, 0.6931472
          %v1384 = vlog2.pop %v1321
          %v1385 = vmul.f32 %v1384, 0.6931472
          %v1386 = vlog2.pop %v1323
          %v1387 = vmul.f32 %v1386, 0.6931472
          %v1388 = vlog2.pop %v1325
          %v1389 = vmul.f32 %v1388, 0.6931472
          %v1390 = vlog2.pop %v1327
          %v1391 = vmul.f32 %v1390, 0.6931472
          %v1392 = vlog2.pop %v1329
          %v1393 = vmul.f32 %v1392, 0.6931472
          %v1394 = vlog2.pop %v1331
          %v1395 = vmul.f32 %v1394, 0.6931472
          %v1396 = vlog2.pop %v1333
          %v1397 = vmul.f32 %v1396, 0.6931472
          %v1398 = vlog2.pop %v1335
          %v1399 = vmul.f32 %v1398, 0.6931472
          %v1400 = vlog2.pop %v1337
          %v1401 = vmul.f32 %v1400, 0.6931472
          %v1402 = vlog2.pop %v1339
          %v1403 = vmul.f32 %v1402, 0.6931472
          %v1404 = vlog2.pop %v1341
          %v1405 = vmul.f32 %v1404, 0.6931472
          %v1406 = vlog2.pop %v1343
          %v1407 = vmul.f32 %v1406, 0.6931472
          %v1408 = vlog2.pop %v1345
          %v1409 = vmul.f32 %v1408, 0.6931472
          %v1410 = vlog2.pop %v1347
          %v1411 = vmul.f32 %v1410, 0.6931472
          %v1412 = vlog2.pop %v1349
          %v1413 = vmul.f32 %v1412, 0.6931472
          %v1414 = vlog2.pop %v1351
          %v1415 = vmul.f32 %v1414, 0.6931472
          %v1416 = vlog2.pop %v1353
          %v1417 = vmul.f32 %v1416, 0.6931472
          %v1418 = vlog2.pop %v1355
          %v1419 = vmul.f32 %v1418, 0.6931472
          %v1420 = vlog2.pop %v1357
          %v1421 = vmul.f32 %v1420, 0.6931472
          %v1422 = vlog2.pop %v1359
          %v1423 = vmul.f32 %v1422, 0.6931472
          %v1424 = vlog2.pop %v1361
          %v1425 = vmul.f32 %v1424, 0.6931472
          %v1426 = vlog2.pop %v1363
          %v1427 = vmul.f32 %v1426, 0.6931472
          %v1428 = vlog2.pop %v1365
          %v1429 = vmul.f32 %v1428, 0.6931472
          %v1430 = vlog2.pop %v1367
          %v1431 = vmul.f32 %v1430, 0.6931472
          %v1432 = vsub.f32 %v1176, %v1369
          %v1433 = vsub.f32 %v1177, %v1371
          %v1434 = vsub.f32 %v1178, %v1373
          %v1435 = vsub.f32 %v1179, %v1375
          %v1436 = vsub.f32 %v1180, %v1377
          %v1437 = vsub.f32 %v1181, %v1379
          %v1438 = vsub.f32 %v1182, %v1381
          %v1439 = vsub.f32 %v1183, %v1383
          %v1440 = vsub.f32 %v1184, %v1385
          %v1441 = vsub.f32 %v1185, %v1387
          %v1442 = vsub.f32 %v1186, %v1389
          %v1443 = vsub.f32 %v1187, %v1391
          %v1444 = vsub.f32 %v1188, %v1393
          %v1445 = vsub.f32 %v1189, %v1395
          %v1446 = vsub.f32 %v1190, %v1397
          %v1447 = vsub.f32 %v1191, %v1399
          %v1448 = vsub.f32 %v1192, %v1401
          %v1449 = vsub.f32 %v1193, %v1403
          %v1450 = vsub.f32 %v1194, %v1405
          %v1451 = vsub.f32 %v1195, %v1407
          %v1452 = vsub.f32 %v1196, %v1409
          %v1453 = vsub.f32 %v1197, %v1411
          %v1454 = vsub.f32 %v1198, %v1413
          %v1455 = vsub.f32 %v1199, %v1415
          %v1456 = vsub.f32 %v1200, %v1417
          %v1457 = vsub.f32 %v1201, %v1419
          %v1458 = vsub.f32 %v1202, %v1421
          %v1459 = vsub.f32 %v1203, %v1423
          %v1460 = vsub.f32 %v1204, %v1425
          %v1461 = vsub.f32 %v1205, %v1427
          %v1462 = vsub.f32 %v1206, %v1429
          %v1463 = vsub.f32 %v1207, %v1431
          %v1464 = vsel %vm1079, %v1432, 0.0
          %v1465 = vsel %vm1079, %v1433, 0.0
          %v1466 = vsel %vm1079, %v1434, 0.0
          %v1467 = vsel %vm1079, %v1435, 0.0
          %v1468 = vsel %vm1079, %v1436, 0.0
          %v1469 = vsel %vm1079, %v1437, 0.0
          %v1470 = vsel %vm1079, %v1438, 0.0
          %v1471 = vsel %vm1079, %v1439, 0.0
          %v1472 = vsel %vm1079, %v1440, 0.0
          %v1473 = vsel %vm1079, %v1441, 0.0
          %v1474 = vsel %vm1079, %v1442, 0.0
          %v1475 = vsel %vm1079, %v1443, 0.0
          %v1476 = vsel %vm1079, %v1444, 0.0
          %v1477 = vsel %vm1079, %v1445, 0.0
          %v1478 = vsel %vm1079, %v1446, 0.0
          %v1479 = vsel %vm1079, %v1447, 0.0
          %v1480 = vsel %vm1079, %v1448, 0.0
          %v1481 = vsel %vm1079, %v1449, 0.0
          %v1482 = vsel %vm1079, %v1450, 0.0
          %v1483 = vsel %vm1079, %v1451, 0.0
          %v1484 = vsel %vm1079, %v1452, 0.0
          %v1485 = vsel %vm1079, %v1453, 0.0
          %v1486 = vsel %vm1079, %v1454, 0.0
          %v1487 = vsel %vm1079, %v1455, 0.0
          %v1488 = vsel %vm1079, %v1456, 0.0
          %v1489 = vsel %vm1079, %v1457, 0.0
          %v1490 = vsel %vm1079, %v1458, 0.0
          %v1491 = vsel %vm1079, %v1459, 0.0
          %v1492 = vsel %vm1079, %v1460, 0.0
          %v1493 = vsel %vm1079, %v1461, 0.0
          %v1494 = vsel %vm1079, %v1462, 0.0
          %v1495 = vsel %vm1079, %v1463, 0.0
          %1496 = vst [vmem:[%s373] sm:$0xff] %v1464
          %1497 = vst [vmem:[%s373 + $0x8] sm:$0xff] %v1465
          %1498 = vst [vmem:[%s373 + $0x10] sm:$0xff] %v1466
          %1499 = vst [vmem:[%s373 + $0x18] sm:$0xff] %v1467
          %1500 = vst [vmem:[%s373 + $0x20] sm:$0xff] %v1468
          %1501 = vst [vmem:[%s373 + $0x28] sm:$0xff] %v1469
          %1502 = vst [vmem:[%s373 + $0x30] sm:$0xff] %v1470
          %1503 = vst [vmem:[%s373 + $0x38] sm:$0xff] %v1471
          %1504 = vst [vmem:[%s373 + $0x40] sm:$0xff] %v1472
          %1505 = vst [vmem:[%s373 + $0x48] sm:$0xff] %v1473
          %1506 = vst [vmem:[%s373 + $0x50] sm:$0xff] %v1474
          %1507 = vst [vmem:[%s373 + $0x58] sm:$0xff] %v1475
          %1508 = vst [vmem:[%s373 + $0x60] sm:$0xff] %v1476
          %1509 = vst [vmem:[%s373 + $0x68] sm:$0xff] %v1477
          %1510 = vst [vmem:[%s373 + $0x70] sm:$0xff] %v1478
          %1511 = vst [vmem:[%s373 + $0x78] sm:$0xff] %v1479
          %1512 = vst [vmem:[%s373 + $0x80] sm:$0xff] %v1480
          %1513 = vst [vmem:[%s373 + $0x88] sm:$0xff] %v1481
          %1514 = vst [vmem:[%s373 + $0x90] sm:$0xff] %v1482
          %1515 = vst [vmem:[%s373 + $0x98] sm:$0xff] %v1483
          %1516 = vst [vmem:[%s373 + $0xa0] sm:$0xff] %v1484
          %1517 = vst [vmem:[%s373 + $0xa8] sm:$0xff] %v1485
          %1518 = vst [vmem:[%s373 + $0xb0] sm:$0xff] %v1486
          %1519 = vst [vmem:[%s373 + $0xb8] sm:$0xff] %v1487
          %1520 = vst [vmem:[%s373 + $0xc0] sm:$0xff] %v1488
          %1521 = vst [vmem:[%s373 + $0xc8] sm:$0xff] %v1489
          %1522 = vst [vmem:[%s373 + $0xd0] sm:$0xff] %v1490
          %1523 = vst [vmem:[%s373 + $0xd8] sm:$0xff] %v1491
          %1524 = vst [vmem:[%s373 + $0xe0] sm:$0xff] %v1492
          %1525 = vst [vmem:[%s373 + $0xe8] sm:$0xff] %v1493
          %1526 = vst [vmem:[%s373 + $0xf0] sm:$0xff] %v1494
          %1527 = vst [vmem:[%s373 + $0xf8] sm:$0xff] %v1495
        $region82: #{gcn_forward.5} parent=65 // pred_fallthru
          _
        %s1528 = smul.u32 32, %s30
        %p1529 = scmp.lt.s32.totalorder %s1528, 63
        %s1530 = scalar_select %p1529, %s1528, 63
        %s1531 = smul.addr %s1530, 8
        %s1532 = scalar_lea.vmem %s5, %s1531
        // Predicated region
        $region83: #{gcn_forward.5} parent=65 // pred_check
          %p1533 = pneg %p132
        $region84: #{gcn_forward.5} parent=65 // pred_check_branch
          %1535 = sbr.rel (%p1533) target = $region86
        $region85: #{gcn_forward.5} parent=65 // pred_region
          %s1536 = smul.u32 32, %s30
        $region86: #{gcn_forward.5} parent=65 // pred_fallthru
          _
      $region66: #{gcn_forward.5} parent=5 // pred_fallthru
        _
      %p1537 = scmp.le.s32.totalorder 2, %s21
      // Predicated region
      $region87: #{gcn_forward.5} parent=5 // pred_check
        %p1538 = pneg %p1537
      $region88: #{gcn_forward.5} parent=5 // pred_check_branch
        %1540 = sbr.rel (%p1538) target = $region90
      $region89: #{gcn_forward.5} parent=5 // pred_region
        %s1541 = ssub.s32 %s21, 2
        // Predicated region
        $region91: #{gcn_forward.5} parent=89 // pred_check
          %p1542 = pneg %p138
        $region92: #{gcn_forward.5} parent=89 // pred_check_branch
          %1544 = sbr.rel (%p1542) target = $region94
        $region93: #{gcn_forward.5} parent=89 // pred_region
          %s1545 = smul.u32 32, %s32
          %p1546 = scmp.lt.s32.totalorder %s1545, 63
          %s1547 = scalar_select %p1546, %s1545, 63
          %s1548 = smul.addr %s1547, 8
          %s1549 = scalar_lea.vmem %s5, %s1548
        $region94: #{gcn_forward.5} parent=89 // pred_fallthru
          _
      $region90: #{gcn_forward.5} parent=5 // pred_fallthru
        _
    $region6: #{gcn_forward.5} parent=1 // loop_footer
      %s25 = sadd.s32 1, %s21
    $region7: #{gcn_forward.5} parent=1 // loop_footer_branch
      %20 = sbr.rel target = $region3
    $region8: #{gcn_forward.5} parent=1 // loop_exit
      _

// kernel: gcn_forward.4
$region0: #{gcn_forward.4}
  #allocation0 [shape = 'u32[]', space=smem, size = 0x4, offset = 0x4, fixed_abs, tag = 'smem constant byte address 0x4 - core index']
  #allocation1 [shape = 'u32[144,128]{1,0:T(1,128)}', space=vmem, size = 0x12000, scoped, tag = 'internal scratch']
  #allocation2 [shape = 'f32[256,128]{1,0:T(8,128)}', space=vmem, size = 0x20000, scoped, tag = 'scratch operand']
  #allocation3 [shape = 's32[1]{0}', space=sflag, size = 0x4, scoped, tag = 'scoped memory for gcn_forward.4']
  #allocation4 [shape = 'u8[512]{0}', space=smem, size = 0x200, scoped, tag = 'prefetched SMEM operand 0']
  #allocation5 [shape = 'u8[512]{0}', space=smem, size = 0x200, scoped, tag = 'prefetched SMEM operand 1']
  %s0 = inlined_call_operand.vmem [shape: s32[4], index: 0, kind: input, shape index: {}]
  %s1 = inlined_call_operand.vmem [shape: s32[2], index: 1, kind: input, shape index: {}]
  %s2 = inlined_call_operand.hbm [shape: bf16[512,512], index: 2, kind: input, shape index: {}]
  %s3 = inlined_call_operand.vmem [shape: bf16[512,128], index: 3, kind: input, shape index: {}]
  %s4 = inlined_call_operand.hbm [shape: f32[1,128], index: 4, kind: input, shape index: {}]
  %s5 = inlined_call_operand.hbm [shape: bf16[128,128], index: 5, kind: input, shape index: {}]
  %s6 = inlined_call_operand.vmem [shape: bf16[512,128], index: 6, kind: output, shape index: {}]
  %s7 = sld [smem:[#allocation0]]
  $region73: #{gcn_forward.4} parent=0
    _
  %s9 = ssub.s32 1, %s7
  %s10 = scalar_select 0, %s9, %s7
  %s11 = sshll.u32 %s0, 4
  %s12 = int_to_ptr.vmem [resolvable:$true] %s11
  %14 = dma.vmem_to_smem %s12, 16, [#allocation4], [#allocation3]
  %s15 = sshll.u32 %s1, 4
  %s16 = int_to_ptr.vmem [resolvable:$true] %s15
  %18 = dma.vmem_to_smem %s16, 16, [#allocation5], [#allocation3]
  %19 = dma.done [#allocation3], 32
  %20 = sfence
  $region1: #{gcn_forward.4} parent=0
    #allocation6 [shape = 'u8[262144]{0}', space=vmem, size = 0x40000, scoped, tag = 'input window, operand 2']
    #allocation7 [shape = 's32[2]{0}', space=sflag, size = 0x8, scoped, tag = 'scoped memory for gcn_forward.4']
    #allocation8 [shape = 'u8[512]{0}', space=vmem, size = 0x400, scoped, tag = 'input window, operand 4, single buffered']
    #allocation9 [shape = 's32[1]{0}', space=sflag, size = 0x4, scoped, tag = 'scoped memory for gcn_forward.4']
    #allocation10 [shape = 'u8[32768]{0}', space=vmem, size = 0x8000, scoped, tag = 'input window, operand 5, single buffered']
    %21 = vsyncpa [#allocation7], 0
    %s22 = scalar_lea.sflag [#allocation7], 1
    %23 = vsyncpa %s22, 0
    %24 = vsyncpa [#allocation9], 0
    loop: start=0, step=1, limit=6
    $region2: #{gcn_forward.4} parent=1 // loop_pre_header
      _
    $region3: #{gcn_forward.4} parent=1 // loop_header
      %s26 = sphi 0, %s30
      %p27 = scmp.ge.s32.totalorder %s26, 6
      %s33 = sphi 0, %s45
      %s34 = sphi 0, %s41
      %s35 = sphi 0, %s33
      %s36 = sphi 0, %s34
      %s37 = sphi 0, %s35
      %s38 = sphi 0, %s36
      %s56 = sphi 0, %s58
      %s59 = sphi 0, %s56
      %s60 = sphi 0, %s59
      %s76 = sphi 0, %s60
      %s80 = sphi 0, %s80
      %s82 = sphi 0, %s80
      %s83 = sphi 0, %s82
      %s97 = sphi 0, %s83
      %s101 = sphi 0, %s101
      %s103 = sphi 0, %s101
      %s104 = sphi 0, %s103
      %s118 = sphi 0, %s104
      %s122 = sphi 0, %s122
      %s124 = sphi 0, %s122
      %s125 = sphi 0, %s124
      %s139 = sphi 0, %s125
      %s145 = sphi 0, %s147
      %s148 = sphi 0, %s145
      %s149 = sphi 0, %s148
      %s165 = sphi 0, %s149
    $region4: #{gcn_forward.4} parent=1 // loop_header_branch
      %29 = sbr.rel (%p27) target = $region8
    $region5: #{gcn_forward.4} parent=1 // loop_body
      %s31 = ssub.s32 %s26, 1
      %s32 = ssub.s32 %s26, 2
      %s39 = sadd.s32 1, %s34
      %p40 = scmp.ge.s32.totalorder %s39, 2
      %s41 = scalar_select %p40, 0, %s39
      %s42 = sadd.s32 1, %s33
      %s43 = scalar_select %p40, %s42, %s33
      %p44 = scmp.ge.s32.totalorder %s43, 2
      %s45 = scalar_select %p44, 0, %s43
      %s46 = smul.u32 %s33, 2
      %s47 = sadd.s32 %s46, %s34
      %s48 = sld [smem:[#allocation4 + %s47]]
      %s49 = smul.u32 %s45, 2
      %s50 = sadd.s32 %s49, %s41
      %s51 = sld [smem:[#allocation4 + %s50]]
      %s52 = ssub.s32 %s33, %s45
      %s53 = ssub.s32 %s48, %s51
      %s54 = sor.u32 %s52, %s53
      %p55 = scmp.eq.s32.totalorder %s54, 0
      %s57 = sadd.s32 %s56, 1
      %s58 = scalar_select %p55, %s56, %s57
      %p61 = pneg %p55
      %p62 = scmp.eq.s32.totalorder %s26, 3
      %p63 = por %p61, %p62
      %p64 = scmp.ne.s32.totalorder %s56, %s59
      %p65 = scmp.eq.s32.totalorder %s26, 0
      %p66 = por %p64, %p65
      %p67 = scmp.ne.s32.totalorder %s56, %s59
      %p68 = scmp.eq.s32.totalorder %s31, 3
      %p69 = por %p67, %p68
      %p70 = scmp.ne.s32.totalorder %s59, %s60
      %p71 = scmp.eq.s32.totalorder %s31, 0
      %p72 = por %p70, %p71
      %p73 = scmp.ne.s32.totalorder %s59, %s60
      %p74 = scmp.eq.s32.totalorder %s32, 3
      %p75 = por %p73, %p74
      %p77 = scmp.ne.s32.totalorder %s60, %s76
      %p78 = scmp.eq.s32.totalorder %s32, 0
      %p79 = por %p77, %p78
      %s81 = sadd.s32 %s80, 1
      %p84 = scmp.eq.s32.totalorder %s26, 3
      %p85 = scmp.ne.s32.totalorder %s80, %s82
      %p86 = scmp.eq.s32.totalorder %s26, 0
      %p87 = por %p85, %p86
      %p88 = scmp.ne.s32.totalorder %s80, %s82
      %p89 = scmp.eq.s32.totalorder %s31, 3
      %p90 = por %p88, %p89
      %p91 = scmp.ne.s32.totalorder %s82, %s83
      %p92 = scmp.eq.s32.totalorder %s31, 0
      %p93 = por %p91, %p92
      %p94 = scmp.ne.s32.totalorder %s82, %s83
      %p95 = scmp.eq.s32.totalorder %s32, 3
      %p96 = por %p94, %p95
      %p98 = scmp.ne.s32.totalorder %s83, %s97
      %p99 = scmp.eq.s32.totalorder %s32, 0
      %p100 = por %p98, %p99
      %s102 = sadd.s32 %s101, 1
      %p105 = scmp.eq.s32.totalorder %s26, 3
      %p106 = scmp.ne.s32.totalorder %s101, %s103
      %p107 = scmp.eq.s32.totalorder %s26, 0
      %p108 = por %p106, %p107
      %p109 = scmp.ne.s32.totalorder %s101, %s103
      %p110 = scmp.eq.s32.totalorder %s31, 3
      %p111 = por %p109, %p110
      %p112 = scmp.ne.s32.totalorder %s103, %s104
      %p113 = scmp.eq.s32.totalorder %s31, 0
      %p114 = por %p112, %p113
      %p115 = scmp.ne.s32.totalorder %s103, %s104
      %p116 = scmp.eq.s32.totalorder %s32, 3
      %p117 = por %p115, %p116
      %p119 = scmp.ne.s32.totalorder %s104, %s118
      %p120 = scmp.eq.s32.totalorder %s32, 0
      %p121 = por %p119, %p120
      %s123 = sadd.s32 %s122, 1
      %p126 = scmp.eq.s32.totalorder %s26, 3
      %p127 = scmp.ne.s32.totalorder %s122, %s124
      %p128 = scmp.eq.s32.totalorder %s26, 0
      %p129 = por %p127, %p128
      %p130 = scmp.ne.s32.totalorder %s122, %s124
      %p131 = scmp.eq.s32.totalorder %s31, 3
      %p132 = por %p130, %p131
      %p133 = scmp.ne.s32.totalorder %s124, %s125
      %p134 = scmp.eq.s32.totalorder %s31, 0
      %p135 = por %p133, %p134
      %p136 = scmp.ne.s32.totalorder %s124, %s125
      %p137 = scmp.eq.s32.totalorder %s32, 3
      %p138 = por %p136, %p137
      %p140 = scmp.ne.s32.totalorder %s125, %s139
      %p141 = scmp.eq.s32.totalorder %s32, 0
      %p142 = por %p140, %p141
      %s143 = ssub.s32 %s33, %s45
      %p144 = scmp.eq.s32.totalorder %s143, 0
      %s146 = sadd.s32 %s145, 1
      %s147 = scalar_select %p144, %s145, %s146
      %p150 = pneg %p144
      %p151 = scmp.eq.s32.totalorder %s26, 3
      %p152 = por %p150, %p151
      %p153 = scmp.ne.s32.totalorder %s145, %s148
      %p154 = scmp.eq.s32.totalorder %s26, 0
      %p155 = por %p153, %p154
      %p156 = scmp.ne.s32.totalorder %s145, %s148
      %p157 = scmp.eq.s32.totalorder %s31, 3
      %p158 = por %p156, %p157
      %p159 = scmp.ne.s32.totalorder %s148, %s149
      %p160 = scmp.eq.s32.totalorder %s31, 0
      %p161 = por %p159, %p160
      %p162 = scmp.ne.s32.totalorder %s148, %s149
      %p163 = scmp.eq.s32.totalorder %s32, 3
      %p164 = por %p162, %p163
      %p166 = scmp.ne.s32.totalorder %s149, %s165
      %p167 = scmp.eq.s32.totalorder %s32, 0
      %p168 = por %p166, %p167
      %p169 = scmp.le.s32.totalorder 1, %s26
      %p170 = scmp.lt.s32.totalorder %s26, 5
      %p171 = pnand %p169, %p170
      %p172 = pneg %p171
      // Predicated region
      $region9: #{gcn_forward.4} parent=5 // pred_check
        _
      $region10: #{gcn_forward.4} parent=5 // pred_check_branch
        %174 = sbr.rel (%p171) target = $region12
      $region11: #{gcn_forward.4} parent=5 // pred_region
        %s175 = ssub.s32 %s26, 1
        // Predicated region
        $region13: #{gcn_forward.4} parent=11 // pred_check
          %p176 = pneg %p93
        $region14: #{gcn_forward.4} parent=11 // pred_check_branch
          %178 = sbr.rel (%p176) target = $region16
        $region15: #{gcn_forward.4} parent=11 // pred_region
          _
        $region16: #{gcn_forward.4} parent=11 // pred_fallthru
          _
        // Predicated region
        $region17: #{gcn_forward.4} parent=11 // pred_check
          %p179 = pneg %p114
        $region18: #{gcn_forward.4} parent=11 // pred_check_branch
          %181 = sbr.rel (%p179) target = $region20
        $region19: #{gcn_forward.4} parent=11 // pred_region
          %s183 = ssub.s32 16, 16
          %184 = vsyncadd [#allocation9], %s183
          %s186 = sshll.u32 [#allocation8], 4
          %s187 = int_to_ptr.vmem [resolvable:$true] %s186
          %189 = dma.hbm_to_vmem [thread:$0]  %s4, 16, %s187, [#allocation9]
        $region20: #{gcn_forward.4} parent=11 // pred_fallthru
          _
        // Predicated region
        $region21: #{gcn_forward.4} parent=11 // pred_check
          %p190 = pneg %p135
        $region22: #{gcn_forward.4} parent=11 // pred_check_branch
          %192 = sbr.rel (%p190) target = $region24
        $region23: #{gcn_forward.4} parent=11 // pred_region
          %s194 = ssub.s32 1024, 1024
          %195 = vsyncadd [#allocation9], %s194
          %s196 = sshll.u32 [#allocation10], 4
          %s197 = int_to_ptr.vmem [resolvable:$true] %s196
          %202 = dma.hbm_to_vmem [thread:$0]  %s5, 1024, %s197, [#allocation9], 64, 64, 4
        $region24: #{gcn_forward.4} parent=11 // pred_fallthru
          _
      $region12: #{gcn_forward.4} parent=5 // pred_fallthru
        _
      %p203 = scmp.lt.s32.totalorder %s26, 4
      // Predicated region
      $region25: #{gcn_forward.4} parent=5 // pred_check
        %p204 = pneg %p203
      $region26: #{gcn_forward.4} parent=5 // pred_check_branch
        %206 = sbr.rel (%p204) target = $region28
      $region27: #{gcn_forward.4} parent=5 // pred_region
        // Predicated region
        $region29: #{gcn_forward.4} parent=27 // pred_check
          %p207 = pneg %p66
        $region30: #{gcn_forward.4} parent=27 // pred_check_branch
          %209 = sbr.rel (%p207) target = $region32
        $region31: #{gcn_forward.4} parent=27 // pred_region
          %s210 = sand.u32 %s56, 1
          %s211 = scalar_lea.sflag [#allocation7], %s210
          %s212 = sand.u32 %s56, 1
          %s213 = smul.addr %s212, 256
          %s214 = scalar_lea.vmem [#allocation6], %s213
          %s215 = smul.u32 %s33, 2
          %s216 = sadd.s32 %s215, %s34
          %s217 = sld [smem:[#allocation4 + %s216]]
          %s218 = smul.u32 32, %s33
          %s219 = smul.u32 2, %s217
          %s221 = ssub.s32 4096, 4096
          %222 = vsyncadd %s211, %s221
          %s223 = smul.addr %s218, 4
          %s224 = sadd.s32 %s219, %s223
          %s225 = smul.addr %s224, 64
          %s226 = scalar_lea.hbm %s2, %s225
          %s227 = sshll.u32 %s214, 4
          %s228 = int_to_ptr.vmem [resolvable:$true] %s227
          %233 = dma.hbm_to_vmem [thread:$0]  %s226, 4096, %s228, %s211, 256, 128, 8
        $region32: #{gcn_forward.4} parent=27 // pred_fallthru
          _
      $region28: #{gcn_forward.4} parent=5 // pred_fallthru
        _
      %p234 = scmp.le.s32.totalorder 1, %s26
      %p235 = scmp.lt.s32.totalorder %s26, 5
      %p236 = pnand %p234, %p235
      %p237 = pneg %p236
      // Predicated region
      $region33: #{gcn_forward.4} parent=5 // pred_check
        _
      $region34: #{gcn_forward.4} parent=5 // pred_check_branch
        %239 = sbr.rel (%p236) target = $region36
      $region35: #{gcn_forward.4} parent=5 // pred_region
        %s240 = ssub.s32 %s26, 1
        %s241 = sand.u32 %s59, 1
        %s242 = scalar_lea.sflag [#allocation7], %s241
        %s243 = sand.u32 %s59, 1
        %s244 = smul.addr %s243, 256
        %s245 = scalar_lea.vmem [#allocation6], %s244
        // Predicated region
        $region37: #{gcn_forward.4} parent=35 // pred_check
          %p246 = pneg %p72
        $region38: #{gcn_forward.4} parent=35 // pred_check_branch
          %248 = sbr.rel (%p246) target = $region40
        $region39: #{gcn_forward.4} parent=35 // pred_region
          %249 = dma.done %s242, 4096
        $region40: #{gcn_forward.4} parent=35 // pred_fallthru
          _
        // Predicated region
        $region41: #{gcn_forward.4} parent=35 // pred_check
          %p250 = pneg %p114
        $region42: #{gcn_forward.4} parent=35 // pred_check_branch
          %252 = sbr.rel (%p250) target = $region44
        $region43: #{gcn_forward.4} parent=35 // pred_region
          %253 = dma.done [#allocation9], 16
        $region44: #{gcn_forward.4} parent=35 // pred_fallthru
          _
        // Predicated region
        $region45: #{gcn_forward.4} parent=35 // pred_check
          %p254 = pneg %p135
        $region46: #{gcn_forward.4} parent=35 // pred_check_branch
          %256 = sbr.rel (%p254) target = $region48
        $region47: #{gcn_forward.4} parent=35 // pred_region
          %257 = dma.done [#allocation9], 1024
        $region48: #{gcn_forward.4} parent=35 // pred_fallthru
          _
        %s258 = sand.u32 %s59, 1
        %s259 = scalar_lea.sflag [#allocation7], %s258
        %s260 = sand.u32 %s59, 1
        %s261 = smul.addr %s260, 256
        %s262 = scalar_lea.vmem [#allocation6], %s261
        %p263 = pneg %p72
        %p264 = pneg %p69
        %p265 = pneg %p93
        %p266 = pneg %p90
        %p267 = pneg %p114
        %p268 = pneg %p111
        %p269 = pneg %p135
        %p270 = pneg %p132
        %p271 = pneg %p161
        %p272 = pneg %p158
        %s273 = smul.u32 32, %s35
        %p274 = scmp.lt.s32.totalorder %s273, 63
        %s275 = scalar_select %p274, %s273, 63
        %s276 = smul.addr %s275, 4
        %s277 = scalar_lea.vmem %s6, %s276
        %s278 = smul.u32 %s35, 2
        %s279 = sadd.s32 %s278, %s36
        %s280 = sld [smem:[#allocation4 + %s279]]
        %s281 = smul.u32 32, %s35
        %s282 = smul.u32 2, %s280
        %s283 = smul.u32 32, %s35
        %p284 = scmp.lt.s32.totalorder %s283, 63
        %s285 = scalar_select %p284, %s283, 63
        %s286 = smul.addr %s285, 4
        %s287 = scalar_lea.vmem %s6, %s286
        %s288 = smul.u32 32, %s35
        %p290 = scmp.eq.s32.totalorder %s36, 0
        // Predicated region
        $region49: #{gcn_forward.4} parent=35 // pred_check
          %p291 = pneg %p290
        $region50: #{gcn_forward.4} parent=35 // pred_check_branch
          %293 = sbr.rel (%p291) target = $region52
        $region51: #{gcn_forward.4} parent=35 // pred_region
          %294 = vst [vmem:[#allocation2] sm:$0xff] 0.0
          %295 = vst [vmem:[#allocation2 + $0x8] sm:$0xff] 0.0
          %296 = vst [vmem:[#allocation2 + $0x10] sm:$0xff] 0.0
          %297 = vst [vmem:[#allocation2 + $0x18] sm:$0xff] 0.0
          %298 = vst [vmem:[#allocation2 + $0x20] sm:$0xff] 0.0
          %299 = vst [vmem:[#allocation2 + $0x28] sm:$0xff] 0.0
          %300 = vst [vmem:[#allocation2 + $0x30] sm:$0xff] 0.0
          %301 = vst [vmem:[#allocation2 + $0x38] sm:$0xff] 0.0
          %302 = vst [vmem:[#allocation2 + $0x40] sm:$0xff] 0.0
          %303 = vst [vmem:[#allocation2 + $0x48] sm:$0xff] 0.0
          %304 = vst [vmem:[#allocation2 + $0x50] sm:$0xff] 0.0
          %305 = vst [vmem:[#allocation2 + $0x58] sm:$0xff] 0.0
          %306 = vst [vmem:[#allocation2 + $0x60] sm:$0xff] 0.0
          %307 = vst [vmem:[#allocation2 + $0x68] sm:$0xff] 0.0
          %308 = vst [vmem:[#allocation2 + $0x70] sm:$0xff] 0.0
          %309 = vst [vmem:[#allocation2 + $0x78] sm:$0xff] 0.0
          %310 = vst [vmem:[#allocation2 + $0x80] sm:$0xff] 0.0
          %311 = vst [vmem:[#allocation2 + $0x88] sm:$0xff] 0.0
          %312 = vst [vmem:[#allocation2 + $0x90] sm:$0xff] 0.0
          %313 = vst [vmem:[#allocation2 + $0x98] sm:$0xff] 0.0
          %314 = vst [vmem:[#allocation2 + $0xa0] sm:$0xff] 0.0
          %315 = vst [vmem:[#allocation2 + $0xa8] sm:$0xff] 0.0
          %316 = vst [vmem:[#allocation2 + $0xb0] sm:$0xff] 0.0
          %317 = vst [vmem:[#allocation2 + $0xb8] sm:$0xff] 0.0
          %318 = vst [vmem:[#allocation2 + $0xc0] sm:$0xff] 0.0
          %319 = vst [vmem:[#allocation2 + $0xc8] sm:$0xff] 0.0
          %320 = vst [vmem:[#allocation2 + $0xd0] sm:$0xff] 0.0
          %321 = vst [vmem:[#allocation2 + $0xd8] sm:$0xff] 0.0
          %322 = vst [vmem:[#allocation2 + $0xe0] sm:$0xff] 0.0
          %323 = vst [vmem:[#allocation2 + $0xe8] sm:$0xff] 0.0
          %324 = vst [vmem:[#allocation2 + $0xf0] sm:$0xff] 0.0
          %325 = vst [vmem:[#allocation2 + $0xf8] sm:$0xff] 0.0
        $region52: #{gcn_forward.4} parent=35 // pred_fallthru
          _
        %s326 = sld [smem:[#allocation5 + %s35]]
        %p327 = scmp.lt.s32.totalorder %s36, %s326
        // Predicated region
        $region53: #{gcn_forward.4} parent=35 // pred_check
          %p328 = pneg %p327
        $region54: #{gcn_forward.4} parent=35 // pred_check_branch
          %330 = sbr.rel (%p328) target = $region56
        $region55: #{gcn_forward.4} parent=35 // pred_region
          %s331 = smul.u32 %s35, 2
          %s332 = sadd.s32 %s331, %s36
          %s333 = sld [smem:[#allocation4 + %s332]]
          %s334 = smul.u32 %s333, 256
          %s335 = sshra.s32 %s334, 3
          %s336 = sand.u32 %s334, 7
          %s337 = smul.addr %s335, 4
          %s338 = scalar_lea.vmem %s3, %s337
          %v339 = vld [vmem:[%s338] sm:$0xf]
          %v340 = vld [vmem:[%s338 + $0x4] sm:$0xf]
          %v341 = vld [vmem:[%s338 + $0x8] sm:$0xf]
          %v342 = vld [vmem:[%s338 + $0xc] sm:$0xf]
          %v343 = vld [vmem:[%s338 + $0x10] sm:$0xf]
          %v344 = vld [vmem:[%s338 + $0x14] sm:$0xf]
          %v345 = vld [vmem:[%s338 + $0x18] sm:$0xf]
          %v346 = vld [vmem:[%s338 + $0x1c] sm:$0xf]
          %v347 = vld [vmem:[%s338 + $0x20] sm:$0xf]
          %v348 = vld [vmem:[%s338 + $0x24] sm:$0xf]
          %v349 = vld [vmem:[%s338 + $0x28] sm:$0xf]
          %v350 = vld [vmem:[%s338 + $0x2c] sm:$0xf]
          %v351 = vld [vmem:[%s338 + $0x30] sm:$0xf]
          %v352 = vld [vmem:[%s338 + $0x34] sm:$0xf]
          %v353 = vld [vmem:[%s338 + $0x38] sm:$0xf]
          %v354 = vld [vmem:[%s338 + $0x3c] sm:$0xf]
          %v355 = vld [vmem:[%s338 + $0x40] sm:$0xf]
          %v356 = vld [vmem:[%s338 + $0x44] sm:$0xf]
          %v357 = vld [vmem:[%s338 + $0x48] sm:$0xf]
          %v358 = vld [vmem:[%s338 + $0x4c] sm:$0xf]
          %v359 = vld [vmem:[%s338 + $0x50] sm:$0xf]
          %v360 = vld [vmem:[%s338 + $0x54] sm:$0xf]
          %v361 = vld [vmem:[%s338 + $0x58] sm:$0xf]
          %v362 = vld [vmem:[%s338 + $0x5c] sm:$0xf]
          %v363 = vld [vmem:[%s338 + $0x60] sm:$0xf]
          %v364 = vld [vmem:[%s338 + $0x64] sm:$0xf]
          %v365 = vld [vmem:[%s338 + $0x68] sm:$0xf]
          %v366 = vld [vmem:[%s338 + $0x6c] sm:$0xf]
          %v367 = vld [vmem:[%s338 + $0x70] sm:$0xf]
          %v368 = vld [vmem:[%s338 + $0x74] sm:$0xf]
          %v369 = vld [vmem:[%s338 + $0x78] sm:$0xf]
          %v370 = vld [vmem:[%s338 + $0x7c] sm:$0xf]
          %v371 = vld [vmem:[#allocation2] sm:$0xff]
          %v372 = vld [vmem:[#allocation2 + $0x8] sm:$0xff]
          %v373 = vld [vmem:[#allocation2 + $0x10] sm:$0xff]
          %v374 = vld [vmem:[#allocation2 + $0x18] sm:$0xff]
          %v375 = vld [vmem:[#allocation2 + $0x20] sm:$0xff]
          %v376 = vld [vmem:[#allocation2 + $0x28] sm:$0xff]
          %v377 = vld [vmem:[#allocation2 + $0x30] sm:$0xff]
          %v378 = vld [vmem:[#allocation2 + $0x38] sm:$0xff]
          %v379 = vld [vmem:[#allocation2 + $0x40] sm:$0xff]
          %v380 = vld [vmem:[#allocation2 + $0x48] sm:$0xff]
          %v381 = vld [vmem:[#allocation2 + $0x50] sm:$0xff]
          %v382 = vld [vmem:[#allocation2 + $0x58] sm:$0xff]
          %v383 = vld [vmem:[#allocation2 + $0x60] sm:$0xff]
          %v384 = vld [vmem:[#allocation2 + $0x68] sm:$0xff]
          %v385 = vld [vmem:[#allocation2 + $0x70] sm:$0xff]
          %v386 = vld [vmem:[#allocation2 + $0x78] sm:$0xff]
          %v387 = vld [vmem:[#allocation2 + $0x80] sm:$0xff]
          %v388 = vld [vmem:[#allocation2 + $0x88] sm:$0xff]
          %v389 = vld [vmem:[#allocation2 + $0x90] sm:$0xff]
          %v390 = vld [vmem:[#allocation2 + $0x98] sm:$0xff]
          %v391 = vld [vmem:[#allocation2 + $0xa0] sm:$0xff]
          %v392 = vld [vmem:[#allocation2 + $0xa8] sm:$0xff]
          %v393 = vld [vmem:[#allocation2 + $0xb0] sm:$0xff]
          %v394 = vld [vmem:[#allocation2 + $0xb8] sm:$0xff]
          %v395 = vld [vmem:[#allocation2 + $0xc0] sm:$0xff]
          %v396 = vld [vmem:[#allocation2 + $0xc8] sm:$0xff]
          %v397 = vld [vmem:[#allocation2 + $0xd0] sm:$0xff]
          %v398 = vld [vmem:[#allocation2 + $0xd8] sm:$0xff]
          %v399 = vld [vmem:[#allocation2 + $0xe0] sm:$0xff]
          %v400 = vld [vmem:[#allocation2 + $0xe8] sm:$0xff]
          %v401 = vld [vmem:[#allocation2 + $0xf0] sm:$0xff]
          %v402 = vld [vmem:[#allocation2 + $0xf8] sm:$0xff]
          %v403 = vld [vmem:[%s245] sm:$0xff]
          %v404 = vld [vmem:[%s245 + $0x8] sm:$0xff]
          %v405 = vld [vmem:[%s245 + $0x10] sm:$0xff]
          %v406 = vld [vmem:[%s245 + $0x18] sm:$0xff]
          %v407 = vld [vmem:[%s245 + $0x20] sm:$0xff]
          %v408 = vld [vmem:[%s245 + $0x28] sm:$0xff]
          %v409 = vld [vmem:[%s245 + $0x30] sm:$0xff]
          %v410 = vld [vmem:[%s245 + $0x38] sm:$0xff]
          %v411 = vld [vmem:[%s245 + $0x40] sm:$0xff]
          %v412 = vld [vmem:[%s245 + $0x48] sm:$0xff]
          %v413 = vld [vmem:[%s245 + $0x50] sm:$0xff]
          %v414 = vld [vmem:[%s245 + $0x58] sm:$0xff]
          %v415 = vld [vmem:[%s245 + $0x60] sm:$0xff]
          %v416 = vld [vmem:[%s245 + $0x68] sm:$0xff]
          %v417 = vld [vmem:[%s245 + $0x70] sm:$0xff]
          %v418 = vld [vmem:[%s245 + $0x78] sm:$0xff]
          %v419 = vld [vmem:[%s245 + $0x80] sm:$0xff]
          %v420 = vld [vmem:[%s245 + $0x88] sm:$0xff]
          %v421 = vld [vmem:[%s245 + $0x90] sm:$0xff]
          %v422 = vld [vmem:[%s245 + $0x98] sm:$0xff]
          %v423 = vld [vmem:[%s245 + $0xa0] sm:$0xff]
          %v424 = vld [vmem:[%s245 + $0xa8] sm:$0xff]
          %v425 = vld [vmem:[%s245 + $0xb0] sm:$0xff]
          %v426 = vld [vmem:[%s245 + $0xb8] sm:$0xff]
          %v427 = vld [vmem:[%s245 + $0xc0] sm:$0xff]
          %v428 = vld [vmem:[%s245 + $0xc8] sm:$0xff]
          %v429 = vld [vmem:[%s245 + $0xd0] sm:$0xff]
          %v430 = vld [vmem:[%s245 + $0xd8] sm:$0xff]
          %v431 = vld [vmem:[%s245 + $0xe0] sm:$0xff]
          %v432 = vld [vmem:[%s245 + $0xe8] sm:$0xff]
          %v433 = vld [vmem:[%s245 + $0xf0] sm:$0xff]
          %v434 = vld [vmem:[%s245 + $0xf8] sm:$0xff]
          %v467 = vunpack.c.l.b16 %v403
          %v468 = vunpack.c.h.b16 %v403
          %v469 = vunpack.c.l.b16 %v404
          %v470 = vunpack.c.h.b16 %v404
          %v471 = vunpack.c.l.b16 %v405
          %v472 = vunpack.c.h.b16 %v405
          %v473 = vunpack.c.l.b16 %v406
          %v474 = vunpack.c.h.b16 %v406
          %v475 = vunpack.c.l.b16 %v407
          %v476 = vunpack.c.h.b16 %v407
          %v477 = vunpack.c.l.b16 %v408
          %v478 = vunpack.c.h.b16 %v408
          %v479 = vunpack.c.l.b16 %v409
          %v480 = vunpack.c.h.b16 %v409
          %v481 = vunpack.c.l.b16 %v410
          %v482 = vunpack.c.h.b16 %v410
          %v483 = vunpack.c.l.b16 %v411
          %v484 = vunpack.c.h.b16 %v411
          %v485 = vunpack.c.l.b16 %v412
          %v486 = vunpack.c.h.b16 %v412
          %v487 = vunpack.c.l.b16 %v413
          %v488 = vunpack.c.h.b16 %v413
          %v489 = vunpack.c.l.b16 %v414
          %v490 = vunpack.c.h.b16 %v414
          %v491 = vunpack.c.l.b16 %v415
          %v492 = vunpack.c.h.b16 %v415
          %v493 = vunpack.c.l.b16 %v416
          %v494 = vunpack.c.h.b16 %v416
          %v495 = vunpack.c.l.b16 %v417
          %v496 = vunpack.c.h.b16 %v417
          %v497 = vunpack.c.l.b16 %v418
          %v498 = vunpack.c.h.b16 %v418
          %v499 = vunpack.c.l.b16 %v419
          %v500 = vunpack.c.h.b16 %v419
          %v501 = vunpack.c.l.b16 %v420
          %v502 = vunpack.c.h.b16 %v420
          %v503 = vunpack.c.l.b16 %v421
          %v504 = vunpack.c.h.b16 %v421
          %v505 = vunpack.c.l.b16 %v422
          %v506 = vunpack.c.h.b16 %v422
          %v507 = vunpack.c.l.b16 %v423
          %v508 = vunpack.c.h.b16 %v423
          %v509 = vunpack.c.l.b16 %v424
          %v510 = vunpack.c.h.b16 %v424
          %v511 = vunpack.c.l.b16 %v425
          %v512 = vunpack.c.h.b16 %v425
          %v513 = vunpack.c.l.b16 %v426
          %v514 = vunpack.c.h.b16 %v426
          %v515 = vunpack.c.l.b16 %v427
          %v516 = vunpack.c.h.b16 %v427
          %v517 = vunpack.c.l.b16 %v428
          %v518 = vunpack.c.h.b16 %v428
          %v519 = vunpack.c.l.b16 %v429
          %v520 = vunpack.c.h.b16 %v429
          %v521 = vunpack.c.l.b16 %v430
          %v522 = vunpack.c.h.b16 %v430
          %v523 = vunpack.c.l.b16 %v431
          %v524 = vunpack.c.h.b16 %v431
          %v525 = vunpack.c.l.b16 %v432
          %v526 = vunpack.c.h.b16 %v432
          %v527 = vunpack.c.l.b16 %v433
          %v528 = vunpack.c.h.b16 %v433
          %v529 = vunpack.c.l.b16 %v434
          %v530 = vunpack.c.h.b16 %v434
          %v531 = vpack.c.b16 %v469, %v467
          %v532 = vpack.c.b16 %v470, %v468
          %v533 = vpack.c.b16 %v473, %v471
          %v534 = vpack.c.b16 %v474, %v472
          %v535 = vpack.c.b16 %v477, %v475
          %v536 = vpack.c.b16 %v478, %v476
          %v537 = vpack.c.b16 %v481, %v479
          %v538 = vpack.c.b16 %v482, %v480
          %v539 = vpack.c.b16 %v485, %v483
          %v540 = vpack.c.b16 %v486, %v484
          %v541 = vpack.c.b16 %v489, %v487
          %v542 = vpack.c.b16 %v490, %v488
          %v543 = vpack.c.b16 %v493, %v491
          %v544 = vpack.c.b16 %v494, %v492
          %v545 = vpack.c.b16 %v497, %v495
          %v546 = vpack.c.b16 %v498, %v496
          %v547 = vpack.c.b16 %v501, %v499
          %v548 = vpack.c.b16 %v502, %v500
          %v549 = vpack.c.b16 %v505, %v503
          %v550 = vpack.c.b16 %v506, %v504
          %v551 = vpack.c.b16 %v509, %v507
          %v552 = vpack.c.b16 %v510, %v508
          %v553 = vpack.c.b16 %v513, %v511
          %v554 = vpack.c.b16 %v514, %v512
          %v555 = vpack.c.b16 %v517, %v515
          %v556 = vpack.c.b16 %v518, %v516
          %v557 = vpack.c.b16 %v521, %v519
          %v558 = vpack.c.b16 %v522, %v520
          %v559 = vpack.c.b16 %v525, %v523
          %v560 = vpack.c.b16 %v526, %v524
          %v561 = vpack.c.b16 %v529, %v527
          %v562 = vpack.c.b16 %v530, %v528
          %v627 = vunpack.c.l.b16 %v339
          %v628 = vunpack.c.l.b16 %v340
          %v629 = vunpack.c.l.b16 %v341
          %v630 = vunpack.c.l.b16 %v342
          %v631 = vunpack.c.l.b16 %v343
          %v632 = vunpack.c.l.b16 %v344
          %v633 = vunpack.c.l.b16 %v345
          %v634 = vunpack.c.l.b16 %v346
          %v635 = vunpack.c.l.b16 %v347
          %v636 = vunpack.c.l.b16 %v348
          %v637 = vunpack.c.l.b16 %v349
          %v638 = vunpack.c.l.b16 %v350
          %v639 = vunpack.c.l.b16 %v351
          %v640 = vunpack.c.l.b16 %v352
          %v641 = vunpack.c.l.b16 %v353
          %v642 = vunpack.c.l.b16 %v354
          %v643 = vunpack.c.l.b16 %v355
          %v644 = vunpack.c.l.b16 %v356
          %v645 = vunpack.c.l.b16 %v357
          %v646 = vunpack.c.l.b16 %v358
          %v647 = vunpack.c.l.b16 %v359
          %v648 = vunpack.c.l.b16 %v360
          %v649 = vunpack.c.l.b16 %v361
          %v650 = vunpack.c.l.b16 %v362
          %v651 = vunpack.c.l.b16 %v363
          %v652 = vunpack.c.l.b16 %v364
          %v653 = vunpack.c.l.b16 %v365
          %v654 = vunpack.c.l.b16 %v366
          %v655 = vunpack.c.l.b16 %v367
          %v656 = vunpack.c.l.b16 %v368
          %v657 = vunpack.c.l.b16 %v369
          %v658 = vunpack.c.l.b16 %v370
          %v659 = vpack.c.b16 %v628, %v627
          %v660 = vpack.c.b16 %v630, %v629
          %v661 = vpack.c.b16 %v632, %v631
          %v662 = vpack.c.b16 %v634, %v633
          %v663 = vpack.c.b16 %v636, %v635
          %v664 = vpack.c.b16 %v638, %v637
          %v665 = vpack.c.b16 %v640, %v639
          %v666 = vpack.c.b16 %v642, %v641
          %v667 = vpack.c.b16 %v644, %v643
          %v668 = vpack.c.b16 %v646, %v645
          %v669 = vpack.c.b16 %v648, %v647
          %v670 = vpack.c.b16 %v650, %v649
          %v671 = vpack.c.b16 %v652, %v651
          %v672 = vpack.c.b16 %v654, %v653
          %v673 = vpack.c.b16 %v656, %v655
          %v674 = vpack.c.b16 %v658, %v657
          %691 = vmatprep.subr.bf16.mxu0 0
          %692 = vmatpush1.bf16.msra.mxu0 %v666
          %693 = vmatprep.subr.bf16.mxu0 0
          %694 = vmatpush1.bf16.msra.mxu0 %v665
          %695 = vmatprep.subr.bf16.mxu0 0
          %696 = vmatpush1.bf16.msra.mxu0 %v664
          %697 = vmatprep.subr.bf16.mxu0 0
          %698 = vmatpush1.bf16.msra.mxu0 %v663
          %699 = vmatprep.subr.bf16.mxu0 0
          %700 = vmatpush1.bf16.msra.mxu0 %v662
          %701 = vmatprep.subr.bf16.mxu0 0
          %702 = vmatpush1.bf16.msra.mxu0 %v661
          %703 = vmatprep.subr.bf16.mxu0 0
          %704 = vmatpush1.bf16.msra.mxu0 %v660
          %705 = vmatprep.subr.bf16.mxu0 0
          %706 = vmatpush1.bf16.msra.mxu0 %v659
          %707 = vmatprep.subr.bf16.mxu0 0
          %708 = vmatpush2.bf16.msra.mxu0 %v674
          %709 = vmatprep.subr.bf16.mxu0 0
          %710 = vmatpush2.bf16.msra.mxu0 %v673
          %711 = vmatprep.subr.bf16.mxu0 0
          %712 = vmatpush2.bf16.msra.mxu0 %v672
          %713 = vmatprep.subr.bf16.mxu0 0
          %714 = vmatpush2.bf16.msra.mxu0 %v671
          %715 = vmatprep.subr.bf16.mxu0 0
          %716 = vmatpush2.bf16.msra.mxu0 %v670
          %717 = vmatprep.subr.bf16.mxu0 0
          %718 = vmatpush2.bf16.msra.mxu0 %v669
          %719 = vmatprep.subr.bf16.mxu0 0
          %720 = vmatpush2.bf16.msra.mxu0 %v668
          %721 = vmatprep.subr.bf16.mxu0 0
          %722 = vmatpush2.bf16.msra.mxu0 %v667
          %723 = vmatprep.mubr.bf16.mxu0 %v532
          %724 = vmatmul.mubr.bf16.gmra.mxu0 %v531
          %v725 = vpop.f32.mrf.mxu0
          %v726 = vadd.f32 0.0, %v725
          %v727 = vpop.f32.mrf.mxu0
          %v728 = vpop.f32.mrf.mxu0
          %v729 = vadd.f32 0.0, %v728
          %v730 = vpop.f32.mrf.mxu0
          %731 = vmatprep.mubr.bf16.mxu0 %v534
          %732 = vmatmul.mubr.bf16.gmra.mxu0 %v533
          %v733 = vpop.f32.mrf.mxu0
          %v734 = vadd.f32 0.0, %v733
          %v735 = vpop.f32.mrf.mxu0
          %v736 = vpop.f32.mrf.mxu0
          %v737 = vadd.f32 0.0, %v736
          %v738 = vpop.f32.mrf.mxu0
          %739 = vmatprep.mubr.bf16.mxu0 %v536
          %740 = vmatmul.mubr.bf16.gmra.mxu0 %v535
          %v741 = vpop.f32.mrf.mxu0
          %v742 = vadd.f32 0.0, %v741
          %v743 = vpop.f32.mrf.mxu0
          %v744 = vpop.f32.mrf.mxu0
          %v745 = vadd.f32 0.0, %v744
          %v746 = vpop.f32.mrf.mxu0
          %747 = vmatprep.mubr.bf16.mxu0 %v538
          %748 = vmatmul.mubr.bf16.gmra.mxu0 %v537
          %v749 = vpop.f32.mrf.mxu0
          %v750 = vadd.f32 0.0, %v749
          %v751 = vpop.f32.mrf.mxu0
          %v752 = vpop.f32.mrf.mxu0
          %v753 = vadd.f32 0.0, %v752
          %v754 = vpop.f32.mrf.mxu0
          %755 = vmatprep.mubr.bf16.mxu0 %v540
          %756 = vmatmul.mubr.bf16.gmra.mxu0 %v539
          %v757 = vpop.f32.mrf.mxu0
          %v758 = vadd.f32 0.0, %v757
          %v759 = vpop.f32.mrf.mxu0
          %v760 = vpop.f32.mrf.mxu0
          %v761 = vadd.f32 0.0, %v760
          %v762 = vpop.f32.mrf.mxu0
          %763 = vmatprep.mubr.bf16.mxu0 %v542
          %764 = vmatmul.mubr.bf16.gmra.mxu0 %v541
          %v765 = vpop.f32.mrf.mxu0
          %v766 = vadd.f32 0.0, %v765
          %v767 = vpop.f32.mrf.mxu0
          %v768 = vpop.f32.mrf.mxu0
          %v769 = vadd.f32 0.0, %v768
          %v770 = vpop.f32.mrf.mxu0
          %771 = vmatprep.mubr.bf16.mxu0 %v544
          %772 = vmatmul.mubr.bf16.gmra.mxu0 %v543
          %v773 = vpop.f32.mrf.mxu0
          %v774 = vadd.f32 0.0, %v773
          %v775 = vpop.f32.mrf.mxu0
          %v776 = vpop.f32.mrf.mxu0
          %v777 = vadd.f32 0.0, %v776
          %v778 = vpop.f32.mrf.mxu0
          %779 = vmatprep.mubr.bf16.mxu0 %v546
          %780 = vmatmul.mubr.bf16.gmra.mxu0 %v545
          %v781 = vpop.f32.mrf.mxu0
          %v782 = vadd.f32 0.0, %v781
          %v783 = vpop.f32.mrf.mxu0
          %v784 = vpop.f32.mrf.mxu0
          %v785 = vadd.f32 0.0, %v784
          %v786 = vpop.f32.mrf.mxu0
          %787 = vmatprep.mubr.bf16.mxu0 %v548
          %788 = vmatmul.mubr.bf16.gmra.mxu0 %v547
          %v789 = vpop.f32.mrf.mxu0
          %v790 = vadd.f32 0.0, %v789
          %v791 = vpop.f32.mrf.mxu0
          %v792 = vpop.f32.mrf.mxu0
          %v793 = vadd.f32 0.0, %v792
          %v794 = vpop.f32.mrf.mxu0
          %795 = vmatprep.mubr.bf16.mxu0 %v550
          %796 = vmatmul.mubr.bf16.gmra.mxu0 %v549
          %v797 = vpop.f32.mrf.mxu0
          %v798 = vadd.f32 0.0, %v797
          %v799 = vpop.f32.mrf.mxu0
          %v800 = vpop.f32.mrf.mxu0
          %v801 = vadd.f32 0.0, %v800
          %v802 = vpop.f32.mrf.mxu0
          %803 = vmatprep.mubr.bf16.mxu0 %v552
          %804 = vmatmul.mubr.bf16.gmra.mxu0 %v551
          %v805 = vpop.f32.mrf.mxu0
          %v806 = vadd.f32 0.0, %v805
          %v807 = vpop.f32.mrf.mxu0
          %v808 = vpop.f32.mrf.mxu0
          %v809 = vadd.f32 0.0, %v808
          %v810 = vpop.f32.mrf.mxu0
          %811 = vmatprep.mubr.bf16.mxu0 %v554
          %812 = vmatmul.mubr.bf16.gmra.mxu0 %v553
          %v813 = vpop.f32.mrf.mxu0
          %v814 = vadd.f32 0.0, %v813
          %v815 = vpop.f32.mrf.mxu0
          %v816 = vpop.f32.mrf.mxu0
          %v817 = vadd.f32 0.0, %v816
          %v818 = vpop.f32.mrf.mxu0
          %819 = vmatprep.mubr.bf16.mxu0 %v556
          %820 = vmatmul.mubr.bf16.gmra.mxu0 %v555
          %v821 = vpop.f32.mrf.mxu0
          %v822 = vadd.f32 0.0, %v821
          %v823 = vpop.f32.mrf.mxu0
          %v824 = vpop.f32.mrf.mxu0
          %v825 = vadd.f32 0.0, %v824
          %v826 = vpop.f32.mrf.mxu0
          %827 = vmatprep.mubr.bf16.mxu0 %v558
          %828 = vmatmul.mubr.bf16.gmra.mxu0 %v557
          %v829 = vpop.f32.mrf.mxu0
          %v830 = vadd.f32 0.0, %v829
          %v831 = vpop.f32.mrf.mxu0
          %v832 = vpop.f32.mrf.mxu0
          %v833 = vadd.f32 0.0, %v832
          %v834 = vpop.f32.mrf.mxu0
          %835 = vmatprep.mubr.bf16.mxu0 %v560
          %836 = vmatmul.mubr.bf16.gmra.mxu0 %v559
          %v837 = vpop.f32.mrf.mxu0
          %v838 = vadd.f32 0.0, %v837
          %v839 = vpop.f32.mrf.mxu0
          %v840 = vpop.f32.mrf.mxu0
          %v841 = vadd.f32 0.0, %v840
          %v842 = vpop.f32.mrf.mxu0
          %843 = vmatprep.mubr.bf16.mxu0 %v562
          %844 = vmatmul.mubr.bf16.gmra.mxu0 %v561
          %v845 = vpop.f32.mrf.mxu0
          %v846 = vadd.f32 0.0, %v845
          %v847 = vpop.f32.mrf.mxu0
          %v848 = vpop.f32.mrf.mxu0
          %v849 = vadd.f32 0.0, %v848
          %v850 = vpop.f32.mrf.mxu0
          %851 = vdwg.mxu0
          %v852 = vadd.f32 %v371, %v726
          %v853 = vadd.f32 %v372, %v729
          %v854 = vadd.f32 %v373, %v734
          %v855 = vadd.f32 %v374, %v737
          %v856 = vadd.f32 %v375, %v742
          %v857 = vadd.f32 %v376, %v745
          %v858 = vadd.f32 %v377, %v750
          %v859 = vadd.f32 %v378, %v753
          %v860 = vadd.f32 %v379, %v758
          %v861 = vadd.f32 %v380, %v761
          %v862 = vadd.f32 %v381, %v766
          %v863 = vadd.f32 %v382, %v769
          %v864 = vadd.f32 %v383, %v774
          %v865 = vadd.f32 %v384, %v777
          %v866 = vadd.f32 %v385, %v782
          %v867 = vadd.f32 %v386, %v785
          %v868 = vadd.f32 %v387, %v790
          %v869 = vadd.f32 %v388, %v793
          %v870 = vadd.f32 %v389, %v798
          %v871 = vadd.f32 %v390, %v801
          %v872 = vadd.f32 %v391, %v806
          %v873 = vadd.f32 %v392, %v809
          %v874 = vadd.f32 %v393, %v814
          %v875 = vadd.f32 %v394, %v817
          %v876 = vadd.f32 %v395, %v822
          %v877 = vadd.f32 %v396, %v825
          %v878 = vadd.f32 %v397, %v830
          %v879 = vadd.f32 %v398, %v833
          %v880 = vadd.f32 %v399, %v838
          %v881 = vadd.f32 %v400, %v841
          %v882 = vadd.f32 %v401, %v846
          %v883 = vadd.f32 %v402, %v849
          %884 = vst [vmem:[#allocation2] sm:$0xff] %v852
          %885 = vst [vmem:[#allocation2 + $0x8] sm:$0xff] %v853
          %886 = vst [vmem:[#allocation2 + $0x10] sm:$0xff] %v854
          %887 = vst [vmem:[#allocation2 + $0x18] sm:$0xff] %v855
          %888 = vst [vmem:[#allocation2 + $0x20] sm:$0xff] %v856
          %889 = vst [vmem:[#allocation2 + $0x28] sm:$0xff] %v857
          %890 = vst [vmem:[#allocation2 + $0x30] sm:$0xff] %v858
          %891 = vst [vmem:[#allocation2 + $0x38] sm:$0xff] %v859
          %892 = vst [vmem:[#allocation2 + $0x40] sm:$0xff] %v860
          %893 = vst [vmem:[#allocation2 + $0x48] sm:$0xff] %v861
          %894 = vst [vmem:[#allocation2 + $0x50] sm:$0xff] %v862
          %895 = vst [vmem:[#allocation2 + $0x58] sm:$0xff] %v863
          %896 = vst [vmem:[#allocation2 + $0x60] sm:$0xff] %v864
          %897 = vst [vmem:[#allocation2 + $0x68] sm:$0xff] %v865
          %898 = vst [vmem:[#allocation2 + $0x70] sm:$0xff] %v866
          %899 = vst [vmem:[#allocation2 + $0x78] sm:$0xff] %v867
          %900 = vst [vmem:[#allocation2 + $0x80] sm:$0xff] %v868
          %901 = vst [vmem:[#allocation2 + $0x88] sm:$0xff] %v869
          %902 = vst [vmem:[#allocation2 + $0x90] sm:$0xff] %v870
          %903 = vst [vmem:[#allocation2 + $0x98] sm:$0xff] %v871
          %904 = vst [vmem:[#allocation2 + $0xa0] sm:$0xff] %v872
          %905 = vst [vmem:[#allocation2 + $0xa8] sm:$0xff] %v873
          %906 = vst [vmem:[#allocation2 + $0xb0] sm:$0xff] %v874
          %907 = vst [vmem:[#allocation2 + $0xb8] sm:$0xff] %v875
          %908 = vst [vmem:[#allocation2 + $0xc0] sm:$0xff] %v876
          %909 = vst [vmem:[#allocation2 + $0xc8] sm:$0xff] %v877
          %910 = vst [vmem:[#allocation2 + $0xd0] sm:$0xff] %v878
          %911 = vst [vmem:[#allocation2 + $0xd8] sm:$0xff] %v879
          %912 = vst [vmem:[#allocation2 + $0xe0] sm:$0xff] %v880
          %913 = vst [vmem:[#allocation2 + $0xe8] sm:$0xff] %v881
          %914 = vst [vmem:[#allocation2 + $0xf0] sm:$0xff] %v882
          %915 = vst [vmem:[#allocation2 + $0xf8] sm:$0xff] %v883
        $region56: #{gcn_forward.4} parent=35 // pred_fallthru
          _
        %p916 = scmp.eq.s32.totalorder %s36, 1
        // Predicated region
        $region57: #{gcn_forward.4} parent=35 // pred_check
          %p917 = pneg %p916
        $region58: #{gcn_forward.4} parent=35 // pred_check_branch
          %919 = sbr.rel (%p917) target = $region60
        $region59: #{gcn_forward.4} parent=35 // pred_region
          %v920 = vld [vmem:[#allocation2] sm:$0xff]
          %v921 = vld [vmem:[#allocation2 + $0x8] sm:$0xff]
          %v922 = vld [vmem:[#allocation2 + $0x10] sm:$0xff]
          %v923 = vld [vmem:[#allocation2 + $0x18] sm:$0xff]
          %v924 = vld [vmem:[#allocation2 + $0x20] sm:$0xff]
          %v925 = vld [vmem:[#allocation2 + $0x28] sm:$0xff]
          %v926 = vld [vmem:[#allocation2 + $0x30] sm:$0xff]
          %v927 = vld [vmem:[#allocation2 + $0x38] sm:$0xff]
          %v928 = vld [vmem:[#allocation2 + $0x40] sm:$0xff]
          %v929 = vld [vmem:[#allocation2 + $0x48] sm:$0xff]
          %v930 = vld [vmem:[#allocation2 + $0x50] sm:$0xff]
          %v931 = vld [vmem:[#allocation2 + $0x58] sm:$0xff]
          %v932 = vld [vmem:[#allocation2 + $0x60] sm:$0xff]
          %v933 = vld [vmem:[#allocation2 + $0x68] sm:$0xff]
          %v934 = vld [vmem:[#allocation2 + $0x70] sm:$0xff]
          %v935 = vld [vmem:[#allocation2 + $0x78] sm:$0xff]
          %v936 = vld [vmem:[#allocation2 + $0x80] sm:$0xff]
          %v937 = vld [vmem:[#allocation2 + $0x88] sm:$0xff]
          %v938 = vld [vmem:[#allocation2 + $0x90] sm:$0xff]
          %v939 = vld [vmem:[#allocation2 + $0x98] sm:$0xff]
          %v940 = vld [vmem:[#allocation2 + $0xa0] sm:$0xff]
          %v941 = vld [vmem:[#allocation2 + $0xa8] sm:$0xff]
          %v942 = vld [vmem:[#allocation2 + $0xb0] sm:$0xff]
          %v943 = vld [vmem:[#allocation2 + $0xb8] sm:$0xff]
          %v944 = vld [vmem:[#allocation2 + $0xc0] sm:$0xff]
          %v945 = vld [vmem:[#allocation2 + $0xc8] sm:$0xff]
          %v946 = vld [vmem:[#allocation2 + $0xd0] sm:$0xff]
          %v947 = vld [vmem:[#allocation2 + $0xd8] sm:$0xff]
          %v948 = vld [vmem:[#allocation2 + $0xe0] sm:$0xff]
          %v949 = vld [vmem:[#allocation2 + $0xe8] sm:$0xff]
          %v950 = vld [vmem:[#allocation2 + $0xf0] sm:$0xff]
          %v951 = vld [vmem:[#allocation2 + $0xf8] sm:$0xff]
          %v952 = vld [vmem:[#allocation8] sm:$0x1]
          %v954 = vlaneseq
          %v955 = vshrl.u32 %v954, 7
          %v956 = vsub.s32 0, %v955
          %v957 = vrot.slane %v952, %v956
          %v959 = vadd.f32 %v920, %v957
          %v960 = vadd.f32 %v921, %v957
          %v961 = vadd.f32 %v922, %v957
          %v962 = vadd.f32 %v923, %v957
          %v963 = vadd.f32 %v924, %v957
          %v964 = vadd.f32 %v925, %v957
          %v965 = vadd.f32 %v926, %v957
          %v966 = vadd.f32 %v927, %v957
          %v967 = vadd.f32 %v928, %v957
          %v968 = vadd.f32 %v929, %v957
          %v969 = vadd.f32 %v930, %v957
          %v970 = vadd.f32 %v931, %v957
          %v971 = vadd.f32 %v932, %v957
          %v972 = vadd.f32 %v933, %v957
          %v973 = vadd.f32 %v934, %v957
          %v974 = vadd.f32 %v935, %v957
          %v975 = vadd.f32 %v936, %v957
          %v976 = vadd.f32 %v937, %v957
          %v977 = vadd.f32 %v938, %v957
          %v978 = vadd.f32 %v939, %v957
          %v979 = vadd.f32 %v940, %v957
          %v980 = vadd.f32 %v941, %v957
          %v981 = vadd.f32 %v942, %v957
          %v982 = vadd.f32 %v943, %v957
          %v983 = vadd.f32 %v944, %v957
          %v984 = vadd.f32 %v945, %v957
          %v985 = vadd.f32 %v946, %v957
          %v986 = vadd.f32 %v947, %v957
          %v987 = vadd.f32 %v948, %v957
          %v988 = vadd.f32 %v949, %v957
          %v989 = vadd.f32 %v950, %v957
          %v990 = vadd.f32 %v951, %v957
          %v991 = vmax.f32 %v959, 0.0
          %v992 = vmax.f32 %v960, 0.0
          %v993 = vmax.f32 %v961, 0.0
          %v994 = vmax.f32 %v962, 0.0
          %v995 = vmax.f32 %v963, 0.0
          %v996 = vmax.f32 %v964, 0.0
          %v997 = vmax.f32 %v965, 0.0
          %v998 = vmax.f32 %v966, 0.0
          %v999 = vmax.f32 %v967, 0.0
          %v1000 = vmax.f32 %v968, 0.0
          %v1001 = vmax.f32 %v969, 0.0
          %v1002 = vmax.f32 %v970, 0.0
          %v1003 = vmax.f32 %v971, 0.0
          %v1004 = vmax.f32 %v972, 0.0
          %v1005 = vmax.f32 %v973, 0.0
          %v1006 = vmax.f32 %v974, 0.0
          %v1007 = vmax.f32 %v975, 0.0
          %v1008 = vmax.f32 %v976, 0.0
          %v1009 = vmax.f32 %v977, 0.0
          %v1010 = vmax.f32 %v978, 0.0
          %v1011 = vmax.f32 %v979, 0.0
          %v1012 = vmax.f32 %v980, 0.0
          %v1013 = vmax.f32 %v981, 0.0
          %v1014 = vmax.f32 %v982, 0.0
          %v1015 = vmax.f32 %v983, 0.0
          %v1016 = vmax.f32 %v984, 0.0
          %v1017 = vmax.f32 %v985, 0.0
          %v1018 = vmax.f32 %v986, 0.0
          %v1019 = vmax.f32 %v987, 0.0
          %v1020 = vmax.f32 %v988, 0.0
          %v1021 = vmax.f32 %v989, 0.0
          %v1022 = vmax.f32 %v990, 0.0
          %v1023 = vpack.c.bf16 %v992, %v991
          %v1024 = vpack.c.bf16 %v994, %v993
          %v1025 = vpack.c.bf16 %v996, %v995
          %v1026 = vpack.c.bf16 %v998, %v997
          %v1027 = vpack.c.bf16 %v1000, %v999
          %v1028 = vpack.c.bf16 %v1002, %v1001
          %v1029 = vpack.c.bf16 %v1004, %v1003
          %v1030 = vpack.c.bf16 %v1006, %v1005
          %v1031 = vpack.c.bf16 %v1008, %v1007
          %v1032 = vpack.c.bf16 %v1010, %v1009
          %v1033 = vpack.c.bf16 %v1012, %v1011
          %v1034 = vpack.c.bf16 %v1014, %v1013
          %v1035 = vpack.c.bf16 %v1016, %v1015
          %v1036 = vpack.c.bf16 %v1018, %v1017
          %v1037 = vpack.c.bf16 %v1020, %v1019
          %v1038 = vpack.c.bf16 %v1022, %v1021
          %v1039 = vld [vmem:[#allocation10] sm:$0xf]
          %v1040 = vld [vmem:[#allocation10 + $0x4] sm:$0xf]
          %v1041 = vld [vmem:[#allocation10 + $0x8] sm:$0xf]
          %v1042 = vld [vmem:[#allocation10 + $0xc] sm:$0xf]
          %v1043 = vld [vmem:[#allocation10 + $0x10] sm:$0xf]
          %v1044 = vld [vmem:[#allocation10 + $0x14] sm:$0xf]
          %v1045 = vld [vmem:[#allocation10 + $0x18] sm:$0xf]
          %v1046 = vld [vmem:[#allocation10 + $0x1c] sm:$0xf]
          %v1047 = vld [vmem:[#allocation10 + $0x20] sm:$0xf]
          %v1048 = vld [vmem:[#allocation10 + $0x24] sm:$0xf]
          %v1049 = vld [vmem:[#allocation10 + $0x28] sm:$0xf]
          %v1050 = vld [vmem:[#allocation10 + $0x2c] sm:$0xf]
          %v1051 = vld [vmem:[#allocation10 + $0x30] sm:$0xf]
          %v1052 = vld [vmem:[#allocation10 + $0x34] sm:$0xf]
          %v1053 = vld [vmem:[#allocation10 + $0x38] sm:$0xf]
          %v1054 = vld [vmem:[#allocation10 + $0x3c] sm:$0xf]
          %v1071 = vunpack.c.l.b16 %v1039
          %v1072 = vunpack.c.l.b16 %v1040
          %v1073 = vunpack.c.l.b16 %v1041
          %v1074 = vunpack.c.l.b16 %v1042
          %v1075 = vunpack.c.l.b16 %v1043
          %v1076 = vunpack.c.l.b16 %v1044
          %v1077 = vunpack.c.l.b16 %v1045
          %v1078 = vunpack.c.l.b16 %v1046
          %v1079 = vunpack.c.l.b16 %v1047
          %v1080 = vunpack.c.l.b16 %v1048
          %v1081 = vunpack.c.l.b16 %v1049
          %v1082 = vunpack.c.l.b16 %v1050
          %v1083 = vunpack.c.l.b16 %v1051
          %v1084 = vunpack.c.l.b16 %v1052
          %v1085 = vunpack.c.l.b16 %v1053
          %v1086 = vunpack.c.l.b16 %v1054
          %v1087 = vpack.c.b16 %v1072, %v1071
          %v1088 = vpack.c.b16 %v1074, %v1073
          %v1089 = vpack.c.b16 %v1076, %v1075
          %v1090 = vpack.c.b16 %v1078, %v1077
          %v1091 = vpack.c.b16 %v1080, %v1079
          %v1092 = vpack.c.b16 %v1082, %v1081
          %v1093 = vpack.c.b16 %v1084, %v1083
          %v1094 = vpack.c.b16 %v1086, %v1085
          %1103 = vmatprep.subr.bf16.mxu0 0
          %1104 = vmatpush1.bf16.msra.mxu0 %v1094
          %1105 = vmatprep.subr.bf16.mxu0 0
          %1106 = vmatpush1.bf16.msra.mxu0 %v1093
          %1107 = vmatprep.subr.bf16.mxu0 0
          %1108 = vmatpush1.bf16.msra.mxu0 %v1092
          %1109 = vmatprep.subr.bf16.mxu0 0
          %1110 = vmatpush1.bf16.msra.mxu0 %v1091
          %1111 = vmatprep.subr.bf16.mxu0 0
          %1112 = vmatpush1.bf16.msra.mxu0 %v1090
          %1113 = vmatprep.subr.bf16.mxu0 0
          %1114 = vmatpush1.bf16.msra.mxu0 %v1089
          %1115 = vmatprep.subr.bf16.mxu0 0
          %1116 = vmatpush1.bf16.msra.mxu0 %v1088
          %1117 = vmatprep.subr.bf16.mxu0 0
          %1118 = vmatpush1.bf16.msra.mxu0 %v1087
          %1119 = vmatprep.subr.bf16.mxu0 0
          %1120 = vmatpush2.bf16.msra.mxu0 0
          %1121 = vmatprep.subr.bf16.mxu0 0
          %1122 = vmatpush2.bf16.msra.mxu0 0
          %1123 = vmatprep.subr.bf16.mxu0 0
          %1124 = vmatpush2.bf16.msra.mxu0 0
          %1125 = vmatprep.subr.bf16.mxu0 0
          %1126 = vmatpush2.bf16.msra.mxu0 0
          %1127 = vmatprep.subr.bf16.mxu0 0
          %1128 = vmatpush2.bf16.msra.mxu0 0
          %1129 = vmatprep.subr.bf16.mxu0 0
          %1130 = vmatpush2.bf16.msra.mxu0 0
          %1131 = vmatprep.subr.bf16.mxu0 0
          %1132 = vmatpush2.bf16.msra.mxu0 0
          %1133 = vmatprep.subr.bf16.mxu0 0
          %1134 = vmatpush2.bf16.msra.mxu0 0
          %1135 = vmatprep.mubr.bf16.mxu0 0
          %1136 = vmatmul.mubr.bf16.gmra.mxu0 %v1023
          %v1137 = vpop.f32.mrf.mxu0
          %v1138 = vadd.f32 0.0, %v1137
          %v1139 = vpop.f32.mrf.mxu0
          %v1140 = vpop.f32.mrf.mxu0
          %v1141 = vadd.f32 0.0, %v1140
          %v1142 = vpop.f32.mrf.mxu0
          %1143 = vmatprep.mubr.bf16.mxu0 0
          %1144 = vmatmul.mubr.bf16.gmra.mxu0 %v1024
          %v1145 = vpop.f32.mrf.mxu0
          %v1146 = vadd.f32 0.0, %v1145
          %v1147 = vpop.f32.mrf.mxu0
          %v1148 = vpop.f32.mrf.mxu0
          %v1149 = vadd.f32 0.0, %v1148
          %v1150 = vpop.f32.mrf.mxu0
          %1151 = vmatprep.mubr.bf16.mxu0 0
          %1152 = vmatmul.mubr.bf16.gmra.mxu0 %v1025
          %v1153 = vpop.f32.mrf.mxu0
          %v1154 = vadd.f32 0.0, %v1153
          %v1155 = vpop.f32.mrf.mxu0
          %v1156 = vpop.f32.mrf.mxu0
          %v1157 = vadd.f32 0.0, %v1156
          %v1158 = vpop.f32.mrf.mxu0
          %1159 = vmatprep.mubr.bf16.mxu0 0
          %1160 = vmatmul.mubr.bf16.gmra.mxu0 %v1026
          %v1161 = vpop.f32.mrf.mxu0
          %v1162 = vadd.f32 0.0, %v1161
          %v1163 = vpop.f32.mrf.mxu0
          %v1164 = vpop.f32.mrf.mxu0
          %v1165 = vadd.f32 0.0, %v1164
          %v1166 = vpop.f32.mrf.mxu0
          %1167 = vmatprep.mubr.bf16.mxu0 0
          %1168 = vmatmul.mubr.bf16.gmra.mxu0 %v1027
          %v1169 = vpop.f32.mrf.mxu0
          %v1170 = vadd.f32 0.0, %v1169
          %v1171 = vpop.f32.mrf.mxu0
          %v1172 = vpop.f32.mrf.mxu0
          %v1173 = vadd.f32 0.0, %v1172
          %v1174 = vpop.f32.mrf.mxu0
          %1175 = vmatprep.mubr.bf16.mxu0 0
          %1176 = vmatmul.mubr.bf16.gmra.mxu0 %v1028
          %v1177 = vpop.f32.mrf.mxu0
          %v1178 = vadd.f32 0.0, %v1177
          %v1179 = vpop.f32.mrf.mxu0
          %v1180 = vpop.f32.mrf.mxu0
          %v1181 = vadd.f32 0.0, %v1180
          %v1182 = vpop.f32.mrf.mxu0
          %1183 = vmatprep.mubr.bf16.mxu0 0
          %1184 = vmatmul.mubr.bf16.gmra.mxu0 %v1029
          %v1185 = vpop.f32.mrf.mxu0
          %v1186 = vadd.f32 0.0, %v1185
          %v1187 = vpop.f32.mrf.mxu0
          %v1188 = vpop.f32.mrf.mxu0
          %v1189 = vadd.f32 0.0, %v1188
          %v1190 = vpop.f32.mrf.mxu0
          %1191 = vmatprep.mubr.bf16.mxu0 0
          %1192 = vmatmul.mubr.bf16.gmra.mxu0 %v1030
          %v1193 = vpop.f32.mrf.mxu0
          %v1194 = vadd.f32 0.0, %v1193
          %v1195 = vpop.f32.mrf.mxu0
          %v1196 = vpop.f32.mrf.mxu0
          %v1197 = vadd.f32 0.0, %v1196
          %v1198 = vpop.f32.mrf.mxu0
          %1199 = vmatprep.mubr.bf16.mxu0 0
          %1200 = vmatmul.mubr.bf16.gmra.mxu0 %v1031
          %v1201 = vpop.f32.mrf.mxu0
          %v1202 = vadd.f32 0.0, %v1201
          %v1203 = vpop.f32.mrf.mxu0
          %v1204 = vpop.f32.mrf.mxu0
          %v1205 = vadd.f32 0.0, %v1204
          %v1206 = vpop.f32.mrf.mxu0
          %1207 = vmatprep.mubr.bf16.mxu0 0
          %1208 = vmatmul.mubr.bf16.gmra.mxu0 %v1032
          %v1209 = vpop.f32.mrf.mxu0
          %v1210 = vadd.f32 0.0, %v1209
          %v1211 = vpop.f32.mrf.mxu0
          %v1212 = vpop.f32.mrf.mxu0
          %v1213 = vadd.f32 0.0, %v1212
          %v1214 = vpop.f32.mrf.mxu0
          %1215 = vmatprep.mubr.bf16.mxu0 0
          %1216 = vmatmul.mubr.bf16.gmra.mxu0 %v1033
          %v1217 = vpop.f32.mrf.mxu0
          %v1218 = vadd.f32 0.0, %v1217
          %v1219 = vpop.f32.mrf.mxu0
          %v1220 = vpop.f32.mrf.mxu0
          %v1221 = vadd.f32 0.0, %v1220
          %v1222 = vpop.f32.mrf.mxu0
          %1223 = vmatprep.mubr.bf16.mxu0 0
          %1224 = vmatmul.mubr.bf16.gmra.mxu0 %v1034
          %v1225 = vpop.f32.mrf.mxu0
          %v1226 = vadd.f32 0.0, %v1225
          %v1227 = vpop.f32.mrf.mxu0
          %v1228 = vpop.f32.mrf.mxu0
          %v1229 = vadd.f32 0.0, %v1228
          %v1230 = vpop.f32.mrf.mxu0
          %1231 = vmatprep.mubr.bf16.mxu0 0
          %1232 = vmatmul.mubr.bf16.gmra.mxu0 %v1035
          %v1233 = vpop.f32.mrf.mxu0
          %v1234 = vadd.f32 0.0, %v1233
          %v1235 = vpop.f32.mrf.mxu0
          %v1236 = vpop.f32.mrf.mxu0
          %v1237 = vadd.f32 0.0, %v1236
          %v1238 = vpop.f32.mrf.mxu0
          %1239 = vmatprep.mubr.bf16.mxu0 0
          %1240 = vmatmul.mubr.bf16.gmra.mxu0 %v1036
          %v1241 = vpop.f32.mrf.mxu0
          %v1242 = vadd.f32 0.0, %v1241
          %v1243 = vpop.f32.mrf.mxu0
          %v1244 = vpop.f32.mrf.mxu0
          %v1245 = vadd.f32 0.0, %v1244
          %v1246 = vpop.f32.mrf.mxu0
          %1247 = vmatprep.mubr.bf16.mxu0 0
          %1248 = vmatmul.mubr.bf16.gmra.mxu0 %v1037
          %v1249 = vpop.f32.mrf.mxu0
          %v1250 = vadd.f32 0.0, %v1249
          %v1251 = vpop.f32.mrf.mxu0
          %v1252 = vpop.f32.mrf.mxu0
          %v1253 = vadd.f32 0.0, %v1252
          %v1254 = vpop.f32.mrf.mxu0
          %1255 = vmatprep.mubr.bf16.mxu0 0
          %1256 = vmatmul.mubr.bf16.gmra.mxu0 %v1038
          %v1257 = vpop.f32.mrf.mxu0
          %v1258 = vadd.f32 0.0, %v1257
          %v1259 = vpop.f32.mrf.mxu0
          %v1260 = vpop.f32.mrf.mxu0
          %v1261 = vadd.f32 0.0, %v1260
          %v1262 = vpop.f32.mrf.mxu0
          %1263 = vdwg.mxu0
          %v1264 = vpack.c.bf16 %v1141, %v1138
          %v1265 = vpack.c.bf16 %v1149, %v1146
          %v1266 = vpack.c.bf16 %v1157, %v1154
          %v1267 = vpack.c.bf16 %v1165, %v1162
          %v1268 = vpack.c.bf16 %v1173, %v1170
          %v1269 = vpack.c.bf16 %v1181, %v1178
          %v1270 = vpack.c.bf16 %v1189, %v1186
          %v1271 = vpack.c.bf16 %v1197, %v1194
          %v1272 = vpack.c.bf16 %v1205, %v1202
          %v1273 = vpack.c.bf16 %v1213, %v1210
          %v1274 = vpack.c.bf16 %v1221, %v1218
          %v1275 = vpack.c.bf16 %v1229, %v1226
          %v1276 = vpack.c.bf16 %v1237, %v1234
          %v1277 = vpack.c.bf16 %v1245, %v1242
          %v1278 = vpack.c.bf16 %v1253, %v1250
          %v1279 = vpack.c.bf16 %v1261, %v1258
          %v1296 = vunpack.c.l.b16 %v1264
          %v1297 = vunpack.c.h.b16 %v1264
          %v1298 = vunpack.c.l.b16 %v1265
          %v1299 = vunpack.c.h.b16 %v1265
          %v1300 = vunpack.c.l.b16 %v1266
          %v1301 = vunpack.c.h.b16 %v1266
          %v1302 = vunpack.c.l.b16 %v1267
          %v1303 = vunpack.c.h.b16 %v1267
          %v1304 = vunpack.c.l.b16 %v1268
          %v1305 = vunpack.c.h.b16 %v1268
          %v1306 = vunpack.c.l.b16 %v1269
          %v1307 = vunpack.c.h.b16 %v1269
          %v1308 = vunpack.c.l.b16 %v1270
          %v1309 = vunpack.c.h.b16 %v1270
          %v1310 = vunpack.c.l.b16 %v1271
          %v1311 = vunpack.c.h.b16 %v1271
          %v1312 = vunpack.c.l.b16 %v1272
          %v1313 = vunpack.c.h.b16 %v1272
          %v1314 = vunpack.c.l.b16 %v1273
          %v1315 = vunpack.c.h.b16 %v1273
          %v1316 = vunpack.c.l.b16 %v1274
          %v1317 = vunpack.c.h.b16 %v1274
          %v1318 = vunpack.c.l.b16 %v1275
          %v1319 = vunpack.c.h.b16 %v1275
          %v1320 = vunpack.c.l.b16 %v1276
          %v1321 = vunpack.c.h.b16 %v1276
          %v1322 = vunpack.c.l.b16 %v1277
          %v1323 = vunpack.c.h.b16 %v1277
          %v1324 = vunpack.c.l.b16 %v1278
          %v1325 = vunpack.c.h.b16 %v1278
          %v1326 = vunpack.c.l.b16 %v1279
          %v1327 = vunpack.c.h.b16 %v1279
          %v1328 = vpack.c.b16 %v1296, %v1296
          %v1329 = vpack.c.b16 %v1297, %v1297
          %v1330 = vpack.c.b16 %v1298, %v1298
          %v1331 = vpack.c.b16 %v1299, %v1299
          %v1332 = vpack.c.b16 %v1300, %v1300
          %v1333 = vpack.c.b16 %v1301, %v1301
          %v1334 = vpack.c.b16 %v1302, %v1302
          %v1335 = vpack.c.b16 %v1303, %v1303
          %v1336 = vpack.c.b16 %v1304, %v1304
          %v1337 = vpack.c.b16 %v1305, %v1305
          %v1338 = vpack.c.b16 %v1306, %v1306
          %v1339 = vpack.c.b16 %v1307, %v1307
          %v1340 = vpack.c.b16 %v1308, %v1308
          %v1341 = vpack.c.b16 %v1309, %v1309
          %v1342 = vpack.c.b16 %v1310, %v1310
          %v1343 = vpack.c.b16 %v1311, %v1311
          %v1344 = vpack.c.b16 %v1312, %v1312
          %v1345 = vpack.c.b16 %v1313, %v1313
          %v1346 = vpack.c.b16 %v1314, %v1314
          %v1347 = vpack.c.b16 %v1315, %v1315
          %v1348 = vpack.c.b16 %v1316, %v1316
          %v1349 = vpack.c.b16 %v1317, %v1317
          %v1350 = vpack.c.b16 %v1318, %v1318
          %v1351 = vpack.c.b16 %v1319, %v1319
          %v1352 = vpack.c.b16 %v1320, %v1320
          %v1353 = vpack.c.b16 %v1321, %v1321
          %v1354 = vpack.c.b16 %v1322, %v1322
          %v1355 = vpack.c.b16 %v1323, %v1323
          %v1356 = vpack.c.b16 %v1324, %v1324
          %v1357 = vpack.c.b16 %v1325, %v1325
          %v1358 = vpack.c.b16 %v1326, %v1326
          %v1359 = vpack.c.b16 %v1327, %v1327
          %1392 = vst [vmem:[%s287] sm:$0xf] %v1328
          %1393 = vst [vmem:[%s287 + $0x4] sm:$0xf] %v1329
          %1394 = vst [vmem:[%s287 + $0x8] sm:$0xf] %v1330
          %1395 = vst [vmem:[%s287 + $0xc] sm:$0xf] %v1331
          %1396 = vst [vmem:[%s287 + $0x10] sm:$0xf] %v1332
          %1397 = vst [vmem:[%s287 + $0x14] sm:$0xf] %v1333
          %1398 = vst [vmem:[%s287 + $0x18] sm:$0xf] %v1334
          %1399 = vst [vmem:[%s287 + $0x1c] sm:$0xf] %v1335
          %1400 = vst [vmem:[%s287 + $0x20] sm:$0xf] %v1336
          %1401 = vst [vmem:[%s287 + $0x24] sm:$0xf] %v1337
          %1402 = vst [vmem:[%s287 + $0x28] sm:$0xf] %v1338
          %1403 = vst [vmem:[%s287 + $0x2c] sm:$0xf] %v1339
          %1404 = vst [vmem:[%s287 + $0x30] sm:$0xf] %v1340
          %1405 = vst [vmem:[%s287 + $0x34] sm:$0xf] %v1341
          %1406 = vst [vmem:[%s287 + $0x38] sm:$0xf] %v1342
          %1407 = vst [vmem:[%s287 + $0x3c] sm:$0xf] %v1343
          %1408 = vst [vmem:[%s287 + $0x40] sm:$0xf] %v1344
          %1409 = vst [vmem:[%s287 + $0x44] sm:$0xf] %v1345
          %1410 = vst [vmem:[%s287 + $0x48] sm:$0xf] %v1346
          %1411 = vst [vmem:[%s287 + $0x4c] sm:$0xf] %v1347
          %1412 = vst [vmem:[%s287 + $0x50] sm:$0xf] %v1348
          %1413 = vst [vmem:[%s287 + $0x54] sm:$0xf] %v1349
          %1414 = vst [vmem:[%s287 + $0x58] sm:$0xf] %v1350
          %1415 = vst [vmem:[%s287 + $0x5c] sm:$0xf] %v1351
          %1416 = vst [vmem:[%s287 + $0x60] sm:$0xf] %v1352
          %1417 = vst [vmem:[%s287 + $0x64] sm:$0xf] %v1353
          %1418 = vst [vmem:[%s287 + $0x68] sm:$0xf] %v1354
          %1419 = vst [vmem:[%s287 + $0x6c] sm:$0xf] %v1355
          %1420 = vst [vmem:[%s287 + $0x70] sm:$0xf] %v1356
          %1421 = vst [vmem:[%s287 + $0x74] sm:$0xf] %v1357
          %1422 = vst [vmem:[%s287 + $0x78] sm:$0xf] %v1358
          %1423 = vst [vmem:[%s287 + $0x7c] sm:$0xf] %v1359
        $region60: #{gcn_forward.4} parent=35 // pred_fallthru
          _
        %s1424 = smul.u32 32, %s35
        %p1425 = scmp.lt.s32.totalorder %s1424, 63
        %s1426 = scalar_select %p1425, %s1424, 63
        %s1427 = smul.addr %s1426, 4
        %s1428 = scalar_lea.vmem %s6, %s1427
        // Predicated region
        $region61: #{gcn_forward.4} parent=35 // pred_check
          %p1429 = pneg %p158
        $region62: #{gcn_forward.4} parent=35 // pred_check_branch
          %1431 = sbr.rel (%p1429) target = $region64
        $region63: #{gcn_forward.4} parent=35 // pred_region
          %s1432 = smul.u32 32, %s35
        $region64: #{gcn_forward.4} parent=35 // pred_fallthru
          _
      $region36: #{gcn_forward.4} parent=5 // pred_fallthru
        _
      %p1433 = scmp.le.s32.totalorder 2, %s26
      // Predicated region
      $region65: #{gcn_forward.4} parent=5 // pred_check
        %p1434 = pneg %p1433
      $region66: #{gcn_forward.4} parent=5 // pred_check_branch
        %1436 = sbr.rel (%p1434) target = $region68
      $region67: #{gcn_forward.4} parent=5 // pred_region
        %s1437 = ssub.s32 %s26, 2
        // Predicated region
        $region69: #{gcn_forward.4} parent=67 // pred_check
          %p1438 = pneg %p164
        $region70: #{gcn_forward.4} parent=67 // pred_check_branch
          %1440 = sbr.rel (%p1438) target = $region72
        $region71: #{gcn_forward.4} parent=67 // pred_region
          %s1441 = smul.u32 32, %s37
          %p1442 = scmp.lt.s32.totalorder %s1441, 63
          %s1443 = scalar_select %p1442, %s1441, 63
          %s1444 = smul.addr %s1443, 4
          %s1445 = scalar_lea.vmem %s6, %s1444
        $region72: #{gcn_forward.4} parent=67 // pred_fallthru
          _
      $region68: #{gcn_forward.4} parent=5 // pred_fallthru
        _
    $region6: #{gcn_forward.4} parent=1 // loop_footer
      %s30 = sadd.s32 1, %s26
    $region7: #{gcn_forward.4} parent=1 // loop_footer_branch
      %25 = sbr.rel target = $region3
    $region8: #{gcn_forward.4} parent=1 // loop_exit
      _
    %1446 = vsyncpa [#allocation7], 1
    %s1447 = scalar_lea.sflag [#allocation7], 1
    %1448 = vsyncpa %s1447, 1
    %1449 = vsyncpa [#allocation9], 1

</llo_original>
